<compile_context>
chip_gen: v5e
topology: v5e:2x2
jax: 0.10.0
libtpu: 0.0.40
codegen_flags: <defaults>
</compile_context>

<pallas_src>
import functools

import jax
import jax.numpy as jnp
from jax.experimental import pallas as pl
from jax.experimental.pallas import tpu as pltpu


# ----------------------------- helpers (traced inside kernels) -----------------------------
def _layer_norm(x, w, b, eps=1e-5):
    mean = jnp.mean(x, axis=-1, keepdims=True)
    var = jnp.mean(jnp.square(x - mean), axis=-1, keepdims=True)
    return (x - mean) * jax.lax.rsqrt(var + eps) * w + b


def _gelu_exact(x):
    # PyTorch activation='gelu' is exact (erf-based) GELU.
    return 0.5 * x * (1.0 + jax.lax.erf(x * 0.7071067811865475))


# ----------------------------- VMEM budgeting & tiling heuristics -----------------------------
def _vmem_capacity_bytes():
    try:
        return int(pltpu.get_tpu_info().vmem_capacity_bytes)
    except Exception:
        return 64 * 1024 * 1024  # conservative: v7x per-TensorCore VMEM


def _encoder_vmem_bytes(bb, S, H, F, L, full_stack):
    """Conservative VMEM estimate for one encoder grid step (double-buffered)."""
    act = 2 * bb * S * H * 4                                   # x_scr + ctx_scr (fp32)
    io = 2 * (bb * S * H * 4) + 2 * (bb * H * 4) + 2 * (S * H * 4) \
        + 2 * (bb * S * 4) + 2 * (bb * H * 4)                  # item/time/pos/mask/out
    gate = 2 * (2 * H * H * 2 + H * 4)                         # gate weights (bf16) + bias
    w_per_layer = (4 * H * H + 2 * H * F) * 2 \
        + (3 * H + H + F + 4 * H) * 4                          # bf16 mats + fp32 biases/LN
    w = (L if full_stack else 1) * 2 * w_per_layer             # assume double-buffered
    return act + io + gate + w


def _pick_batch_tile(B, S, H, F, L, budget):
    """Largest divisor of B with Bt*S <= 2048 MXU rows that fits the VMEM
    budget (per-layer weights), keeping >= 2 (parallel) batch grid steps when
    B > 1 so megacore / v7x's two TensorCores both get work."""
    divisors = [bt for bt in range(1, B + 1) if B % bt == 0]
    feasible = [bt for bt in divisors
                if bt * S <= 2048
                and _encoder_vmem_bytes(bt, S, H, F, L, full_stack=False) <= budget]
    if not feasible:
        return 1
    best = max(feasible)
    if best == B and B > 1:
        smaller = [bt for bt in feasible if bt < B]
        if smaller:
            best = max(smaller)
    return best


def _pick_item_tile(N, B, H, budget):
    """Lane-dense (multiple of 128) num_items tile, as large as the VMEM
    budget allows (up to 8192), keeping >= 2 grid steps when N permits."""
    max_by_n = max(128, (N // 2) // 128 * 128) if N >= 256 else 128
    t = 128
    while t * 2 <= min(8192, max_by_n):
        nt = t * 2
        step_bytes = 2 * (H * nt * 2 + B * nt * 4) + 2 * B * H * 4 + 2 * nt * 4
        if step_bytes > budget:
            break
        t = nt
    return t


# ----------------------------- Kernel AB: fused embeddings + full encoder stack -----------------------------
def encoder_stack_kernel(item_ref, time_ref, pos_ref, mask_ref,
                         wgi_ref, wgt_ref, bg_ref,
                         wqkv_ref, bqkv_ref, wo_ref, bo_ref,
                         ln1w_ref, ln1b_ref, w1_ref, b1_ref, w2_ref, b2_ref,
                         ln2w_ref, ln2b_ref,
                         last_ref, x_scr, ctx_scr, *, num_heads, full_stack):
    layer = pl.program_id(1)
    num_layers = pl.num_programs(1)
    Bt, S, H = x_scr.shape
    R = Bt * S
    hd = H // num_heads

    # ---- layer == 0: time-gate fusion + positional add ----
    @pl.when(layer == 0)
    def _():
        item = item_ref[...]                                  # (Bt, S, H) fp32
        tim = time_ref[...]                                   # (Bt, 1, H) fp32 (broadcast over S)
        pre_item = jnp.dot(item.reshape(R, H).astype(jnp.bfloat16), wgi_ref[...],
                           preferred_element_type=jnp.float32).reshape(Bt, S, H)
        pre_time = jnp.dot(tim.reshape(Bt, H).astype(jnp.bfloat16), wgt_ref[...],
                           preferred_element_type=jnp.float32)[:, None, :]
        gate = jax.nn.sigmoid(pre_item + pre_time + bg_ref[...])
        x_scr[...] = item * gate + tim * (1.0 - gate) + pos_ref[...][None]

    # weight index: dynamic layer index when the full stack is VMEM-resident,
    # else 0 (per-layer blocks streamed by the pipeline).
    li = layer if full_stack else 0

    # ---- post-LN transformer encoder layer (activations stay in VMEM) ----
    x2 = x_scr[...].reshape(R, H)                             # fp32 residual stream
    xb = x2.astype(jnp.bfloat16)

    # fused QKV projection (1/sqrt(hd) pre-folded into the Q columns/bias)
    qkv = jnp.dot(xb, wqkv_ref[li], preferred_element_type=jnp.float32) + bqkv_ref[li]
    q3 = qkv[:, 0:H].reshape(Bt, S, H)
    k3 = qkv[:, H:2 * H].reshape(Bt, S, H)
    v3 = qkv[:, 2 * H:3 * H].reshape(Bt, S, H)

    # key-padding additive bias, (Bt, 1, S) -> implicit sublane broadcast into scores
    key_bias = (1.0 - mask_ref[...]) * (-1e30)

    for h in range(num_heads):                                # static unroll over heads
        lo = h * hd
        qh = q3[:, :, lo:lo + hd].astype(jnp.bfloat16)
        kh = k3[:, :, lo:lo + hd].astype(jnp.bfloat16)
        vh = v3[:, :, lo:lo + hd].astype(jnp.bfloat16)
        s = jnp.einsum('bqd,bkd->bqk', qh, kh,
                       preferred_element_type=jnp.float32) + key_bias
        s = s - jnp.max(s, axis=-1, keepdims=True)
        p = jnp.exp(s)
        p = p * pl.reciprocal(jnp.sum(p, axis=-1, keepdims=True), approx=True)
        ctx = jnp.einsum('bqk,bkd->bqd', p.astype(jnp.bfloat16), vh,
                         preferred_element_type=jnp.float32)   # (Bt, S, hd)
        # store per-head context into its lane slab: bounds live ranges and
        # enables one K=H output projection below.
        ctx_scr[:, :, lo:lo + hd] = ctx

    # single (R,H)@(H,H) W_O matmul (full MXU feed) instead of num_heads K=hd matmuls
    attn = jnp.dot(ctx_scr[...].reshape(R, H).astype(jnp.bfloat16), wo_ref[li],
                   preferred_element_type=jnp.float32) + bo_ref[li]

    y = _layer_norm(x2 + attn, ln1w_ref[li], ln1b_ref[li])     # fp32 epilogue
    h1 = _gelu_exact(jnp.dot(y.astype(jnp.bfloat16), w1_ref[li],
                             preferred_element_type=jnp.float32) + b1_ref[li])
    h2 = jnp.dot(h1.astype(jnp.bfloat16), w2_ref[li],
                 preferred_element_type=jnp.float32) + b2_ref[li]
    x_new = _layer_norm(y + h2, ln2w_ref[li], ln2b_ref[li])
    x_scr[...] = x_new.reshape(Bt, S, H)

    # ---- last layer: emit only the last-position hidden state ----
    @pl.when(layer == num_layers - 1)
    def _():
        last_ref[...] = x_new.reshape(Bt, S, H)[:, S - 1:S, :]


def encoder_stack(item_emb, time_emb, pos_emb, mask3, prep, num_heads,
                  block_b, full_stack, vmem_limit):
    B, S, H = item_emb.shape
    L = prep['wqkv'].shape[0]
    F = prep['w1'].shape[-1]
    nb = B // block_b

    def _const(shape):
        z = (0,) * len(shape)
        return pl.BlockSpec(shape, lambda b, l, _z=z: _z)

    def _lw(shape):
        # layer-weight spec: full (L, ...) stack (DMA'd once) when it fits
        # VMEM, else per-layer blocks streamed along the layer grid axis.
        if full_stack:
            full = (L,) + shape
            z = (0,) * len(full)
            return pl.BlockSpec(full, lambda b, l, _z=z: _z)
        z = (0,) * len(shape)
        return pl.BlockSpec((1,) + shape, lambda b, l, _z=z: (l,) + _z)

    # TODO(synk): on v7x, pltpu.CORE_PARALLEL on the batch axis (or an explicit
    # core_map split) would shard the grid across both TensorCores; kept as
    # "parallel" here for portability.
    in_specs = [
        pl.BlockSpec((block_b, S, H), lambda b, l: (b, 0, 0)),   # item embeddings
        pl.BlockSpec((block_b, 1, H), lambda b, l: (b, 0, 0)),   # time embeddings (per-seq row)
        _const((S, H)),                                          # positional embeddings
        pl.BlockSpec((block_b, 1, S), lambda b, l: (b, 0, 0)),   # key-padding mask
        _const((H, H)), _const((H, H)), _const((1, H)),          # gate weights / bias
        _lw((H, 3 * H)), _lw((1, 3 * H)),                        # fused QKV
        _lw((H, H)), _lw((1, H)),                                # W_O
        _lw((1, H)), _lw((1, H)),                                # LN1
        _lw((H, F)), _lw((1, F)),                                # FFN 1
        _lw((F, H)), _lw((1, H)),                                # FFN 2
        _lw((1, H)), _lw((1, H)),                                # LN2
    ]
    out = pl.pallas_call(
        functools.partial(encoder_stack_kernel, num_heads=num_heads,
                          full_stack=full_stack),
        out_shape=jax.ShapeDtypeStruct((B, 1, H), jnp.float32),
        grid=(nb, L),
        in_specs=in_specs,
        out_specs=pl.BlockSpec((block_b, 1, H), lambda b, l: (b, 0, 0)),
        scratch_shapes=[pltpu.VMEM((block_b, S, H), jnp.float32),   # residual stream
                        pltpu.VMEM((block_b, S, H), jnp.float32)],  # per-head contexts
        compiler_params=pltpu.CompilerParams(
            dimension_semantics=("parallel", "arbitrary"),
            vmem_limit_bytes=vmem_limit),
    )(item_emb, time_emb, pos_emb, mask3,
      prep['gate_wi'], prep['gate_wt'], prep['gate_b'],
      prep['wqkv'], prep['bqkv'], prep['wo'], prep['bo'],
      prep['ln1w'], prep['ln1b'], prep['w1'], prep['b1'],
      prep['w2'], prep['b2'], prep['ln2w'], prep['ln2b'])
    return out.reshape(B, H)


# ----------------------------- Kernel C: logits projection, tiled over num_items -----------------------------
def output_kernel(x_ref, w_ref, b_ref, out_ref):
    out_ref[...] = (jnp.dot(x_ref[...].astype(jnp.bfloat16), w_ref[...],
                            preferred_element_type=jnp.float32) + b_ref[...])


def output_proj(x, w_bf16, b, budget, vmem_limit):
    B, H = x.shape
    N = w_bf16.shape[1]
    tile_n = _pick_item_tile(N, B, H, budget)
    n_pad = (-N) % tile_n
    if n_pad:
        w_bf16 = jnp.pad(w_bf16, ((0, 0), (0, n_pad)))
        b = jnp.pad(b, ((0, n_pad),))
    Np = N + n_pad
    out = pl.pallas_call(
        output_kernel,
        out_shape=jax.ShapeDtypeStruct((B, Np), jnp.float32),
        grid=(Np // tile_n,),
        in_specs=[pl.BlockSpec((B, H), lambda n: (0, 0)),
                  pl.BlockSpec((H, tile_n), lambda n: (0, n)),
                  pl.BlockSpec((1, tile_n), lambda n: (0, n))],
        out_specs=pl.BlockSpec((B, tile_n), lambda n: (0, n)),
        compiler_params=pltpu.CompilerParams(
            dimension_semantics=("parallel",),
            vmem_limit_bytes=vmem_limit),
    )(x, w_bf16, b.reshape(1, Np).astype(jnp.float32))
    return out[:, :N] if n_pad else out


# ----------------------------- one-time weight preparation -----------------------------
def prepare_weights(params, num_heads):
    """Done ONCE (param-load time): bf16 MXU operand copies, per-layer stacks,
    fused QKV weights with the 1/sqrt(hd) scale folded into the Q columns."""
    H = params['item_emb'].shape[1]
    hd = H // num_heads
    scale = 1.0 / float(hd) ** 0.5
    bf = lambda a: a.astype(jnp.bfloat16)
    layers = params['layers']
    stack = lambda k: jnp.stack([lp[k] for lp in layers])
    wqkv = jnp.stack([jnp.concatenate([lp['wq'] * scale, lp['wk'], lp['wv']], axis=1)
                      for lp in layers])                                  # (L, H, 3H)
    bqkv = jnp.stack([jnp.concatenate([lp['bq'] * scale, lp['bk'], lp['bv']], axis=1)
                      for lp in layers])                                  # (L, 1, 3H)
    wg = params['wg']
    return dict(
        gate_wi=bf(wg[:H]), gate_wt=bf(wg[H:]),
        gate_b=params['bg'].reshape(1, H).astype(jnp.float32),
        wqkv=bf(wqkv), bqkv=bqkv.astype(jnp.float32),
        wo=bf(stack('wo')), bo=stack('bo').astype(jnp.float32),
        ln1w=stack('ln1w'), ln1b=stack('ln1b'),
        w1=bf(stack('w1')), b1=stack('b1'),
        w2=bf(stack('w2')), b2=stack('b2'),
        ln2w=stack('ln2w'), ln2b=stack('ln2b'),
        w_out=bf(params['w_out']),
        b_out=params['b_out'].astype(jnp.float32),
    )


# ----------------------------- full forward (glue + kernels) -----------------------------
def _time_embeddings(params, hour, dow, days_since, hour_sin, hour_cos, dow_sin, dow_cos):
    # Linear layers with in_features 1 or 2; identical for every position, so
    # return a single (B, 1, H) row (broadcast over S inside the kernel).
    t = (hour[:, None] * params['w_hour'][0][None, :] + params['b_hour'][None, :]
         + dow[:, None] * params['w_dow'][0][None, :] + params['b_dow'][None, :]
         + days_since[:, None] * params['w_days'][0][None, :] + params['b_days'][None, :]
         + hour_sin[:, None] * params['w_hc'][0][None, :]
         + hour_cos[:, None] * params['w_hc'][1][None, :] + params['b_hc'][None, :]
         + dow_sin[:, None] * params['w_dc'][0][None, :]
         + dow_cos[:, None] * params['w_dc'][1][None, :] + params['b_dc'][None, :])
    return t[:, None, :].astype(jnp.float32)                   # (B, 1, H)


def time_sasrec_forward(params, prep, input_ids, attention_mask, hour, dow, days_since,
                        hour_sin, hour_cos, dow_sin, dow_cos, num_heads):
    B, S = input_ids.shape
    H = params['item_emb'].shape[1]
    assert H % num_heads == 0, "hidden_size must be divisible by num_heads"
    assert S <= params['pos_emb'].shape[0], "sequence longer than positional table"

    # glue: embedding gathers + tiny time linears (no clean blocked Pallas equivalent)
    item_emb = params['item_emb'][input_ids].astype(jnp.float32)       # (B, S, H)
    pos_emb = params['pos_emb'][:S].astype(jnp.float32)                # (S, H)
    time_emb = _time_embeddings(params, hour, dow, days_since,
                                hour_sin, hour_cos, dow_sin, dow_cos)  # (B, 1, H)
    mask3 = attention_mask.astype(jnp.float32)[:, None, :]             # (B, 1, S)

    L = prep['wqkv'].shape[0]
    F = prep['w1'].shape[-1]
    cap = _vmem_capacity_bytes()
    budget = int(cap * 0.70)        # planning budget (leaves compiler headroom)
    vmem_limit = int(cap * 0.85)    # scoped VMEM limit for the pallas_calls

    block_b = _pick_batch_tile(B, S, H, F, L, budget)
    full_stack = _encoder_vmem_bytes(block_b, S, H, F, L, full_stack=True) <= budget

    last = encoder_stack(item_emb, time_emb, pos_emb, mask3, prep, num_heads,
                         block_b, full_stack, vmem_limit)              # (B, H)
    return output_proj(last, prep['w_out'], prep['b_out'], budget, vmem_limit)


# ----------------------------- pure-JAX fp32 reference (for self-check) -----------------------------
def reference_forward(params, input_ids, attention_mask, hour, dow, days_since,
                      hour_sin, hour_cos, dow_sin, dow_cos, num_heads):
    B, S = input_ids.shape
    H = params['item_emb'].shape[1]
    hd = H // num_heads
    item_emb = params['item_emb'][input_ids]
    pos_emb = params['pos_emb'][:S]
    time_emb = jnp.broadcast_to(
        _time_embeddings(params, hour, dow, days_since,
                         hour_sin, hour_cos, dow_sin, dow_cos), (B, S, H))
    gate = jax.nn.sigmoid(jnp.concatenate([item_emb, time_emb], -1) @ params['wg'] + params['bg'])
    x = item_emb * gate + time_emb * (1.0 - gate) + pos_emb[None]
    key_valid = attention_mask > 0.5
    for lp in params['layers']:
        q = (x @ lp['wq'] + lp['bq']).reshape(B, S, num_heads, hd)
        k = (x @ lp['wk'] + lp['bk']).reshape(B, S, num_heads, hd)
        v = (x @ lp['wv'] + lp['bv']).reshape(B, S, num_heads, hd)
        s = jnp.einsum('bqhd,bkhd->bhqk', q, k) * (1.0 / hd ** 0.5)
        s = jnp.where(key_valid[:, None, None, :], s, -1e30)
        p = jax.nn.softmax(s, axis=-1)
        attn = jnp.einsum('bhqk,bkhd->bqhd', p, v).reshape(B, S, H)
        attn = attn @ lp['wo'] + lp['bo']
        x = _layer_norm(x + attn, lp['ln1w'], lp['ln1b'])
        h1 = _gelu_exact(x @ lp['w1'] + lp['b1'])
        x = _layer_norm(x + h1 @ lp['w2'] + lp['b2'], lp['ln2w'], lp['ln2b'])
    return x[:, -1, :] @ params['w_out'] + params['b_out']


# ----------------------------- deterministic parameter init -----------------------------
def init_params(key, num_items, hidden, num_layers, ff):
    keys = iter(jax.random.split(key, 64))

    def n(shape):
        return 0.02 * jax.random.normal(next(keys), shape, dtype=jnp.float32)

    def z(shape):
        return jnp.zeros(shape, jnp.float32)

    params = dict(
        item_emb=n((num_items, hidden)),
        pos_emb=n((50, hidden)),
        w_hour=n((1, hidden)), b_hour=z((hidden,)),
        w_dow=n((1, hidden)), b_dow=z((hidden,)),
        w_days=n((1, hidden)), b_days=z((hidden,)),
        w_hc=n((2, hidden)), b_hc=z((hidden,)),
        w_dc=n((2, hidden)), b_dc=z((hidden,)),
        wg=n((2 * hidden, hidden)), bg=z((hidden,)),
        w_out=n((hidden, num_items)), b_out=z((num_items,)),
        layers=[],
    )
    for _ in range(num_layers):
        params['layers'].append(dict(
            wq=n((hidden, hidden)), bq=z((1, hidden)),
            wk=n((hidden, hidden)), bk=z((1, hidden)),
            wv=n((hidden, hidden)), bv=z((1, hidden)),
            wo=n((hidden, hidden)), bo=z((1, hidden)),
            ln1w=jnp.ones((1, hidden), jnp.float32), ln1b=z((1, hidden)),
            w1=n((hidden, ff)), b1=z((1, ff)),
            w2=n((ff, hidden)), b2=z((1, hidden)),
            ln2w=jnp.ones((1, hidden), jnp.float32), ln2b=z((1, hidden)),
        ))
    return params


if __name__ == "__main__":
    B, S, H = 16, 8, 64
    num_items, num_layers, num_heads = 512, 2, 2
    ff = 4 * H

    key = jax.random.PRNGKey(0)
    kp, kd = jax.random.split(key)
    params = init_params(kp, num_items, H, num_layers, ff)
    prep = prepare_weights(params, num_heads)   # one-time weight prep (cached across forwards)

    dk = jax.random.split(kd, 10)
    input_ids = jax.random.randint(dk[0], (B, S), 1, num_items)
    # first two positions are padding (mask 0), rest valid
    attention_mask = jnp.concatenate(
        [jnp.zeros((B, 2), jnp.float32), jnp.ones((B, S - 2), jnp.float32)], axis=1)
    hour = jax.random.uniform(dk[1], (B,), dtype=jnp.float32)
    dow = jax.random.uniform(dk[2], (B,), dtype=jnp.float32)
    days_since = jax.random.uniform(dk[3], (B,), dtype=jnp.float32)
    hour_sin = jax.random.uniform(dk[4], (B,), dtype=jnp.float32)
    hour_cos = jax.random.uniform(dk[5], (B,), dtype=jnp.float32)
    dow_sin = jax.random.uniform(dk[6], (B,), dtype=jnp.float32)
    dow_cos = jax.random.uniform(dk[7], (B,), dtype=jnp.float32)

    fwd = jax.jit(functools.partial(time_sasrec_forward, num_heads=num_heads))
    logits = fwd(params, prep, input_ids, attention_mask, hour, dow, days_since,
                 hour_sin, hour_cos, dow_sin, dow_cos)
    logits = jax.block_until_ready(logits)
    assert logits.shape == (B, num_items)

    # fp32 reference; bf16 MXU operands + approx reciprocal in the kernels -> relaxed tolerance
    ref = reference_forward(params, input_ids, attention_mask, hour, dow, days_since,
                            hour_sin, hour_cos, dow_sin, dow_cos, num_heads)
    assert jnp.allclose(logits, ref, atol=2e-2, rtol=2e-2), \
        float(jnp.max(jnp.abs(logits - ref)))

    print("KERNEL_OK")
</pallas_src>

<mosaic_0001>
module attributes {stable_mosaic.version = 11 : i64} {
  func.func @output_kernel(%arg0: i32, %arg1: memref<16x64xf32, #tpu.memory_space<vmem>>, %arg2: memref<64x256xbf16, #tpu.memory_space<vmem>>, %arg3: memref<1x256xf32, #tpu.memory_space<vmem>>, %arg4: memref<16x256xf32, #tpu.memory_space<vmem>>) attributes {dimension_semantics = [#tpu.dimension_semantics<parallel>], iteration_bounds = array<i64: 2>, scalar_prefetch = 0 : i64, scratch_operands = 0 : i64, tpu.core_type = #tpu.core_type<tc>, window_params = [{pipeline_mode = #tpu.pipeline_mode<synchronous>, transform_indices = @transform_0, window_bounds = array<i64: 16, 64>}, {transform_indices = @transform_1, window_bounds = array<i64: 64, 256>}, {transform_indices = @transform_2, window_bounds = array<i64: 1, 256>}, {transform_indices = @transform_3, window_bounds = array<i64: 16, 256>}]} {
    %c0 = arith.constant 0 : index
    %c0_0 = arith.constant 0 : index
    %0 = vector.load %arg1[%c0, %c0_0] : memref<16x64xf32, #tpu.memory_space<vmem>>, vector<16x64xf32>
    %1 = arith.truncf %0 : vector<16x64xf32> to vector<16x64xbf16>
    %c0_1 = arith.constant 0 : index
    %c0_2 = arith.constant 0 : index
    %2 = vector.load %arg2[%c0_1, %c0_2] : memref<64x256xbf16, #tpu.memory_space<vmem>>, vector<64x256xbf16>
    %cst = arith.constant dense<0.000000e+00> : vector<16x256xf32>
    %3 = tpu.matmul %1, %2, %cst {dimension_numbers = #tpu.dot_dimension_numbers<[1], [0], [0], [1], [0, 0, 1, 1], [], []>} : vector<16x64xbf16>, vector<64x256xbf16>, vector<16x256xf32> -> vector<16x256xf32>
    %c0_3 = arith.constant 0 : index
    %c0_4 = arith.constant 0 : index
    %4 = vector.load %arg3[%c0_3, %c0_4] : memref<1x256xf32, #tpu.memory_space<vmem>>, vector<1x256xf32>
    %5 = vector.broadcast %4 : vector<1x256xf32> to vector<16x256xf32>
    %6 = arith.addf %3, %5 : vector<16x256xf32>
    %c0_5 = arith.constant 0 : index
    %c0_6 = arith.constant 0 : index
    %7 = vector.load %arg4[%c0_5, %c0_6] : memref<16x256xf32, #tpu.memory_space<vmem>>, vector<16x256xf32>
    tpu.vector_store %arg4[%c0_5, %c0_6], %6 {strides = array<i32>} : memref<16x256xf32, #tpu.memory_space<vmem>>, vector<16x256xf32>,
    return
  }
  func.func @transform_0(%arg0: i32) -> (i32, i32) {
    %c0_i32 = arith.constant 0 : i32
    %c0_i32_0 = arith.constant 0 : i32
    %c0_i32_1 = arith.constant 0 : i32
    return %c0_i32, %c0_i32_0 : i32, i32
  }
  func.func @transform_1(%arg0: i32) -> (i32, i32) {
    %c0_i32 = arith.constant 0 : i32
    %c0_i32_0 = arith.constant 0 : i32
    return %c0_i32, %arg0 : i32, i32
  }
  func.func @transform_2(%arg0: i32) -> (i32, i32) {
    %c0_i32 = arith.constant 0 : i32
    %c0_i32_0 = arith.constant 0 : i32
    return %c0_i32, %arg0 : i32, i32
  }
  func.func @transform_3(%arg0: i32) -> (i32, i32) {
    %c0_i32 = arith.constant 0 : i32
    %c0_i32_0 = arith.constant 0 : i32
    return %c0_i32, %arg0 : i32, i32
  }
}

module attributes {stable_mosaic.version = 11 : i64} {
  func.func @encoder_stack_kernel(%arg0: i32, %arg1: i32, %arg2: memref<8x8x64xf32, #tpu.memory_space<vmem>>, %arg3: memref<8x1x64xf32, #tpu.memory_space<vmem>>, %arg4: memref<8x64xf32, #tpu.memory_space<vmem>>, %arg5: memref<8x1x8xf32, #tpu.memory_space<vmem>>, %arg6: memref<64x64xbf16, #tpu.memory_space<vmem>>, %arg7: memref<64x64xbf16, #tpu.memory_space<vmem>>, %arg8: memref<1x64xf32, #tpu.memory_space<vmem>>, %arg9: memref<2x64x192xbf16, #tpu.memory_space<vmem>>, %arg10: memref<2x1x192xf32, #tpu.memory_space<vmem>>, %arg11: memref<2x64x64xbf16, #tpu.memory_space<vmem>>, %arg12: memref<2x1x64xf32, #tpu.memory_space<vmem>>, %arg13: memref<2x1x64xf32, #tpu.memory_space<vmem>>, %arg14: memref<2x1x64xf32, #tpu.memory_space<vmem>>, %arg15: memref<2x64x256xbf16, #tpu.memory_space<vmem>>, %arg16: memref<2x1x256xf32, #tpu.memory_space<vmem>>, %arg17: memref<2x256x64xbf16, #tpu.memory_space<vmem>>, %arg18: memref<2x1x64xf32, #tpu.memory_space<vmem>>, %arg19: memref<2x1x64xf32, #tpu.memory_space<vmem>>, %arg20: memref<2x1x64xf32, #tpu.memory_space<vmem>>, %arg21: memref<8x1x64xf32, #tpu.memory_space<vmem>>, %arg22: memref<8x8x64xf32, #tpu.memory_space<vmem>>, %arg23: memref<8x8x64xf32, #tpu.memory_space<vmem>>) attributes {dimension_semantics = [#tpu.dimension_semantics<parallel>, #tpu.dimension_semantics<arbitrary>], iteration_bounds = array<i64: 2, 2>, scalar_prefetch = 0 : i64, scratch_operands = 2 : i64, tpu.core_type = #tpu.core_type<tc>, window_params = [{transform_indices = @transform_0, window_bounds = array<i64: 8, 8, 64>}, {transform_indices = @transform_1, window_bounds = array<i64: 8, 1, 64>}, {pipeline_mode = #tpu.pipeline_mode<synchronous>, transform_indices = @transform_2, window_bounds = array<i64: 8, 64>}, {transform_indices = @transform_3, window_bounds = array<i64: 8, 1, 8>}, {pipeline_mode = #tpu.pipeline_mode<synchronous>, transform_indices = @transform_4, window_bounds = array<i64: 64, 64>}, {pipeline_mode = #tpu.pipeline_mode<synchronous>, transform_indices = @transform_5, window_bounds = array<i64: 64, 64>}, {pipeline_mode = #tpu.pipeline_mode<synchronous>, transform_indices = @transform_6, window_bounds = array<i64: 1, 64>}, {pipeline_mode = #tpu.pipeline_mode<synchronous>, transform_indices = @transform_7, window_bounds = array<i64: 2, 64, 192>}, {pipeline_mode = #tpu.pipeline_mode<synchronous>, transform_indices = @transform_8, window_bounds = array<i64: 2, 1, 192>}, {pipeline_mode = #tpu.pipeline_mode<synchronous>, transform_indices = @transform_9, window_bounds = array<i64: 2, 64, 64>}, {pipeline_mode = #tpu.pipeline_mode<synchronous>, transform_indices = @transform_10, window_bounds = array<i64: 2, 1, 64>}, {pipeline_mode = #tpu.pipeline_mode<synchronous>, transform_indices = @transform_11, window_bounds = array<i64: 2, 1, 64>}, {pipeline_mode = #tpu.pipeline_mode<synchronous>, transform_indices = @transform_12, window_bounds = array<i64: 2, 1, 64>}, {pipeline_mode = #tpu.pipeline_mode<synchronous>, transform_indices = @transform_13, window_bounds = array<i64: 2, 64, 256>}, {pipeline_mode = #tpu.pipeline_mode<synchronous>, transform_indices = @transform_14, window_bounds = array<i64: 2, 1, 256>}, {pipeline_mode = #tpu.pipeline_mode<synchronous>, transform_indices = @transform_15, window_bounds = array<i64: 2, 256, 64>}, {pipeline_mode = #tpu.pipeline_mode<synchronous>, transform_indices = @transform_16, window_bounds = array<i64: 2, 1, 64>}, {pipeline_mode = #tpu.pipeline_mode<synchronous>, transform_indices = @transform_17, window_bounds = array<i64: 2, 1, 64>}, {pipeline_mode = #tpu.pipeline_mode<synchronous>, transform_indices = @transform_18, window_bounds = array<i64: 2, 1, 64>}, {transform_indices = @transform_19, window_bounds = array<i64: 8, 1, 64>}]} {
    %c0_i32 = arith.constant 0 : i32
    %0 = arith.cmpi eq, %arg1, %c0_i32 : i32
    %1 = arith.extui %0 : i1 to i32
    %c0_i32_0 = arith.constant 0 : i32
    %2 = arith.cmpi ne, %1, %c0_i32_0 : i32
    scf.if %2 {
      %c0_68 = arith.constant 0 : index
      %c0_69 = arith.constant 0 : index
      %c0_70 = arith.constant 0 : index
      %173 = vector.load %arg2[%c0_68, %c0_69, %c0_70] : memref<8x8x64xf32, #tpu.memory_space<vmem>>, vector<8x8x64xf32>
      %c0_71 = arith.constant 0 : index
      %c0_72 = arith.constant 0 : index
      %c0_73 = arith.constant 0 : index
      %174 = vector.load %arg3[%c0_71, %c0_72, %c0_73] : memref<8x1x64xf32, #tpu.memory_space<vmem>>, vector<8x1x64xf32>
      %175 = vector.shape_cast %173 : vector<8x8x64xf32> to vector<64x64xf32>
      %176 = arith.truncf %175 : vector<64x64xf32> to vector<64x64xbf16>
      %c0_74 = arith.constant 0 : index
      %c0_75 = arith.constant 0 : index
      %177 = vector.load %arg6[%c0_74, %c0_75] : memref<64x64xbf16, #tpu.memory_space<vmem>>, vector<64x64xbf16>
      %cst_76 = arith.constant dense<0.000000e+00> : vector<64x64xf32>
      %178 = tpu.matmul %176, %177, %cst_76 {dimension_numbers = #tpu.dot_dimension_numbers<[1], [0], [0], [1], [0, 0, 1, 1], [], []>} : vector<64x64xbf16>, vector<64x64xbf16>, vector<64x64xf32> -> vector<64x64xf32>
      %179 = vector.shape_cast %178 : vector<64x64xf32> to vector<8x8x64xf32>
      %180 = vector.shape_cast %174 : vector<8x1x64xf32> to vector<8x64xf32>
      %181 = arith.truncf %180 : vector<8x64xf32> to vector<8x64xbf16>
      %c0_77 = arith.constant 0 : index
      %c0_78 = arith.constant 0 : index
      %182 = vector.load %arg7[%c0_77, %c0_78] : memref<64x64xbf16, #tpu.memory_space<vmem>>, vector<64x64xbf16>
      %cst_79 = arith.constant dense<0.000000e+00> : vector<8x64xf32>
      %183 = tpu.matmul %181, %182, %cst_79 {dimension_numbers = #tpu.dot_dimension_numbers<[1], [0], [0], [1], [0, 0, 1, 1], [], []>} : vector<8x64xbf16>, vector<64x64xbf16>, vector<8x64xf32> -> vector<8x64xf32>
      %184 = vector.shape_cast %183 : vector<8x64xf32> to vector<8x1x64xf32>
      %185 = vector.broadcast %184 : vector<8x1x64xf32> to vector<8x8x64xf32>
      %186 = arith.addf %179, %185 : vector<8x8x64xf32>
      %c0_80 = arith.constant 0 : index
      %c0_81 = arith.constant 0 : index
      %187 = vector.load %arg8[%c0_80, %c0_81] : memref<1x64xf32, #tpu.memory_space<vmem>>, vector<1x64xf32>
      %188 = vector.shape_cast %187 : vector<1x64xf32> to vector<1x1x64xf32>
      %189 = vector.broadcast %188 : vector<1x1x64xf32> to vector<8x8x64xf32>
      %190 = arith.addf %186, %189 : vector<8x8x64xf32>
      %191 = arith.negf %190 : vector<8x8x64xf32>
      %192 = math.exp %191 : vector<8x8x64xf32>
      %cst_82 = arith.constant 1.000000e+00 : f32
      %193 = vector.broadcast %cst_82 : f32 to vector<8x8x64xf32>
      %194 = arith.addf %193, %192 : vector<8x8x64xf32>
      %195 = arith.divf %193, %194 : vector<8x8x64xf32>
      %196 = arith.mulf %173, %195 : vector<8x8x64xf32>
      %cst_83 = arith.constant 1.000000e+00 : f32
      %197 = vector.broadcast %cst_83 : f32 to vector<8x8x64xf32>
      %198 = arith.subf %197, %195 : vector<8x8x64xf32>
      %199 = vector.broadcast %174 : vector<8x1x64xf32> to vector<8x8x64xf32>
      %200 = arith.mulf %199, %198 : vector<8x8x64xf32>
      %201 = arith.addf %196, %200 : vector<8x8x64xf32>
      %c0_84 = arith.constant 0 : index
      %c0_85 = arith.constant 0 : index
      %202 = vector.load %arg4[%c0_84, %c0_85] : memref<8x64xf32, #tpu.memory_space<vmem>>, vector<8x64xf32>
      %203 = vector.shape_cast %202 : vector<8x64xf32> to vector<1x8x64xf32>
      %204 = vector.broadcast %203 : vector<1x8x64xf32> to vector<8x8x64xf32>
      %205 = arith.addf %201, %204 : vector<8x8x64xf32>
      %c0_86 = arith.constant 0 : index
      %c0_87 = arith.constant 0 : index
      %c0_88 = arith.constant 0 : index
      %206 = vector.load %arg22[%c0_86, %c0_87, %c0_88] : memref<8x8x64xf32, #tpu.memory_space<vmem>>, vector<8x8x64xf32>
      tpu.vector_store %arg22[%c0_86, %c0_87, %c0_88], %205 {strides = array<i32>} : memref<8x8x64xf32, #tpu.memory_space<vmem>>, vector<8x8x64xf32>,
    } else {
    }
    %c0 = arith.constant 0 : index
    %c0_1 = arith.constant 0 : index
    %c0_2 = arith.constant 0 : index
    %3 = vector.load %arg22[%c0, %c0_1, %c0_2] : memref<8x8x64xf32, #tpu.memory_space<vmem>>, vector<8x8x64xf32>
    %4 = vector.shape_cast %3 : vector<8x8x64xf32> to vector<64x64xf32>
    %5 = arith.truncf %4 : vector<64x64xf32> to vector<64x64xbf16>
    %6 = arith.index_cast %arg1 : i32 to index
    %c0_3 = arith.constant 0 : index
    %c0_4 = arith.constant 0 : index
    %7 = vector.load %arg9[%6, %c0_3, %c0_4] : memref<2x64x192xbf16, #tpu.memory_space<vmem>>, vector<1x64x192xbf16>
    %8 = vector.shape_cast %7 : vector<1x64x192xbf16> to vector<64x192xbf16>
    %cst = arith.constant dense<0.000000e+00> : vector<64x192xf32>
    %9 = tpu.matmul %5, %8, %cst {dimension_numbers = #tpu.dot_dimension_numbers<[1], [0], [0], [1], [0, 0, 1, 1], [], []>} : vector<64x64xbf16>, vector<64x192xbf16>, vector<64x192xf32> -> vector<64x192xf32>
    %10 = arith.index_cast %arg1 : i32 to index
    %c0_5 = arith.constant 0 : index
    %c0_6 = arith.constant 0 : index
    %11 = vector.load %arg10[%10, %c0_5, %c0_6] : memref<2x1x192xf32, #tpu.memory_space<vmem>>, vector<1x1x192xf32>
    %12 = vector.shape_cast %11 : vector<1x1x192xf32> to vector<1x192xf32>
    %13 = vector.broadcast %12 : vector<1x192xf32> to vector<64x192xf32>
    %14 = arith.addf %9, %13 : vector<64x192xf32>
    %15 = vector.extract_strided_slice %14 {offsets = [0, 0], sizes = [64, 64], strides = [1, 1]} : vector<64x192xf32> to vector<64x64xf32>
    %16 = vector.shape_cast %15 : vector<64x64xf32> to vector<8x8x64xf32>
    %17 = vector.extract_strided_slice %14 {offsets = [0, 64], sizes = [64, 64], strides = [1, 1]} : vector<64x192xf32> to vector<64x64xf32>
    %18 = vector.shape_cast %17 : vector<64x64xf32> to vector<8x8x64xf32>
    %19 = vector.extract_strided_slice %14 {offsets = [0, 128], sizes = [64, 64], strides = [1, 1]} : vector<64x192xf32> to vector<64x64xf32>
    %20 = vector.shape_cast %19 : vector<64x64xf32> to vector<8x8x64xf32>
    %c0_7 = arith.constant 0 : index
    %c0_8 = arith.constant 0 : index
    %c0_9 = arith.constant 0 : index
    %21 = vector.load %arg5[%c0_7, %c0_8, %c0_9] : memref<8x1x8xf32, #tpu.memory_space<vmem>>, vector<8x1x8xf32>
    %cst_10 = arith.constant 1.000000e+00 : f32
    %22 = vector.broadcast %cst_10 : f32 to vector<8x1x8xf32>
    %23 = arith.subf %22, %21 : vector<8x1x8xf32>
    %cst_11 = arith.constant -1.000000e+30 : f32
    %24 = vector.broadcast %cst_11 : f32 to vector<8x1x8xf32>
    %25 = arith.mulf %23, %24 : vector<8x1x8xf32>
    %26 = vector.extract_strided_slice %16 {offsets = [0, 0, 0], sizes = [8, 8, 32], strides = [1, 1, 1]} : vector<8x8x64xf32> to vector<8x8x32xf32>
    %27 = arith.truncf %26 : vector<8x8x32xf32> to vector<8x8x32xbf16>
    %28 = vector.extract_strided_slice %18 {offsets = [0, 0, 0], sizes = [8, 8, 32], strides = [1, 1, 1]} : vector<8x8x64xf32> to vector<8x8x32xf32>
    %29 = arith.truncf %28 : vector<8x8x32xf32> to vector<8x8x32xbf16>
    %30 = vector.extract_strided_slice %20 {offsets = [0, 0, 0], sizes = [8, 8, 32], strides = [1, 1, 1]} : vector<8x8x64xf32> to vector<8x8x32xf32>
    %31 = arith.truncf %30 : vector<8x8x32xf32> to vector<8x8x32xbf16>
    "tpu.trace_start"() <{level = 10 : i32, message = "bqd,bkd->bqk"}> : () -> ()
    %cst_12 = arith.constant dense<0.000000e+00> : vector<8x8x8xf32>
    %32 = tpu.matmul %27, %29, %cst_12 {dimension_numbers = #tpu.dot_dimension_numbers<[2], [2], [1], [1], [0, 0, 0, 1, 1, 1], [0], [0]>} : vector<8x8x32xbf16>, vector<8x8x32xbf16>, vector<8x8x8xf32> -> vector<8x8x8xf32>
    "tpu.trace_stop"() : () -> ()
    %33 = vector.broadcast %25 : vector<8x1x8xf32> to vector<8x8x8xf32>
    %34 = arith.addf %32, %33 : vector<8x8x8xf32>
    %cst_13 = arith.constant dense<0xFF800000> : vector<8x8xf32>
    %35 = vector.multi_reduction <maximumf>, %34, %cst_13 [2] : vector<8x8x8xf32> to vector<8x8xf32>
    %36 = vector.shape_cast %35 : vector<8x8xf32> to vector<8x8x1xf32>
    %37 = vector.broadcast %36 : vector<8x8x1xf32> to vector<8x8x8xf32>
    %38 = arith.subf %34, %37 : vector<8x8x8xf32>
    %39 = math.exp %38 : vector<8x8x8xf32>
    %cst_14 = arith.constant dense<0.000000e+00> : vector<8x8xf32>
    %40 = vector.multi_reduction <add>, %39, %cst_14 [2] : vector<8x8x8xf32> to vector<8x8xf32>
    %41 = vector.shape_cast %40 : vector<8x8xf32> to vector<8x8x1xf32>
    %42 = tpu.reciprocal %41 {approx = true} : vector<8x8x1xf32> -> vector<8x8x1xf32>
    %43 = vector.broadcast %42 : vector<8x8x1xf32> to vector<8x8x8xf32>
    %44 = arith.mulf %39, %43 : vector<8x8x8xf32>
    %45 = arith.truncf %44 : vector<8x8x8xf32> to vector<8x8x8xbf16>
    "tpu.trace_start"() <{level = 10 : i32, message = "bqk,bkd->bqd"}> : () -> ()
    %cst_15 = arith.constant dense<0.000000e+00> : vector<8x8x32xf32>
    %46 = tpu.matmul %45, %31, %cst_15 {dimension_numbers = #tpu.dot_dimension_numbers<[2], [1], [1], [2], [0, 0, 0, 1, 1, 2], [0], [0]>} : vector<8x8x8xbf16>, vector<8x8x32xbf16>, vector<8x8x32xf32> -> vector<8x8x32xf32>
    "tpu.trace_stop"() : () -> ()
    %c0_16 = arith.constant 0 : index
    %c0_17 = arith.constant 0 : index
    %c0_18 = arith.constant 0 : index
    %47 = vector.load %arg23[%c0_16, %c0_17, %c0_18] : memref<8x8x64xf32, #tpu.memory_space<vmem>>, vector<8x8x32xf32>
    tpu.vector_store %arg23[%c0_16, %c0_17, %c0_18], %46 {strides = array<i32>} : memref<8x8x64xf32, #tpu.memory_space<vmem>>, vector<8x8x32xf32>,
    %48 = vector.extract_strided_slice %16 {offsets = [0, 0, 32], sizes = [8, 8, 32], strides = [1, 1, 1]} : vector<8x8x64xf32> to vector<8x8x32xf32>
    %49 = arith.truncf %48 : vector<8x8x32xf32> to vector<8x8x32xbf16>
    %50 = vector.extract_strided_slice %18 {offsets = [0, 0, 32], sizes = [8, 8, 32], strides = [1, 1, 1]} : vector<8x8x64xf32> to vector<8x8x32xf32>
    %51 = arith.truncf %50 : vector<8x8x32xf32> to vector<8x8x32xbf16>
    %52 = vector.extract_strided_slice %20 {offsets = [0, 0, 32], sizes = [8, 8, 32], strides = [1, 1, 1]} : vector<8x8x64xf32> to vector<8x8x32xf32>
    %53 = arith.truncf %52 : vector<8x8x32xf32> to vector<8x8x32xbf16>
    "tpu.trace_start"() <{level = 10 : i32, message = "bqd,bkd->bqk"}> : () -> ()
    %cst_19 = arith.constant dense<0.000000e+00> : vector<8x8x8xf32>
    %54 = tpu.matmul %49, %51, %cst_19 {dimension_numbers = #tpu.dot_dimension_numbers<[2], [2], [1], [1], [0, 0, 0, 1, 1, 1], [0], [0]>} : vector<8x8x32xbf16>, vector<8x8x32xbf16>, vector<8x8x8xf32> -> vector<8x8x8xf32>
    "tpu.trace_stop"() : () -> ()
    %55 = vector.broadcast %25 : vector<8x1x8xf32> to vector<8x8x8xf32>
    %56 = arith.addf %54, %55 : vector<8x8x8xf32>
    %cst_20 = arith.constant dense<0xFF800000> : vector<8x8xf32>
    %57 = vector.multi_reduction <maximumf>, %56, %cst_20 [2] : vector<8x8x8xf32> to vector<8x8xf32>
    %58 = vector.shape_cast %57 : vector<8x8xf32> to vector<8x8x1xf32>
    %59 = vector.broadcast %58 : vector<8x8x1xf32> to vector<8x8x8xf32>
    %60 = arith.subf %56, %59 : vector<8x8x8xf32>
    %61 = math.exp %60 : vector<8x8x8xf32>
    %cst_21 = arith.constant dense<0.000000e+00> : vector<8x8xf32>
    %62 = vector.multi_reduction <add>, %61, %cst_21 [2] : vector<8x8x8xf32> to vector<8x8xf32>
    %63 = vector.shape_cast %62 : vector<8x8xf32> to vector<8x8x1xf32>
    %64 = tpu.reciprocal %63 {approx = true} : vector<8x8x1xf32> -> vector<8x8x1xf32>
    %65 = vector.broadcast %64 : vector<8x8x1xf32> to vector<8x8x8xf32>
    %66 = arith.mulf %61, %65 : vector<8x8x8xf32>
    %67 = arith.truncf %66 : vector<8x8x8xf32> to vector<8x8x8xbf16>
    "tpu.trace_start"() <{level = 10 : i32, message = "bqk,bkd->bqd"}> : () -> ()
    %cst_22 = arith.constant dense<0.000000e+00> : vector<8x8x32xf32>
    %68 = tpu.matmul %67, %53, %cst_22 {dimension_numbers = #tpu.dot_dimension_numbers<[2], [1], [1], [2], [0, 0, 0, 1, 1, 2], [0], [0]>} : vector<8x8x8xbf16>, vector<8x8x32xbf16>, vector<8x8x32xf32> -> vector<8x8x32xf32>
    "tpu.trace_stop"() : () -> ()
    %c0_23 = arith.constant 0 : index
    %c0_24 = arith.constant 0 : index
    %c32 = arith.constant 32 : index
    %69 = vector.load %arg23[%c0_23, %c0_24, %c32] : memref<8x8x64xf32, #tpu.memory_space<vmem>>, vector<8x8x32xf32>
    tpu.vector_store %arg23[%c0_23, %c0_24, %c32], %68 {strides = array<i32>} : memref<8x8x64xf32, #tpu.memory_space<vmem>>, vector<8x8x32xf32>,
    %c0_25 = arith.constant 0 : index
    %c0_26 = arith.constant 0 : index
    %c0_27 = arith.constant 0 : index
    %70 = vector.load %arg23[%c0_25, %c0_26, %c0_27] : memref<8x8x64xf32, #tpu.memory_space<vmem>>, vector<8x8x64xf32>
    %71 = vector.shape_cast %70 : vector<8x8x64xf32> to vector<64x64xf32>
    %72 = arith.truncf %71 : vector<64x64xf32> to vector<64x64xbf16>
    %73 = arith.index_cast %arg1 : i32 to index
    %c0_28 = arith.constant 0 : index
    %c0_29 = arith.constant 0 : index
    %74 = vector.load %arg11[%73, %c0_28, %c0_29] : memref<2x64x64xbf16, #tpu.memory_space<vmem>>, vector<1x64x64xbf16>
    %75 = vector.shape_cast %74 : vector<1x64x64xbf16> to vector<64x64xbf16>
    %cst_30 = arith.constant dense<0.000000e+00> : vector<64x64xf32>
    %76 = tpu.matmul %72, %75, %cst_30 {dimension_numbers = #tpu.dot_dimension_numbers<[1], [0], [0], [1], [0, 0, 1, 1], [], []>} : vector<64x64xbf16>, vector<64x64xbf16>, vector<64x64xf32> -> vector<64x64xf32>
    %77 = arith.index_cast %arg1 : i32 to index
    %c0_31 = arith.constant 0 : index
    %c0_32 = arith.constant 0 : index
    %78 = vector.load %arg12[%77, %c0_31, %c0_32] : memref<2x1x64xf32, #tpu.memory_space<vmem>>, vector<1x1x64xf32>
    %79 = vector.shape_cast %78 : vector<1x1x64xf32> to vector<1x64xf32>
    %80 = vector.broadcast %79 : vector<1x64xf32> to vector<64x64xf32>
    %81 = arith.addf %76, %80 : vector<64x64xf32>
    %82 = arith.addf %4, %81 : vector<64x64xf32>
    %83 = arith.index_cast %arg1 : i32 to index
    %c0_33 = arith.constant 0 : index
    %c0_34 = arith.constant 0 : index
    %84 = vector.load %arg13[%83, %c0_33, %c0_34] : memref<2x1x64xf32, #tpu.memory_space<vmem>>, vector<1x1x64xf32>
    %85 = vector.shape_cast %84 : vector<1x1x64xf32> to vector<1x64xf32>
    %86 = arith.index_cast %arg1 : i32 to index
    %c0_35 = arith.constant 0 : index
    %c0_36 = arith.constant 0 : index
    %87 = vector.load %arg14[%86, %c0_35, %c0_36] : memref<2x1x64xf32, #tpu.memory_space<vmem>>, vector<1x1x64xf32>
    %88 = vector.shape_cast %87 : vector<1x1x64xf32> to vector<1x64xf32>
    %cst_37 = arith.constant dense<0.000000e+00> : vector<64xf32>
    %89 = vector.multi_reduction <add>, %82, %cst_37 [1] : vector<64x64xf32> to vector<64xf32>
    %90 = vector.shape_cast %89 : vector<64xf32> to vector<64x1xf32>
    %cst_38 = arith.constant 6.400000e+01 : f32
    %91 = vector.broadcast %cst_38 : f32 to vector<64x1xf32>
    %92 = arith.divf %90, %91 : vector<64x1xf32>
    %93 = vector.broadcast %92 : vector<64x1xf32> to vector<64x64xf32>
    %94 = arith.subf %82, %93 : vector<64x64xf32>
    %95 = arith.mulf %94, %94 : vector<64x64xf32>
    %cst_39 = arith.constant dense<0.000000e+00> : vector<64xf32>
    %96 = vector.multi_reduction <add>, %95, %cst_39 [1] : vector<64x64xf32> to vector<64xf32>
    %97 = vector.shape_cast %96 : vector<64xf32> to vector<64x1xf32>
    %cst_40 = arith.constant 6.400000e+01 : f32
    %98 = vector.broadcast %cst_40 : f32 to vector<64x1xf32>
    %99 = arith.divf %97, %98 : vector<64x1xf32>
    %100 = vector.broadcast %92 : vector<64x1xf32> to vector<64x64xf32>
    %101 = arith.subf %82, %100 : vector<64x64xf32>
    %cst_41 = arith.constant 9.99999974E-6 : f32
    %102 = vector.broadcast %cst_41 : f32 to vector<64x1xf32>
    %103 = arith.addf %99, %102 : vector<64x1xf32>
    %104 = math.rsqrt %103 : vector<64x1xf32>
    %105 = vector.broadcast %104 : vector<64x1xf32> to vector<64x64xf32>
    %106 = arith.mulf %101, %105 : vector<64x64xf32>
    %107 = vector.broadcast %85 : vector<1x64xf32> to vector<64x64xf32>
    %108 = arith.mulf %106, %107 : vector<64x64xf32>
    %109 = vector.broadcast %88 : vector<1x64xf32> to vector<64x64xf32>
    %110 = arith.addf %108, %109 : vector<64x64xf32>
    %111 = arith.truncf %110 : vector<64x64xf32> to vector<64x64xbf16>
    %112 = arith.index_cast %arg1 : i32 to index
    %c0_42 = arith.constant 0 : index
    %c0_43 = arith.constant 0 : index
    %113 = vector.load %arg15[%112, %c0_42, %c0_43] : memref<2x64x256xbf16, #tpu.memory_space<vmem>>, vector<1x64x256xbf16>
    %114 = vector.shape_cast %113 : vector<1x64x256xbf16> to vector<64x256xbf16>
    %cst_44 = arith.constant dense<0.000000e+00> : vector<64x256xf32>
    %115 = tpu.matmul %111, %114, %cst_44 {dimension_numbers = #tpu.dot_dimension_numbers<[1], [0], [0], [1], [0, 0, 1, 1], [], []>} : vector<64x64xbf16>, vector<64x256xbf16>, vector<64x256xf32> -> vector<64x256xf32>
    %116 = arith.index_cast %arg1 : i32 to index
    %c0_45 = arith.constant 0 : index
    %c0_46 = arith.constant 0 : index
    %117 = vector.load %arg16[%116, %c0_45, %c0_46] : memref<2x1x256xf32, #tpu.memory_space<vmem>>, vector<1x1x256xf32>
    %118 = vector.shape_cast %117 : vector<1x1x256xf32> to vector<1x256xf32>
    %119 = vector.broadcast %118 : vector<1x256xf32> to vector<64x256xf32>
    %120 = arith.addf %115, %119 : vector<64x256xf32>
    %cst_47 = arith.constant 5.000000e-01 : f32
    %121 = vector.broadcast %cst_47 : f32 to vector<64x256xf32>
    %122 = arith.mulf %121, %120 : vector<64x256xf32>
    %cst_48 = arith.constant 0.707106769 : f32
    %123 = vector.broadcast %cst_48 : f32 to vector<64x256xf32>
    %124 = arith.mulf %120, %123 : vector<64x256xf32>
    %125 = math.erf %124 : vector<64x256xf32>
    %cst_49 = arith.constant 1.000000e+00 : f32
    %126 = vector.broadcast %cst_49 : f32 to vector<64x256xf32>
    %127 = arith.addf %126, %125 : vector<64x256xf32>
    %128 = arith.mulf %122, %127 : vector<64x256xf32>
    %129 = arith.truncf %128 : vector<64x256xf32> to vector<64x256xbf16>
    %130 = arith.index_cast %arg1 : i32 to index
    %c0_50 = arith.constant 0 : index
    %c0_51 = arith.constant 0 : index
    %131 = vector.load %arg17[%130, %c0_50, %c0_51] : memref<2x256x64xbf16, #tpu.memory_space<vmem>>, vector<1x256x64xbf16>
    %132 = vector.shape_cast %131 : vector<1x256x64xbf16> to vector<256x64xbf16>
    %cst_52 = arith.constant dense<0.000000e+00> : vector<64x64xf32>
    %133 = tpu.matmul %129, %132, %cst_52 {dimension_numbers = #tpu.dot_dimension_numbers<[1], [0], [0], [1], [0, 0, 1, 1], [], []>} : vector<64x256xbf16>, vector<256x64xbf16>, vector<64x64xf32> -> vector<64x64xf32>
    %134 = arith.index_cast %arg1 : i32 to index
    %c0_53 = arith.constant 0 : index
    %c0_54 = arith.constant 0 : index
    %135 = vector.load %arg18[%134, %c0_53, %c0_54] : memref<2x1x64xf32, #tpu.memory_space<vmem>>, vector<1x1x64xf32>
    %136 = vector.shape_cast %135 : vector<1x1x64xf32> to vector<1x64xf32>
    %137 = vector.broadcast %136 : vector<1x64xf32> to vector<64x64xf32>
    %138 = arith.addf %133, %137 : vector<64x64xf32>
    %139 = arith.addf %110, %138 : vector<64x64xf32>
    %140 = arith.index_cast %arg1 : i32 to index
    %c0_55 = arith.constant 0 : index
    %c0_56 = arith.constant 0 : index
    %141 = vector.load %arg19[%140, %c0_55, %c0_56] : memref<2x1x64xf32, #tpu.memory_space<vmem>>, vector<1x1x64xf32>
    %142 = vector.shape_cast %141 : vector<1x1x64xf32> to vector<1x64xf32>
    %143 = arith.index_cast %arg1 : i32 to index
    %c0_57 = arith.constant 0 : index
    %c0_58 = arith.constant 0 : index
    %144 = vector.load %arg20[%143, %c0_57, %c0_58] : memref<2x1x64xf32, #tpu.memory_space<vmem>>, vector<1x1x64xf32>
    %145 = vector.shape_cast %144 : vector<1x1x64xf32> to vector<1x64xf32>
    %cst_59 = arith.constant dense<0.000000e+00> : vector<64xf32>
    %146 = vector.multi_reduction <add>, %139, %cst_59 [1] : vector<64x64xf32> to vector<64xf32>
    %147 = vector.shape_cast %146 : vector<64xf32> to vector<64x1xf32>
    %cst_60 = arith.constant 6.400000e+01 : f32
    %148 = vector.broadcast %cst_60 : f32 to vector<64x1xf32>
    %149 = arith.divf %147, %148 : vector<64x1xf32>
    %150 = vector.broadcast %149 : vector<64x1xf32> to vector<64x64xf32>
    %151 = arith.subf %139, %150 : vector<64x64xf32>
    %152 = arith.mulf %151, %151 : vector<64x64xf32>
    %cst_61 = arith.constant dense<0.000000e+00> : vector<64xf32>
    %153 = vector.multi_reduction <add>, %152, %cst_61 [1] : vector<64x64xf32> to vector<64xf32>
    %154 = vector.shape_cast %153 : vector<64xf32> to vector<64x1xf32>
    %cst_62 = arith.constant 6.400000e+01 : f32
    %155 = vector.broadcast %cst_62 : f32 to vector<64x1xf32>
    %156 = arith.divf %154, %155 : vector<64x1xf32>
    %157 = vector.broadcast %149 : vector<64x1xf32> to vector<64x64xf32>
    %158 = arith.subf %139, %157 : vector<64x64xf32>
    %cst_63 = arith.constant 9.99999974E-6 : f32
    %159 = vector.broadcast %cst_63 : f32 to vector<64x1xf32>
    %160 = arith.addf %156, %159 : vector<64x1xf32>
    %161 = math.rsqrt %160 : vector<64x1xf32>
    %162 = vector.broadcast %161 : vector<64x1xf32> to vector<64x64xf32>
    %163 = arith.mulf %158, %162 : vector<64x64xf32>
    %164 = vector.broadcast %142 : vector<1x64xf32> to vector<64x64xf32>
    %165 = arith.mulf %163, %164 : vector<64x64xf32>
    %166 = vector.broadcast %145 : vector<1x64xf32> to vector<64x64xf32>
    %167 = arith.addf %165, %166 : vector<64x64xf32>
    %168 = vector.shape_cast %167 : vector<64x64xf32> to vector<8x8x64xf32>
    %c0_64 = arith.constant 0 : index
    %c0_65 = arith.constant 0 : index
    %c0_66 = arith.constant 0 : index
    %169 = vector.load %arg22[%c0_64, %c0_65, %c0_66] : memref<8x8x64xf32, #tpu.memory_space<vmem>>, vector<8x8x64xf32>
    tpu.vector_store %arg22[%c0_64, %c0_65, %c0_66], %168 {strides = array<i32>} : memref<8x8x64xf32, #tpu.memory_space<vmem>>, vector<8x8x64xf32>,
    %c1_i32 = arith.constant 1 : i32
    %170 = arith.cmpi eq, %arg1, %c1_i32 : i32
    %171 = arith.extui %170 : i1 to i32
    %c0_i32_67 = arith.constant 0 : i32
    %172 = arith.cmpi ne, %171, %c0_i32_67 : i32
    scf.if %172 {
      %173 = vector.shape_cast %167 : vector<64x64xf32> to vector<8x8x64xf32>
      %174 = vector.extract_strided_slice %173 {offsets = [0, 7, 0], sizes = [8, 1, 64], strides = [1, 1, 1]} : vector<8x8x64xf32> to vector<8x1x64xf32>
      %c0_68 = arith.constant 0 : index
      %c0_69 = arith.constant 0 : index
      %c0_70 = arith.constant 0 : index
      %175 = vector.load %arg21[%c0_68, %c0_69, %c0_70] : memref<8x1x64xf32, #tpu.memory_space<vmem>>, vector<8x1x64xf32>
      tpu.vector_store %arg21[%c0_68, %c0_69, %c0_70], %174 {strides = array<i32>} : memref<8x1x64xf32, #tpu.memory_space<vmem>>, vector<8x1x64xf32>,
    } else {
    }
    return
  }
  func.func @transform_0(%arg0: i32, %arg1: i32) -> (i32, i32, i32) {
    %c0_i32 = arith.constant 0 : i32
    %c0_i32_0 = arith.constant 0 : i32
    %c0_i32_1 = arith.constant 0 : i32
    return %arg0, %c0_i32, %c0_i32_0 : i32, i32, i32
  }
  func.func @transform_1(%arg0: i32, %arg1: i32) -> (i32, i32, i32) {
    %c0_i32 = arith.constant 0 : i32
    %c0_i32_0 = arith.constant 0 : i32
    %c0_i32_1 = arith.constant 0 : i32
    return %arg0, %c0_i32, %c0_i32_0 : i32, i32, i32
  }
  func.func @transform_2(%arg0: i32, %arg1: i32) -> (i32, i32) {
    %c0_i32 = arith.constant 0 : i32
    %c0_i32_0 = arith.constant 0 : i32
    %c0_i32_1 = arith.constant 0 : i32
    return %c0_i32, %c0_i32_0 : i32, i32
  }
  func.func @transform_3(%arg0: i32, %arg1: i32) -> (i32, i32, i32) {
    %c0_i32 = arith.constant 0 : i32
    %c0_i32_0 = arith.constant 0 : i32
    %c0_i32_1 = arith.constant 0 : i32
    return %arg0, %c0_i32, %c0_i32_0 : i32, i32, i32
  }
  func.func @transform_4(%arg0: i32, %arg1: i32) -> (i32, i32) {
    %c0_i32 = arith.constant 0 : i32
    %c0_i32_0 = arith.constant 0 : i32
    %c0_i32_1 = arith.constant 0 : i32
    return %c0_i32, %c0_i32_0 : i32, i32
  }
  func.func @transform_5(%arg0: i32, %arg1: i32) -> (i32, i32) {
    %c0_i32 = arith.constant 0 : i32
    %c0_i32_0 = arith.constant 0 : i32
    %c0_i32_1 = arith.constant 0 : i32
    return %c0_i32, %c0_i32_0 : i32, i32
  }
  func.func @transform_6(%arg0: i32, %arg1: i32) -> (i32, i32) {
    %c0_i32 = arith.constant 0 : i32
    %c0_i32_0 = arith.constant 0 : i32
    %c0_i32_1 = arith.constant 0 : i32
    return %c0_i32, %c0_i32_0 : i32, i32
  }
  func.func @transform_7(%arg0: i32, %arg1: i32) -> (i32, i32, i32) {
    %c0_i32 = arith.constant 0 : i32
    %c0_i32_0 = arith.constant 0 : i32
    %c0_i32_1 = arith.constant 0 : i32
    %c0_i32_2 = arith.constant 0 : i32
    return %c0_i32, %c0_i32_0, %c0_i32_1 : i32, i32, i32
  }
  func.func @transform_8(%arg0: i32, %arg1: i32) -> (i32, i32, i32) {
    %c0_i32 = arith.constant 0 : i32
    %c0_i32_0 = arith.constant 0 : i32
    %c0_i32_1 = arith.constant 0 : i32
    %c0_i32_2 = arith.constant 0 : i32
    return %c0_i32, %c0_i32_0, %c0_i32_1 : i32, i32, i32
  }
  func.func @transform_9(%arg0: i32, %arg1: i32) -> (i32, i32, i32) {
    %c0_i32 = arith.constant 0 : i32
    %c0_i32_0 = arith.constant 0 : i32
    %c0_i32_1 = arith.constant 0 : i32
    %c0_i32_2 = arith.constant 0 : i32
    return %c0_i32, %c0_i32_0, %c0_i32_1 : i32, i32, i32
  }
  func.func @transform_10(%arg0: i32, %arg1: i32) -> (i32, i32, i32) {
    %c0_i32 = arith.constant 0 : i32
    %c0_i32_0 = arith.constant 0 : i32
    %c0_i32_1 = arith.constant 0 : i32
    %c0_i32_2 = arith.constant 0 : i32
    return %c0_i32, %c0_i32_0, %c0_i32_1 : i32, i32, i32
  }
  func.func @transform_11(%arg0: i32, %arg1: i32) -> (i32, i32, i32) {
    %c0_i32 = arith.constant 0 : i32
    %c0_i32_0 = arith.constant 0 : i32
    %c0_i32_1 = arith.constant 0 : i32
    %c0_i32_2 = arith.constant 0 : i32
    return %c0_i32, %c0_i32_0, %c0_i32_1 : i32, i32, i32
  }
  func.func @transform_12(%arg0: i32, %arg1: i32) -> (i32, i32, i32) {
    %c0_i32 = arith.constant 0 : i32
    %c0_i32_0 = arith.constant 0 : i32
    %c0_i32_1 = arith.constant 0 : i32
    %c0_i32_2 = arith.constant 0 : i32
    return %c0_i32, %c0_i32_0, %c0_i32_1 : i32, i32, i32
  }
  func.func @transform_13(%arg0: i32, %arg1: i32) -> (i32, i32, i32) {
    %c0_i32 = arith.constant 0 : i32
    %c0_i32_0 = arith.constant 0 : i32
    %c0_i32_1 = arith.constant 0 : i32
    %c0_i32_2 = arith.constant 0 : i32
    return %c0_i32, %c0_i32_0, %c0_i32_1 : i32, i32, i32
  }
  func.func @transform_14(%arg0: i32, %arg1: i32) -> (i32, i32, i32) {
    %c0_i32 = arith.constant 0 : i32
    %c0_i32_0 = arith.constant 0 : i32
    %c0_i32_1 = arith.constant 0 : i32
    %c0_i32_2 = arith.constant 0 : i32
    return %c0_i32, %c0_i32_0, %c0_i32_1 : i32, i32, i32
  }
  func.func @transform_15(%arg0: i32, %arg1: i32) -> (i32, i32, i32) {
    %c0_i32 = arith.constant 0 : i32
    %c0_i32_0 = arith.constant 0 : i32
    %c0_i32_1 = arith.constant 0 : i32
    %c0_i32_2 = arith.constant 0 : i32
    return %c0_i32, %c0_i32_0, %c0_i32_1 : i32, i32, i32
  }
  func.func @transform_16(%arg0: i32, %arg1: i32) -> (i32, i32, i32) {
    %c0_i32 = arith.constant 0 : i32
    %c0_i32_0 = arith.constant 0 : i32
    %c0_i32_1 = arith.constant 0 : i32
    %c0_i32_2 = arith.constant 0 : i32
    return %c0_i32, %c0_i32_0, %c0_i32_1 : i32, i32, i32
  }
  func.func @transform_17(%arg0: i32, %arg1: i32) -> (i32, i32, i32) {
    %c0_i32 = arith.constant 0 : i32
    %c0_i32_0 = arith.constant 0 : i32
    %c0_i32_1 = arith.constant 0 : i32
    %c0_i32_2 = arith.constant 0 : i32
    return %c0_i32, %c0_i32_0, %c0_i32_1 : i32, i32, i32
  }
  func.func @transform_18(%arg0: i32, %arg1: i32) -> (i32, i32, i32) {
    %c0_i32 = arith.constant 0 : i32
    %c0_i32_0 = arith.constant 0 : i32
    %c0_i32_1 = arith.constant 0 : i32
    %c0_i32_2 = arith.constant 0 : i32
    return %c0_i32, %c0_i32_0, %c0_i32_1 : i32, i32, i32
  }
  func.func @transform_19(%arg0: i32, %arg1: i32) -> (i32, i32, i32) {
    %c0_i32 = arith.constant 0 : i32
    %c0_i32_0 = arith.constant 0 : i32
    %c0_i32_1 = arith.constant 0 : i32
    return %arg0, %c0_i32, %c0_i32_0 : i32, i32, i32
  }
}

</mosaic_0001>

<llo_original>
// kernel: time_sasrec_forward.3
$region0: #{time_sasrec_forward.3}
  #allocation0 [shape = 'u32[]', space=smem, size = 0x4, offset = 0x4, fixed_abs, tag = 'smem constant byte address 0x4 - core index']
  #allocation1 [shape = 'u32[72,128]{1,0:T(1,128)}', space=vmem, size = 0x9000, scoped, tag = 'internal scratch']
  %s0 = inlined_call_operand.vmem [shape: f32[16,64], index: 0, kind: input, shape index: {}]
  %s1 = inlined_call_operand.vmem [shape: bf16[64,512], index: 1, kind: input, shape index: {}]
  %s2 = inlined_call_operand.vmem [shape: f32[1,512], index: 2, kind: input, shape index: {}]
  %s3 = inlined_call_operand.hbm [shape: f32[16,512], index: 3, kind: output, shape index: {}]
  %s4 = sld [smem:[#allocation0]]
  $region83: #{time_sasrec_forward.3} parent=0
    _
  %s6 = ssub.s32 1, %s4
  %s7 = scalar_select 0, %s6, %s4
  $region1: #{time_sasrec_forward.3} parent=0
    #allocation2 [shape = 'u8[65536]{0}', space=vmem, size = 0x10000, scoped, tag = 'input window, operand 1']
    #allocation3 [shape = 'u8[32768]{0}', space=vmem, size = 0x8000, scoped, tag = 'output window, operand 0']
    #allocation4 [shape = 's32[2]{0}', space=sflag, size = 0x8, scoped, tag = 'scoped memory for time_sasrec_forward.3']
    %8 = vsyncpa [#allocation4], 0
    %s9 = scalar_lea.sflag [#allocation4], 1
    %10 = vsyncpa %s9, 0
    loop: start=0, step=1, limit=4
    $region2: #{time_sasrec_forward.3} parent=1 // loop_pre_header
      _
    $region3: #{time_sasrec_forward.3} parent=1 // loop_header
      %s12 = sphi 0, %s16
      %p13 = scmp.ge.s32.totalorder %s12, 4
      %s20 = sphi 0, %s20
      %s22 = sphi 0, %s20
      %s23 = sphi 0, %s22
      %s37 = sphi 0, %s23
      %s43 = sphi 0, %s45
      %s46 = sphi 0, %s43
      %s47 = sphi 0, %s46
      %s63 = sphi 0, %s47
      %s69 = sphi 0, %s71
      %s72 = sphi 0, %s69
      %s73 = sphi 0, %s72
      %s89 = sphi 0, %s73
      %s95 = sphi 0, %s97
      %s98 = sphi 0, %s95
      %s99 = sphi 0, %s98
      %s115 = sphi 0, %s99
    $region4: #{time_sasrec_forward.3} parent=1 // loop_header_branch
      %15 = sbr.rel (%p13) target = $region8
    $region5: #{time_sasrec_forward.3} parent=1 // loop_body
      %s17 = ssub.s32 %s12, 1
      %s18 = ssub.s32 %s12, 2
      %s19 = sadd.s32 %s12, 1
      %s21 = sadd.s32 %s20, 1
      %p24 = scmp.eq.s32.totalorder %s12, 1
      %p25 = scmp.ne.s32.totalorder %s20, %s22
      %p26 = scmp.eq.s32.totalorder %s12, 0
      %p27 = por %p25, %p26
      %p28 = scmp.ne.s32.totalorder %s20, %s22
      %p29 = scmp.eq.s32.totalorder %s17, 1
      %p30 = por %p28, %p29
      %p31 = scmp.ne.s32.totalorder %s22, %s23
      %p32 = scmp.eq.s32.totalorder %s17, 0
      %p33 = por %p31, %p32
      %p34 = scmp.ne.s32.totalorder %s22, %s23
      %p35 = scmp.eq.s32.totalorder %s18, 1
      %p36 = por %p34, %p35
      %p38 = scmp.ne.s32.totalorder %s23, %s37
      %p39 = scmp.eq.s32.totalorder %s18, 0
      %p40 = por %p38, %p39
      %s41 = ssub.s32 %s12, %s19
      %p42 = scmp.eq.s32.totalorder %s41, 0
      %s44 = sadd.s32 %s43, 1
      %s45 = scalar_select %p42, %s43, %s44
      %p48 = pneg %p42
      %p49 = scmp.eq.s32.totalorder %s12, 1
      %p50 = por %p48, %p49
      %p51 = scmp.ne.s32.totalorder %s43, %s46
      %p52 = scmp.eq.s32.totalorder %s12, 0
      %p53 = por %p51, %p52
      %p54 = scmp.ne.s32.totalorder %s43, %s46
      %p55 = scmp.eq.s32.totalorder %s17, 1
      %p56 = por %p54, %p55
      %p57 = scmp.ne.s32.totalorder %s46, %s47
      %p58 = scmp.eq.s32.totalorder %s17, 0
      %p59 = por %p57, %p58
      %p60 = scmp.ne.s32.totalorder %s46, %s47
      %p61 = scmp.eq.s32.totalorder %s18, 1
      %p62 = por %p60, %p61
      %p64 = scmp.ne.s32.totalorder %s47, %s63
      %p65 = scmp.eq.s32.totalorder %s18, 0
      %p66 = por %p64, %p65
      %s67 = ssub.s32 %s12, %s19
      %p68 = scmp.eq.s32.totalorder %s67, 0
      %s70 = sadd.s32 %s69, 1
      %s71 = scalar_select %p68, %s69, %s70
      %p74 = pneg %p68
      %p75 = scmp.eq.s32.totalorder %s12, 1
      %p76 = por %p74, %p75
      %p77 = scmp.ne.s32.totalorder %s69, %s72
      %p78 = scmp.eq.s32.totalorder %s12, 0
      %p79 = por %p77, %p78
      %p80 = scmp.ne.s32.totalorder %s69, %s72
      %p81 = scmp.eq.s32.totalorder %s17, 1
      %p82 = por %p80, %p81
      %p83 = scmp.ne.s32.totalorder %s72, %s73
      %p84 = scmp.eq.s32.totalorder %s17, 0
      %p85 = por %p83, %p84
      %p86 = scmp.ne.s32.totalorder %s72, %s73
      %p87 = scmp.eq.s32.totalorder %s18, 1
      %p88 = por %p86, %p87
      %p90 = scmp.ne.s32.totalorder %s73, %s89
      %p91 = scmp.eq.s32.totalorder %s18, 0
      %p92 = por %p90, %p91
      %s93 = ssub.s32 %s12, %s19
      %p94 = scmp.eq.s32.totalorder %s93, 0
      %s96 = sadd.s32 %s95, 1
      %s97 = scalar_select %p94, %s95, %s96
      %p100 = pneg %p94
      %p101 = scmp.eq.s32.totalorder %s12, 1
      %p102 = por %p100, %p101
      %p103 = scmp.ne.s32.totalorder %s95, %s98
      %p104 = scmp.eq.s32.totalorder %s12, 0
      %p105 = por %p103, %p104
      %p106 = scmp.ne.s32.totalorder %s95, %s98
      %p107 = scmp.eq.s32.totalorder %s17, 1
      %p108 = por %p106, %p107
      %p109 = scmp.ne.s32.totalorder %s98, %s99
      %p110 = scmp.eq.s32.totalorder %s17, 0
      %p111 = por %p109, %p110
      %p112 = scmp.ne.s32.totalorder %s98, %s99
      %p113 = scmp.eq.s32.totalorder %s18, 1
      %p114 = por %p112, %p113
      %p116 = scmp.ne.s32.totalorder %s99, %s115
      %p117 = scmp.eq.s32.totalorder %s18, 0
      %p118 = por %p116, %p117
      %p119 = scmp.le.s32.totalorder 1, %s12
      %p120 = scmp.lt.s32.totalorder %s12, 3
      %p121 = pnand %p119, %p120
      %p122 = pneg %p121
      // Predicated region
      $region9: #{time_sasrec_forward.3} parent=5 // pred_check
        _
      $region10: #{time_sasrec_forward.3} parent=5 // pred_check_branch
        %124 = sbr.rel (%p121) target = $region12
      $region11: #{time_sasrec_forward.3} parent=5 // pred_region
        %s125 = ssub.s32 %s12, 1
        // Predicated region
        $region13: #{time_sasrec_forward.3} parent=11 // pred_check
          %p126 = pneg %p33
        $region14: #{time_sasrec_forward.3} parent=11 // pred_check_branch
          %128 = sbr.rel (%p126) target = $region16
        $region15: #{time_sasrec_forward.3} parent=11 // pred_region
          _
        $region16: #{time_sasrec_forward.3} parent=11 // pred_fallthru
          _
      $region12: #{time_sasrec_forward.3} parent=5 // pred_fallthru
        _
      %p129 = scmp.lt.s32.totalorder %s12, 2
      // Predicated region
      $region17: #{time_sasrec_forward.3} parent=5 // pred_check
        %p130 = pneg %p129
      $region18: #{time_sasrec_forward.3} parent=5 // pred_check_branch
        %132 = sbr.rel (%p130) target = $region20
      $region19: #{time_sasrec_forward.3} parent=5 // pred_region
        // Predicated region
        $region21: #{time_sasrec_forward.3} parent=19 // pred_check
          %p133 = pneg %p53
        $region22: #{time_sasrec_forward.3} parent=19 // pred_check_branch
          %135 = sbr.rel (%p133) target = $region24
        $region23: #{time_sasrec_forward.3} parent=19 // pred_region
          %s136 = sand.u32 %s43, 1
          %s137 = sand.u32 %s43, 1
          %s138 = smul.addr %s137, 64
          %s139 = scalar_lea.vmem [#allocation2], %s138
          %s140 = smul.u32 2, %s12
          %s141 = smul.addr %s140, 4
          %s142 = scalar_lea.vmem %s1, %s141
          // Predicated region
          $region25: #{time_sasrec_forward.3} parent=23 // pred_check
            _
          $region26: #{time_sasrec_forward.3} parent=23 // pred_check_branch
            %144 = sbr.rel (0) target = $region28
          $region27: #{time_sasrec_forward.3} parent=23 // pred_region
            // Predicated region
            $region29: #{time_sasrec_forward.3} parent=27 // pred_check
              _
            $region30: #{time_sasrec_forward.3} parent=27 // pred_check_branch
              %146 = sbr.rel (0) target = $region32
            $region31: #{time_sasrec_forward.3} parent=27 // pred_region
              // Predicated region
              $region44: #{time_sasrec_forward.3} parent=31 // pred_check
                _
              $region45: #{time_sasrec_forward.3} parent=31 // pred_check_branch
                %176 = sbr.rel (0) target = $region47
              $region46: #{time_sasrec_forward.3} parent=31 // pred_region
                loop: start=0, step=1, limit=1
                $region48: #{time_sasrec_forward.3} parent=46 // loop_pre_header
                  _
                $region49: #{time_sasrec_forward.3} parent=46 // loop_header
                  %s178 = sphi 0, %s182
                  %p179 = scmp.ge.s32.totalorder %s178, 1
                  %s183 = sphi %s142, %s142
                  %s184 = sphi %s139, %s139
                $region50: #{time_sasrec_forward.3} parent=46 // loop_header_branch
                  %181 = sbr.rel (%p179) target = $region54
                $region51: #{time_sasrec_forward.3} parent=46 // loop_body
                  %v185 = vld [vmem:[%s183] sm:$0xff]
                  %186 = vst [vmem:[%s184] sm:$0xff] %v185
                  %v187 = vld [vmem:[%s183 + $0x10] sm:$0xff]
                  %188 = vst [vmem:[%s184 + $0x8] sm:$0xff] %v187
                  %v189 = vld [vmem:[%s183 + $0x20] sm:$0xff]
                  %190 = vst [vmem:[%s184 + $0x10] sm:$0xff] %v189
                  %v191 = vld [vmem:[%s183 + $0x30] sm:$0xff]
                  %192 = vst [vmem:[%s184 + $0x18] sm:$0xff] %v191
                  %v193 = vld [vmem:[%s183 + $0x40] sm:$0xff]
                  %194 = vst [vmem:[%s184 + $0x20] sm:$0xff] %v193
                  %v195 = vld [vmem:[%s183 + $0x50] sm:$0xff]
                  %196 = vst [vmem:[%s184 + $0x28] sm:$0xff] %v195
                  %v197 = vld [vmem:[%s183 + $0x60] sm:$0xff]
                  %198 = vst [vmem:[%s184 + $0x30] sm:$0xff] %v197
                  %v199 = vld [vmem:[%s183 + $0x70] sm:$0xff]
                  %200 = vst [vmem:[%s184 + $0x38] sm:$0xff] %v199
                $region52: #{time_sasrec_forward.3} parent=46 // loop_footer
                  %s182 = sadd.s32 1, %s178
                $region53: #{time_sasrec_forward.3} parent=46 // loop_footer_branch
                  %177 = sbr.rel target = $region49
                $region54: #{time_sasrec_forward.3} parent=46 // loop_exit
                  _
              $region47: #{time_sasrec_forward.3} parent=31 // pred_fallthru
                _
              // Predicated region
              $region55: #{time_sasrec_forward.3} parent=31 // pred_check
                _
              $region56: #{time_sasrec_forward.3} parent=31 // pred_check_branch
                %202 = sbr.rel target = $region58
              $region57: #{time_sasrec_forward.3} parent=31 // pred_region
                _
              $region58: #{time_sasrec_forward.3} parent=31 // pred_fallthru
                _
            $region32: #{time_sasrec_forward.3} parent=27 // pred_fallthru
              _
            // Predicated region
            $region33: #{time_sasrec_forward.3} parent=27 // pred_check
              _
            $region34: #{time_sasrec_forward.3} parent=27 // pred_check_branch
              %148 = sbr.rel target = $region36
            $region35: #{time_sasrec_forward.3} parent=27 // pred_region
              %s150 = ssub.s32 256, 1
              loop: start=0, step=1, limit=1
              $region37: #{time_sasrec_forward.3} parent=35 // loop_pre_header
                _
              $region38: #{time_sasrec_forward.3} parent=35 // loop_header
                %s152 = sphi 0, %s156
                %p153 = scmp.ge.s32.totalorder %s152, 1
                %s157 = sphi %s142, %s142
                %s158 = sphi %s139, %s139
              $region39: #{time_sasrec_forward.3} parent=35 // loop_header_branch
                %155 = sbr.rel (%p153) target = $region43
              $region40: #{time_sasrec_forward.3} parent=35 // loop_body
                %v159 = vld [vmem:[%s157] sm:%s150]
                %160 = vst [vmem:[%s158] sm:%s150] %v159
                %v161 = vld [vmem:[%s157 + $0x10] sm:%s150]
                %162 = vst [vmem:[%s158 + $0x8] sm:%s150] %v161
                %v163 = vld [vmem:[%s157 + $0x20] sm:%s150]
                %164 = vst [vmem:[%s158 + $0x10] sm:%s150] %v163
                %v165 = vld [vmem:[%s157 + $0x30] sm:%s150]
                %166 = vst [vmem:[%s158 + $0x18] sm:%s150] %v165
                %v167 = vld [vmem:[%s157 + $0x40] sm:%s150]
                %168 = vst [vmem:[%s158 + $0x20] sm:%s150] %v167
                %v169 = vld [vmem:[%s157 + $0x50] sm:%s150]
                %170 = vst [vmem:[%s158 + $0x28] sm:%s150] %v169
                %v171 = vld [vmem:[%s157 + $0x60] sm:%s150]
                %172 = vst [vmem:[%s158 + $0x30] sm:%s150] %v171
                %v173 = vld [vmem:[%s157 + $0x70] sm:%s150]
                %174 = vst [vmem:[%s158 + $0x38] sm:%s150] %v173
              $region41: #{time_sasrec_forward.3} parent=35 // loop_footer
                %s156 = sadd.s32 1, %s152
              $region42: #{time_sasrec_forward.3} parent=35 // loop_footer_branch
                %151 = sbr.rel target = $region38
              $region43: #{time_sasrec_forward.3} parent=35 // loop_exit
                _
            $region36: #{time_sasrec_forward.3} parent=27 // pred_fallthru
              _
          $region28: #{time_sasrec_forward.3} parent=23 // pred_fallthru
            _
          %203 = vnop
        $region24: #{time_sasrec_forward.3} parent=19 // pred_fallthru
          _
        // Predicated region
        $region59: #{time_sasrec_forward.3} parent=19 // pred_check
          %p204 = pneg %p79
        $region60: #{time_sasrec_forward.3} parent=19 // pred_check_branch
          %206 = sbr.rel (%p204) target = $region62
        $region61: #{time_sasrec_forward.3} parent=19 // pred_region
          %s207 = smul.u32 2, %s12
          %p208 = scmp.lt.s32.totalorder %s207, 3
          %s209 = scalar_select %p208, %s207, 3
          %s210 = scalar_lea.vmem %s2, %s209
          %s211 = smul.u32 2, %s12
        $region62: #{time_sasrec_forward.3} parent=19 // pred_fallthru
          _
      $region20: #{time_sasrec_forward.3} parent=5 // pred_fallthru
        _
      %p212 = scmp.le.s32.totalorder 1, %s12
      %p213 = scmp.lt.s32.totalorder %s12, 3
      %p214 = pnand %p212, %p213
      %p215 = pneg %p214
      // Predicated region
      $region63: #{time_sasrec_forward.3} parent=5 // pred_check
        _
      $region64: #{time_sasrec_forward.3} parent=5 // pred_check_branch
        %217 = sbr.rel (%p214) target = $region66
      $region65: #{time_sasrec_forward.3} parent=5 // pred_region
        %s218 = ssub.s32 %s12, 1
        %s219 = sand.u32 %s46, 1
        %s220 = sand.u32 %s46, 1
        %s221 = smul.addr %s220, 64
        %s222 = scalar_lea.vmem [#allocation2], %s221
        // Predicated region
        $region67: #{time_sasrec_forward.3} parent=65 // pred_check
          %p223 = pneg %p59
        $region68: #{time_sasrec_forward.3} parent=65 // pred_check_branch
          %225 = sbr.rel (%p223) target = $region70
        $region69: #{time_sasrec_forward.3} parent=65 // pred_region
          _
        $region70: #{time_sasrec_forward.3} parent=65 // pred_fallthru
          _
        %p226 = pneg %p33
        %p227 = pneg %p30
        %s228 = sand.u32 %s46, 1
        %s229 = sand.u32 %s46, 1
        %s230 = smul.addr %s229, 64
        %s231 = scalar_lea.vmem [#allocation2], %s230
        %p232 = pneg %p59
        %p233 = pneg %p56
        %s234 = smul.u32 2, %s17
        %p235 = scmp.lt.s32.totalorder %s234, 3
        %s236 = scalar_select %p235, %s234, 3
        %s237 = scalar_lea.vmem %s2, %s236
        %p238 = pneg %p85
        %p239 = pneg %p82
        %p240 = pneg %p111
        %p241 = pneg %p108
        %s242 = sand.u32 %s98, 1
        %s243 = scalar_lea.sflag [#allocation4], %s242
        %s244 = sand.u32 %s98, 1
        %s245 = smul.addr %s244, 32
        %s246 = scalar_lea.vmem [#allocation3], %s245
        %s247 = smul.u32 2, %s17
        %s248 = smul.u32 2, %s17
        %p249 = scmp.lt.s32.totalorder %s248, 3
        %s250 = scalar_select %p249, %s248, 3
        %s251 = scalar_lea.vmem %s2, %s250
        %s252 = smul.u32 2, %s17
        %s253 = smul.u32 2, %s17
        %v255 = vld [vmem:[%s0] sm:$0xff]
        %v256 = vld [vmem:[%s0 + $0x8] sm:$0xff]
        %v257 = vpack.c.bf16 %v256, %v255
        %v258 = vld [vmem:[%s222] sm:$0xff]
        %v259 = vld [vmem:[%s222 + $0x8] sm:$0xff]
        %v260 = vld [vmem:[%s222 + $0x10] sm:$0xff]
        %v261 = vld [vmem:[%s222 + $0x18] sm:$0xff]
        %v262 = vld [vmem:[%s222 + $0x20] sm:$0xff]
        %v263 = vld [vmem:[%s222 + $0x28] sm:$0xff]
        %v264 = vld [vmem:[%s222 + $0x30] sm:$0xff]
        %v265 = vld [vmem:[%s222 + $0x38] sm:$0xff]
        %v266 = vld [vmem:[%s251] sm:$0x3]
        %v268 = vperm.slane %v266, 0
        %v269 = vperm.slane %v266, 1
        %v280 = vunpack.c.l.b16 %v258
        %v281 = vunpack.c.h.b16 %v258
        %v282 = vunpack.c.l.b16 %v259
        %v283 = vunpack.c.h.b16 %v259
        %v284 = vunpack.c.l.b16 %v260
        %v285 = vunpack.c.h.b16 %v260
        %v286 = vunpack.c.l.b16 %v261
        %v287 = vunpack.c.h.b16 %v261
        %v288 = vunpack.c.l.b16 %v262
        %v289 = vunpack.c.h.b16 %v262
        %v290 = vunpack.c.l.b16 %v263
        %v291 = vunpack.c.h.b16 %v263
        %v292 = vunpack.c.l.b16 %v264
        %v293 = vunpack.c.h.b16 %v264
        %v294 = vunpack.c.l.b16 %v265
        %v295 = vunpack.c.h.b16 %v265
        %v296 = vpack.c.b16 %v282, %v280
        %v297 = vpack.c.b16 %v283, %v281
        %v298 = vpack.c.b16 %v286, %v284
        %v299 = vpack.c.b16 %v287, %v285
        %v300 = vpack.c.b16 %v290, %v288
        %v301 = vpack.c.b16 %v291, %v289
        %v302 = vpack.c.b16 %v294, %v292
        %v303 = vpack.c.b16 %v295, %v293
        %vm312 = vcmask 523264
        %v314 = vsel %vm312, %v257, 0
        %316 = vmatpush.bf16.msra.mxu0 0
        %317 = vmatpush.bf16.msra.mxu0 0
        %318 = vmatpush.bf16.msra.mxu0 0
        %319 = vmatpush.bf16.msra.mxu0 0
        %320 = vmatpush.bf16.msra.mxu0 %v302
        %321 = vmatpush.bf16.msra.mxu0 %v300
        %322 = vmatpush.bf16.msra.mxu0 %v298
        %323 = vmatpush.bf16.msra.mxu0 %v296
        %324 = vmatmul.bf16.gmra.mxu0 %v314
        %v325 = vpop.f32.mrf.mxu0
        %v326 = vadd.f32 %v268, %v325
        %v327 = vpop.f32.mrf.mxu0
        %v328 = vadd.f32 %v268, %v327
        %329 = vdwg.mxu0
        %330 = vmatpush.bf16.msra.mxu0 0
        %331 = vmatpush.bf16.msra.mxu0 0
        %332 = vmatpush.bf16.msra.mxu0 0
        %333 = vmatpush.bf16.msra.mxu0 0
        %334 = vmatpush.bf16.msra.mxu0 %v303
        %335 = vmatpush.bf16.msra.mxu0 %v301
        %336 = vmatpush.bf16.msra.mxu0 %v299
        %337 = vmatpush.bf16.msra.mxu0 %v297
        %338 = vmatmul.bf16.gmra.mxu0 %v314
        %v339 = vpop.f32.mrf.mxu0
        %v340 = vadd.f32 %v269, %v339
        %v341 = vpop.f32.mrf.mxu0
        %v342 = vadd.f32 %v269, %v341
        %343 = vdwg.mxu0
        %344 = vst [vmem:[%s246] sm:$0xff] %v326
        %345 = vst [vmem:[%s246 + $0x8] sm:$0xff] %v340
        %346 = vst [vmem:[%s246 + $0x10] sm:$0xff] %v328
        %347 = vst [vmem:[%s246 + $0x18] sm:$0xff] %v342
        %s348 = sand.u32 %s98, 1
        %s349 = scalar_lea.sflag [#allocation4], %s348
        %s350 = sand.u32 %s98, 1
        %s351 = smul.addr %s350, 32
        %s352 = scalar_lea.vmem [#allocation3], %s351
        // Predicated region
        $region71: #{time_sasrec_forward.3} parent=65 // pred_check
          %p353 = pneg %p108
        $region72: #{time_sasrec_forward.3} parent=65 // pred_check_branch
          %355 = sbr.rel (%p353) target = $region74
        $region73: #{time_sasrec_forward.3} parent=65 // pred_region
          %s356 = smul.u32 2, %s17
          %358 = vsyncadd %s349, 0
          %s359 = smul.addr %s356, 8
          %s360 = scalar_lea.hbm %s3, %s359
          %s361 = sshll.u32 %s352, 4
          %s362 = int_to_ptr.vmem [resolvable:$true] %s361
          %s363 = sshll.u32 %s360, 4
          %s364 = int_to_ptr.hbm [resolvable:$true] %s363
          %369 = dma.vmem_to_hbm [thread:$0]  %s362, 512, %s364, %s349, 256, 512, 16
        $region74: #{time_sasrec_forward.3} parent=65 // pred_fallthru
          _
      $region66: #{time_sasrec_forward.3} parent=5 // pred_fallthru
        _
      %p370 = scmp.le.s32.totalorder 2, %s12
      // Predicated region
      $region75: #{time_sasrec_forward.3} parent=5 // pred_check
        %p371 = pneg %p370
      $region76: #{time_sasrec_forward.3} parent=5 // pred_check_branch
        %373 = sbr.rel (%p371) target = $region78
      $region77: #{time_sasrec_forward.3} parent=5 // pred_region
        %s374 = ssub.s32 %s12, 2
        // Predicated region
        $region79: #{time_sasrec_forward.3} parent=77 // pred_check
          %p375 = pneg %p114
        $region80: #{time_sasrec_forward.3} parent=77 // pred_check_branch
          %377 = sbr.rel (%p375) target = $region82
        $region81: #{time_sasrec_forward.3} parent=77 // pred_region
          %s378 = sand.u32 %s99, 1
          %s379 = scalar_lea.sflag [#allocation4], %s378
          %s380 = sand.u32 %s99, 1
          %s381 = smul.addr %s380, 32
          %s382 = scalar_lea.vmem [#allocation3], %s381
          %384 = dma.done %s379, 512
        $region82: #{time_sasrec_forward.3} parent=77 // pred_fallthru
          _
      $region78: #{time_sasrec_forward.3} parent=5 // pred_fallthru
        _
    $region6: #{time_sasrec_forward.3} parent=1 // loop_footer
      %s16 = sadd.s32 1, %s12
    $region7: #{time_sasrec_forward.3} parent=1 // loop_footer_branch
      %11 = sbr.rel target = $region3
    $region8: #{time_sasrec_forward.3} parent=1 // loop_exit
      _
    %385 = vsyncpa [#allocation4], 1
    %s386 = scalar_lea.sflag [#allocation4], 1
    %387 = vsyncpa %s386, 1

// kernel: time_sasrec_forward.2
$region0: #{time_sasrec_forward.2}
  #allocation0 [shape = 'u32[]', space=smem, size = 0x4, offset = 0x4, fixed_abs, tag = 'smem constant byte address 0x4 - core index']
  #allocation1 [shape = 'u32[72,128]{1,0:T(1,128)}', space=vmem, size = 0x9000, scoped, tag = 'internal scratch']
  #allocation2 [shape = 'f32[8,8,64]{2,1,0:T(8,128)}', space=vmem, size = 0x8000, scoped, tag = 'scratch operand']
  #allocation3 [shape = 'f32[8,8,64]{2,1,0:T(8,128)}', space=vmem, size = 0x8000, scoped, tag = 'scratch operand']
  %s0 = inlined_call_operand.vmem [shape: f32[16,8,64], index: 0, kind: input, shape index: {}]
  %s1 = inlined_call_operand.vmem [shape: f32[16,1,64], index: 1, kind: input, shape index: {}]
  %s2 = inlined_call_operand.vmem [shape: f32[8,64], index: 2, kind: input, shape index: {}]
  %s3 = inlined_call_operand.vmem [shape: f32[16,1,8], index: 3, kind: input, shape index: {}]
  %s4 = inlined_call_operand.vmem [shape: bf16[64,64], index: 4, kind: input, shape index: {}]
  %s5 = inlined_call_operand.vmem [shape: bf16[64,64], index: 5, kind: input, shape index: {}]
  %s6 = inlined_call_operand.vmem [shape: f32[1,64], index: 6, kind: input, shape index: {}]
  %s7 = inlined_call_operand.vmem [shape: bf16[2,64,192], index: 7, kind: input, shape index: {}]
  %s8 = inlined_call_operand.vmem [shape: f32[2,1,192], index: 8, kind: input, shape index: {}]
  %s9 = inlined_call_operand.vmem [shape: bf16[2,64,64], index: 9, kind: input, shape index: {}]
  %s10 = inlined_call_operand.vmem [shape: f32[2,1,64], index: 10, kind: input, shape index: {}]
  %s11 = inlined_call_operand.vmem [shape: f32[2,1,64], index: 11, kind: input, shape index: {}]
  %s12 = inlined_call_operand.vmem [shape: f32[2,1,64], index: 12, kind: input, shape index: {}]
  %s13 = inlined_call_operand.vmem [shape: bf16[2,64,256], index: 13, kind: input, shape index: {}]
  %s14 = inlined_call_operand.vmem [shape: f32[2,1,256], index: 14, kind: input, shape index: {}]
  %s15 = inlined_call_operand.vmem [shape: bf16[2,256,64], index: 15, kind: input, shape index: {}]
  %s16 = inlined_call_operand.vmem [shape: f32[2,1,64], index: 16, kind: input, shape index: {}]
  %s17 = inlined_call_operand.vmem [shape: f32[2,1,64], index: 17, kind: input, shape index: {}]
  %s18 = inlined_call_operand.vmem [shape: f32[2,1,64], index: 18, kind: input, shape index: {}]
  %s19 = inlined_call_operand.vmem [shape: f32[16,1,64], index: 19, kind: output, shape index: {}]
  %s20 = sld [smem:[#allocation0]]
  $region117: #{time_sasrec_forward.2} parent=0
    _
  %s22 = ssub.s32 1, %s20
  %s23 = scalar_select 0, %s22, %s20
  loop: start=0, step=1, limit=6
  $region2: #{time_sasrec_forward.2} parent=0 // loop_pre_header
    _
  $region3: #{time_sasrec_forward.2} parent=0 // loop_header
    %s25 = sphi 0, %s29
    %p26 = scmp.ge.s32.totalorder %s25, 6
    %s32 = sphi 0, %s44
    %s33 = sphi 0, %s40
    %s34 = sphi 0, %s32
    %s35 = sphi 0, %s33
    %s36 = sphi 0, %s34
    %s37 = sphi 0, %s35
    %s47 = sphi 0, %s49
    %s50 = sphi 0, %s47
    %s51 = sphi 0, %s50
    %s67 = sphi 0, %s51
    %s73 = sphi 0, %s75
    %s76 = sphi 0, %s73
    %s77 = sphi 0, %s76
    %s93 = sphi 0, %s77
    %s97 = sphi 0, %s97
    %s99 = sphi 0, %s97
    %s100 = sphi 0, %s99
    %s114 = sphi 0, %s100
    %s120 = sphi 0, %s122
    %s123 = sphi 0, %s120
    %s124 = sphi 0, %s123
    %s140 = sphi 0, %s124
    %s144 = sphi 0, %s144
    %s146 = sphi 0, %s144
    %s147 = sphi 0, %s146
    %s161 = sphi 0, %s147
    %s165 = sphi 0, %s165
    %s167 = sphi 0, %s165
    %s168 = sphi 0, %s167
    %s182 = sphi 0, %s168
    %s186 = sphi 0, %s186
    %s188 = sphi 0, %s186
    %s189 = sphi 0, %s188
    %s203 = sphi 0, %s189
    %s207 = sphi 0, %s207
    %s209 = sphi 0, %s207
    %s210 = sphi 0, %s209
    %s224 = sphi 0, %s210
    %s228 = sphi 0, %s228
    %s230 = sphi 0, %s228
    %s231 = sphi 0, %s230
    %s245 = sphi 0, %s231
    %s249 = sphi 0, %s249
    %s251 = sphi 0, %s249
    %s252 = sphi 0, %s251
    %s266 = sphi 0, %s252
    %s270 = sphi 0, %s270
    %s272 = sphi 0, %s270
    %s273 = sphi 0, %s272
    %s287 = sphi 0, %s273
    %s291 = sphi 0, %s291
    %s293 = sphi 0, %s291
    %s294 = sphi 0, %s293
    %s308 = sphi 0, %s294
    %s312 = sphi 0, %s312
    %s314 = sphi 0, %s312
    %s315 = sphi 0, %s314
    %s329 = sphi 0, %s315
    %s333 = sphi 0, %s333
    %s335 = sphi 0, %s333
    %s336 = sphi 0, %s335
    %s350 = sphi 0, %s336
    %s354 = sphi 0, %s354
    %s356 = sphi 0, %s354
    %s357 = sphi 0, %s356
    %s371 = sphi 0, %s357
    %s375 = sphi 0, %s375
    %s377 = sphi 0, %s375
    %s378 = sphi 0, %s377
    %s392 = sphi 0, %s378
    %s396 = sphi 0, %s396
    %s398 = sphi 0, %s396
    %s399 = sphi 0, %s398
    %s413 = sphi 0, %s399
    %s417 = sphi 0, %s417
    %s419 = sphi 0, %s417
    %s420 = sphi 0, %s419
    %s434 = sphi 0, %s420
    %s438 = sphi 0, %s438
    %s440 = sphi 0, %s438
    %s441 = sphi 0, %s440
    %s455 = sphi 0, %s441
    %s461 = sphi 0, %s463
    %s464 = sphi 0, %s461
    %s465 = sphi 0, %s464
    %s481 = sphi 0, %s465
  $region4: #{time_sasrec_forward.2} parent=0 // loop_header_branch
    %28 = sbr.rel (%p26) target = $region8
  $region5: #{time_sasrec_forward.2} parent=0 // loop_body
    %s30 = ssub.s32 %s25, 1
    %s31 = ssub.s32 %s25, 2
    %s38 = sadd.s32 1, %s33
    %p39 = scmp.ge.s32.totalorder %s38, 2
    %s40 = scalar_select %p39, 0, %s38
    %s41 = sadd.s32 1, %s32
    %s42 = scalar_select %p39, %s41, %s32
    %p43 = scmp.ge.s32.totalorder %s42, 2
    %s44 = scalar_select %p43, 0, %s42
    %s45 = ssub.s32 %s32, %s44
    %p46 = scmp.eq.s32.totalorder %s45, 0
    %s48 = sadd.s32 %s47, 1
    %s49 = scalar_select %p46, %s47, %s48
    %p52 = pneg %p46
    %p53 = scmp.eq.s32.totalorder %s25, 3
    %p54 = por %p52, %p53
    %p55 = scmp.ne.s32.totalorder %s47, %s50
    %p56 = scmp.eq.s32.totalorder %s25, 0
    %p57 = por %p55, %p56
    %p58 = scmp.ne.s32.totalorder %s47, %s50
    %p59 = scmp.eq.s32.totalorder %s30, 3
    %p60 = por %p58, %p59
    %p61 = scmp.ne.s32.totalorder %s50, %s51
    %p62 = scmp.eq.s32.totalorder %s30, 0
    %p63 = por %p61, %p62
    %p64 = scmp.ne.s32.totalorder %s50, %s51
    %p65 = scmp.eq.s32.totalorder %s31, 3
    %p66 = por %p64, %p65
    %p68 = scmp.ne.s32.totalorder %s51, %s67
    %p69 = scmp.eq.s32.totalorder %s31, 0
    %p70 = por %p68, %p69
    %s71 = ssub.s32 %s32, %s44
    %p72 = scmp.eq.s32.totalorder %s71, 0
    %s74 = sadd.s32 %s73, 1
    %s75 = scalar_select %p72, %s73, %s74
    %p78 = pneg %p72
    %p79 = scmp.eq.s32.totalorder %s25, 3
    %p80 = por %p78, %p79
    %p81 = scmp.ne.s32.totalorder %s73, %s76
    %p82 = scmp.eq.s32.totalorder %s25, 0
    %p83 = por %p81, %p82
    %p84 = scmp.ne.s32.totalorder %s73, %s76
    %p85 = scmp.eq.s32.totalorder %s30, 3
    %p86 = por %p84, %p85
    %p87 = scmp.ne.s32.totalorder %s76, %s77
    %p88 = scmp.eq.s32.totalorder %s30, 0
    %p89 = por %p87, %p88
    %p90 = scmp.ne.s32.totalorder %s76, %s77
    %p91 = scmp.eq.s32.totalorder %s31, 3
    %p92 = por %p90, %p91
    %p94 = scmp.ne.s32.totalorder %s77, %s93
    %p95 = scmp.eq.s32.totalorder %s31, 0
    %p96 = por %p94, %p95
    %s98 = sadd.s32 %s97, 1
    %p101 = scmp.eq.s32.totalorder %s25, 3
    %p102 = scmp.ne.s32.totalorder %s97, %s99
    %p103 = scmp.eq.s32.totalorder %s25, 0
    %p104 = por %p102, %p103
    %p105 = scmp.ne.s32.totalorder %s97, %s99
    %p106 = scmp.eq.s32.totalorder %s30, 3
    %p107 = por %p105, %p106
    %p108 = scmp.ne.s32.totalorder %s99, %s100
    %p109 = scmp.eq.s32.totalorder %s30, 0
    %p110 = por %p108, %p109
    %p111 = scmp.ne.s32.totalorder %s99, %s100
    %p112 = scmp.eq.s32.totalorder %s31, 3
    %p113 = por %p111, %p112
    %p115 = scmp.ne.s32.totalorder %s100, %s114
    %p116 = scmp.eq.s32.totalorder %s31, 0
    %p117 = por %p115, %p116
    %s118 = ssub.s32 %s32, %s44
    %p119 = scmp.eq.s32.totalorder %s118, 0
    %s121 = sadd.s32 %s120, 1
    %s122 = scalar_select %p119, %s120, %s121
    %p125 = pneg %p119
    %p126 = scmp.eq.s32.totalorder %s25, 3
    %p127 = por %p125, %p126
    %p128 = scmp.ne.s32.totalorder %s120, %s123
    %p129 = scmp.eq.s32.totalorder %s25, 0
    %p130 = por %p128, %p129
    %p131 = scmp.ne.s32.totalorder %s120, %s123
    %p132 = scmp.eq.s32.totalorder %s30, 3
    %p133 = por %p131, %p132
    %p134 = scmp.ne.s32.totalorder %s123, %s124
    %p135 = scmp.eq.s32.totalorder %s30, 0
    %p136 = por %p134, %p135
    %p137 = scmp.ne.s32.totalorder %s123, %s124
    %p138 = scmp.eq.s32.totalorder %s31, 3
    %p139 = por %p137, %p138
    %p141 = scmp.ne.s32.totalorder %s124, %s140
    %p142 = scmp.eq.s32.totalorder %s31, 0
    %p143 = por %p141, %p142
    %s145 = sadd.s32 %s144, 1
    %p148 = scmp.eq.s32.totalorder %s25, 3
    %p149 = scmp.ne.s32.totalorder %s144, %s146
    %p150 = scmp.eq.s32.totalorder %s25, 0
    %p151 = por %p149, %p150
    %p152 = scmp.ne.s32.totalorder %s144, %s146
    %p153 = scmp.eq.s32.totalorder %s30, 3
    %p154 = por %p152, %p153
    %p155 = scmp.ne.s32.totalorder %s146, %s147
    %p156 = scmp.eq.s32.totalorder %s30, 0
    %p157 = por %p155, %p156
    %p158 = scmp.ne.s32.totalorder %s146, %s147
    %p159 = scmp.eq.s32.totalorder %s31, 3
    %p160 = por %p158, %p159
    %p162 = scmp.ne.s32.totalorder %s147, %s161
    %p163 = scmp.eq.s32.totalorder %s31, 0
    %p164 = por %p162, %p163
    %s166 = sadd.s32 %s165, 1
    %p169 = scmp.eq.s32.totalorder %s25, 3
    %p170 = scmp.ne.s32.totalorder %s165, %s167
    %p171 = scmp.eq.s32.totalorder %s25, 0
    %p172 = por %p170, %p171
    %p173 = scmp.ne.s32.totalorder %s165, %s167
    %p174 = scmp.eq.s32.totalorder %s30, 3
    %p175 = por %p173, %p174
    %p176 = scmp.ne.s32.totalorder %s167, %s168
    %p177 = scmp.eq.s32.totalorder %s30, 0
    %p178 = por %p176, %p177
    %p179 = scmp.ne.s32.totalorder %s167, %s168
    %p180 = scmp.eq.s32.totalorder %s31, 3
    %p181 = por %p179, %p180
    %p183 = scmp.ne.s32.totalorder %s168, %s182
    %p184 = scmp.eq.s32.totalorder %s31, 0
    %p185 = por %p183, %p184
    %s187 = sadd.s32 %s186, 1
    %p190 = scmp.eq.s32.totalorder %s25, 3
    %p191 = scmp.ne.s32.totalorder %s186, %s188
    %p192 = scmp.eq.s32.totalorder %s25, 0
    %p193 = por %p191, %p192
    %p194 = scmp.ne.s32.totalorder %s186, %s188
    %p195 = scmp.eq.s32.totalorder %s30, 3
    %p196 = por %p194, %p195
    %p197 = scmp.ne.s32.totalorder %s188, %s189
    %p198 = scmp.eq.s32.totalorder %s30, 0
    %p199 = por %p197, %p198
    %p200 = scmp.ne.s32.totalorder %s188, %s189
    %p201 = scmp.eq.s32.totalorder %s31, 3
    %p202 = por %p200, %p201
    %p204 = scmp.ne.s32.totalorder %s189, %s203
    %p205 = scmp.eq.s32.totalorder %s31, 0
    %p206 = por %p204, %p205
    %s208 = sadd.s32 %s207, 1
    %p211 = scmp.eq.s32.totalorder %s25, 3
    %p212 = scmp.ne.s32.totalorder %s207, %s209
    %p213 = scmp.eq.s32.totalorder %s25, 0
    %p214 = por %p212, %p213
    %p215 = scmp.ne.s32.totalorder %s207, %s209
    %p216 = scmp.eq.s32.totalorder %s30, 3
    %p217 = por %p215, %p216
    %p218 = scmp.ne.s32.totalorder %s209, %s210
    %p219 = scmp.eq.s32.totalorder %s30, 0
    %p220 = por %p218, %p219
    %p221 = scmp.ne.s32.totalorder %s209, %s210
    %p222 = scmp.eq.s32.totalorder %s31, 3
    %p223 = por %p221, %p222
    %p225 = scmp.ne.s32.totalorder %s210, %s224
    %p226 = scmp.eq.s32.totalorder %s31, 0
    %p227 = por %p225, %p226
    %s229 = sadd.s32 %s228, 1
    %p232 = scmp.eq.s32.totalorder %s25, 3
    %p233 = scmp.ne.s32.totalorder %s228, %s230
    %p234 = scmp.eq.s32.totalorder %s25, 0
    %p235 = por %p233, %p234
    %p236 = scmp.ne.s32.totalorder %s228, %s230
    %p237 = scmp.eq.s32.totalorder %s30, 3
    %p238 = por %p236, %p237
    %p239 = scmp.ne.s32.totalorder %s230, %s231
    %p240 = scmp.eq.s32.totalorder %s30, 0
    %p241 = por %p239, %p240
    %p242 = scmp.ne.s32.totalorder %s230, %s231
    %p243 = scmp.eq.s32.totalorder %s31, 3
    %p244 = por %p242, %p243
    %p246 = scmp.ne.s32.totalorder %s231, %s245
    %p247 = scmp.eq.s32.totalorder %s31, 0
    %p248 = por %p246, %p247
    %s250 = sadd.s32 %s249, 1
    %p253 = scmp.eq.s32.totalorder %s25, 3
    %p254 = scmp.ne.s32.totalorder %s249, %s251
    %p255 = scmp.eq.s32.totalorder %s25, 0
    %p256 = por %p254, %p255
    %p257 = scmp.ne.s32.totalorder %s249, %s251
    %p258 = scmp.eq.s32.totalorder %s30, 3
    %p259 = por %p257, %p258
    %p260 = scmp.ne.s32.totalorder %s251, %s252
    %p261 = scmp.eq.s32.totalorder %s30, 0
    %p262 = por %p260, %p261
    %p263 = scmp.ne.s32.totalorder %s251, %s252
    %p264 = scmp.eq.s32.totalorder %s31, 3
    %p265 = por %p263, %p264
    %p267 = scmp.ne.s32.totalorder %s252, %s266
    %p268 = scmp.eq.s32.totalorder %s31, 0
    %p269 = por %p267, %p268
    %s271 = sadd.s32 %s270, 1
    %p274 = scmp.eq.s32.totalorder %s25, 3
    %p275 = scmp.ne.s32.totalorder %s270, %s272
    %p276 = scmp.eq.s32.totalorder %s25, 0
    %p277 = por %p275, %p276
    %p278 = scmp.ne.s32.totalorder %s270, %s272
    %p279 = scmp.eq.s32.totalorder %s30, 3
    %p280 = por %p278, %p279
    %p281 = scmp.ne.s32.totalorder %s272, %s273
    %p282 = scmp.eq.s32.totalorder %s30, 0
    %p283 = por %p281, %p282
    %p284 = scmp.ne.s32.totalorder %s272, %s273
    %p285 = scmp.eq.s32.totalorder %s31, 3
    %p286 = por %p284, %p285
    %p288 = scmp.ne.s32.totalorder %s273, %s287
    %p289 = scmp.eq.s32.totalorder %s31, 0
    %p290 = por %p288, %p289
    %s292 = sadd.s32 %s291, 1
    %p295 = scmp.eq.s32.totalorder %s25, 3
    %p296 = scmp.ne.s32.totalorder %s291, %s293
    %p297 = scmp.eq.s32.totalorder %s25, 0
    %p298 = por %p296, %p297
    %p299 = scmp.ne.s32.totalorder %s291, %s293
    %p300 = scmp.eq.s32.totalorder %s30, 3
    %p301 = por %p299, %p300
    %p302 = scmp.ne.s32.totalorder %s293, %s294
    %p303 = scmp.eq.s32.totalorder %s30, 0
    %p304 = por %p302, %p303
    %p305 = scmp.ne.s32.totalorder %s293, %s294
    %p306 = scmp.eq.s32.totalorder %s31, 3
    %p307 = por %p305, %p306
    %p309 = scmp.ne.s32.totalorder %s294, %s308
    %p310 = scmp.eq.s32.totalorder %s31, 0
    %p311 = por %p309, %p310
    %s313 = sadd.s32 %s312, 1
    %p316 = scmp.eq.s32.totalorder %s25, 3
    %p317 = scmp.ne.s32.totalorder %s312, %s314
    %p318 = scmp.eq.s32.totalorder %s25, 0
    %p319 = por %p317, %p318
    %p320 = scmp.ne.s32.totalorder %s312, %s314
    %p321 = scmp.eq.s32.totalorder %s30, 3
    %p322 = por %p320, %p321
    %p323 = scmp.ne.s32.totalorder %s314, %s315
    %p324 = scmp.eq.s32.totalorder %s30, 0
    %p325 = por %p323, %p324
    %p326 = scmp.ne.s32.totalorder %s314, %s315
    %p327 = scmp.eq.s32.totalorder %s31, 3
    %p328 = por %p326, %p327
    %p330 = scmp.ne.s32.totalorder %s315, %s329
    %p331 = scmp.eq.s32.totalorder %s31, 0
    %p332 = por %p330, %p331
    %s334 = sadd.s32 %s333, 1
    %p337 = scmp.eq.s32.totalorder %s25, 3
    %p338 = scmp.ne.s32.totalorder %s333, %s335
    %p339 = scmp.eq.s32.totalorder %s25, 0
    %p340 = por %p338, %p339
    %p341 = scmp.ne.s32.totalorder %s333, %s335
    %p342 = scmp.eq.s32.totalorder %s30, 3
    %p343 = por %p341, %p342
    %p344 = scmp.ne.s32.totalorder %s335, %s336
    %p345 = scmp.eq.s32.totalorder %s30, 0
    %p346 = por %p344, %p345
    %p347 = scmp.ne.s32.totalorder %s335, %s336
    %p348 = scmp.eq.s32.totalorder %s31, 3
    %p349 = por %p347, %p348
    %p351 = scmp.ne.s32.totalorder %s336, %s350
    %p352 = scmp.eq.s32.totalorder %s31, 0
    %p353 = por %p351, %p352
    %s355 = sadd.s32 %s354, 1
    %p358 = scmp.eq.s32.totalorder %s25, 3
    %p359 = scmp.ne.s32.totalorder %s354, %s356
    %p360 = scmp.eq.s32.totalorder %s25, 0
    %p361 = por %p359, %p360
    %p362 = scmp.ne.s32.totalorder %s354, %s356
    %p363 = scmp.eq.s32.totalorder %s30, 3
    %p364 = por %p362, %p363
    %p365 = scmp.ne.s32.totalorder %s356, %s357
    %p366 = scmp.eq.s32.totalorder %s30, 0
    %p367 = por %p365, %p366
    %p368 = scmp.ne.s32.totalorder %s356, %s357
    %p369 = scmp.eq.s32.totalorder %s31, 3
    %p370 = por %p368, %p369
    %p372 = scmp.ne.s32.totalorder %s357, %s371
    %p373 = scmp.eq.s32.totalorder %s31, 0
    %p374 = por %p372, %p373
    %s376 = sadd.s32 %s375, 1
    %p379 = scmp.eq.s32.totalorder %s25, 3
    %p380 = scmp.ne.s32.totalorder %s375, %s377
    %p381 = scmp.eq.s32.totalorder %s25, 0
    %p382 = por %p380, %p381
    %p383 = scmp.ne.s32.totalorder %s375, %s377
    %p384 = scmp.eq.s32.totalorder %s30, 3
    %p385 = por %p383, %p384
    %p386 = scmp.ne.s32.totalorder %s377, %s378
    %p387 = scmp.eq.s32.totalorder %s30, 0
    %p388 = por %p386, %p387
    %p389 = scmp.ne.s32.totalorder %s377, %s378
    %p390 = scmp.eq.s32.totalorder %s31, 3
    %p391 = por %p389, %p390
    %p393 = scmp.ne.s32.totalorder %s378, %s392
    %p394 = scmp.eq.s32.totalorder %s31, 0
    %p395 = por %p393, %p394
    %s397 = sadd.s32 %s396, 1
    %p400 = scmp.eq.s32.totalorder %s25, 3
    %p401 = scmp.ne.s32.totalorder %s396, %s398
    %p402 = scmp.eq.s32.totalorder %s25, 0
    %p403 = por %p401, %p402
    %p404 = scmp.ne.s32.totalorder %s396, %s398
    %p405 = scmp.eq.s32.totalorder %s30, 3
    %p406 = por %p404, %p405
    %p407 = scmp.ne.s32.totalorder %s398, %s399
    %p408 = scmp.eq.s32.totalorder %s30, 0
    %p409 = por %p407, %p408
    %p410 = scmp.ne.s32.totalorder %s398, %s399
    %p411 = scmp.eq.s32.totalorder %s31, 3
    %p412 = por %p410, %p411
    %p414 = scmp.ne.s32.totalorder %s399, %s413
    %p415 = scmp.eq.s32.totalorder %s31, 0
    %p416 = por %p414, %p415
    %s418 = sadd.s32 %s417, 1
    %p421 = scmp.eq.s32.totalorder %s25, 3
    %p422 = scmp.ne.s32.totalorder %s417, %s419
    %p423 = scmp.eq.s32.totalorder %s25, 0
    %p424 = por %p422, %p423
    %p425 = scmp.ne.s32.totalorder %s417, %s419
    %p426 = scmp.eq.s32.totalorder %s30, 3
    %p427 = por %p425, %p426
    %p428 = scmp.ne.s32.totalorder %s419, %s420
    %p429 = scmp.eq.s32.totalorder %s30, 0
    %p430 = por %p428, %p429
    %p431 = scmp.ne.s32.totalorder %s419, %s420
    %p432 = scmp.eq.s32.totalorder %s31, 3
    %p433 = por %p431, %p432
    %p435 = scmp.ne.s32.totalorder %s420, %s434
    %p436 = scmp.eq.s32.totalorder %s31, 0
    %p437 = por %p435, %p436
    %s439 = sadd.s32 %s438, 1
    %p442 = scmp.eq.s32.totalorder %s25, 3
    %p443 = scmp.ne.s32.totalorder %s438, %s440
    %p444 = scmp.eq.s32.totalorder %s25, 0
    %p445 = por %p443, %p444
    %p446 = scmp.ne.s32.totalorder %s438, %s440
    %p447 = scmp.eq.s32.totalorder %s30, 3
    %p448 = por %p446, %p447
    %p449 = scmp.ne.s32.totalorder %s440, %s441
    %p450 = scmp.eq.s32.totalorder %s30, 0
    %p451 = por %p449, %p450
    %p452 = scmp.ne.s32.totalorder %s440, %s441
    %p453 = scmp.eq.s32.totalorder %s31, 3
    %p454 = por %p452, %p453
    %p456 = scmp.ne.s32.totalorder %s441, %s455
    %p457 = scmp.eq.s32.totalorder %s31, 0
    %p458 = por %p456, %p457
    %s459 = ssub.s32 %s32, %s44
    %p460 = scmp.eq.s32.totalorder %s459, 0
    %s462 = sadd.s32 %s461, 1
    %s463 = scalar_select %p460, %s461, %s462
    %p466 = pneg %p460
    %p467 = scmp.eq.s32.totalorder %s25, 3
    %p468 = por %p466, %p467
    %p469 = scmp.ne.s32.totalorder %s461, %s464
    %p470 = scmp.eq.s32.totalorder %s25, 0
    %p471 = por %p469, %p470
    %p472 = scmp.ne.s32.totalorder %s461, %s464
    %p473 = scmp.eq.s32.totalorder %s30, 3
    %p474 = por %p472, %p473
    %p475 = scmp.ne.s32.totalorder %s464, %s465
    %p476 = scmp.eq.s32.totalorder %s30, 0
    %p477 = por %p475, %p476
    %p478 = scmp.ne.s32.totalorder %s464, %s465
    %p479 = scmp.eq.s32.totalorder %s31, 3
    %p480 = por %p478, %p479
    %p482 = scmp.ne.s32.totalorder %s465, %s481
    %p483 = scmp.eq.s32.totalorder %s31, 0
    %p484 = por %p482, %p483
    %p485 = scmp.le.s32.totalorder 1, %s25
    %p486 = scmp.lt.s32.totalorder %s25, 5
    %p487 = pnand %p485, %p486
    %p488 = pneg %p487
    // Predicated region
    $region9: #{time_sasrec_forward.2} parent=5 // pred_check
      _
    $region10: #{time_sasrec_forward.2} parent=5 // pred_check_branch
      %490 = sbr.rel (%p487) target = $region12
    $region11: #{time_sasrec_forward.2} parent=5 // pred_region
      %s491 = ssub.s32 %s25, 1
      // Predicated region
      $region13: #{time_sasrec_forward.2} parent=11 // pred_check
        %p492 = pneg %p110
      $region14: #{time_sasrec_forward.2} parent=11 // pred_check_branch
        %494 = sbr.rel (%p492) target = $region16
      $region15: #{time_sasrec_forward.2} parent=11 // pred_region
        _
      $region16: #{time_sasrec_forward.2} parent=11 // pred_fallthru
        _
      // Predicated region
      $region17: #{time_sasrec_forward.2} parent=11 // pred_check
        %p495 = pneg %p157
      $region18: #{time_sasrec_forward.2} parent=11 // pred_check_branch
        %497 = sbr.rel (%p495) target = $region20
      $region19: #{time_sasrec_forward.2} parent=11 // pred_region
        _
      $region20: #{time_sasrec_forward.2} parent=11 // pred_fallthru
        _
      // Predicated region
      $region21: #{time_sasrec_forward.2} parent=11 // pred_check
        %p498 = pneg %p178
      $region22: #{time_sasrec_forward.2} parent=11 // pred_check_branch
        %500 = sbr.rel (%p498) target = $region24
      $region23: #{time_sasrec_forward.2} parent=11 // pred_region
        _
      $region24: #{time_sasrec_forward.2} parent=11 // pred_fallthru
        _
      // Predicated region
      $region25: #{time_sasrec_forward.2} parent=11 // pred_check
        %p501 = pneg %p199
      $region26: #{time_sasrec_forward.2} parent=11 // pred_check_branch
        %503 = sbr.rel (%p501) target = $region28
      $region27: #{time_sasrec_forward.2} parent=11 // pred_region
        _
      $region28: #{time_sasrec_forward.2} parent=11 // pred_fallthru
        _
      // Predicated region
      $region29: #{time_sasrec_forward.2} parent=11 // pred_check
        %p504 = pneg %p220
      $region30: #{time_sasrec_forward.2} parent=11 // pred_check_branch
        %506 = sbr.rel (%p504) target = $region32
      $region31: #{time_sasrec_forward.2} parent=11 // pred_region
        _
      $region32: #{time_sasrec_forward.2} parent=11 // pred_fallthru
        _
      // Predicated region
      $region33: #{time_sasrec_forward.2} parent=11 // pred_check
        %p507 = pneg %p241
      $region34: #{time_sasrec_forward.2} parent=11 // pred_check_branch
        %509 = sbr.rel (%p507) target = $region36
      $region35: #{time_sasrec_forward.2} parent=11 // pred_region
        _
      $region36: #{time_sasrec_forward.2} parent=11 // pred_fallthru
        _
      // Predicated region
      $region37: #{time_sasrec_forward.2} parent=11 // pred_check
        %p510 = pneg %p262
      $region38: #{time_sasrec_forward.2} parent=11 // pred_check_branch
        %512 = sbr.rel (%p510) target = $region40
      $region39: #{time_sasrec_forward.2} parent=11 // pred_region
        _
      $region40: #{time_sasrec_forward.2} parent=11 // pred_fallthru
        _
      // Predicated region
      $region41: #{time_sasrec_forward.2} parent=11 // pred_check
        %p513 = pneg %p283
      $region42: #{time_sasrec_forward.2} parent=11 // pred_check_branch
        %515 = sbr.rel (%p513) target = $region44
      $region43: #{time_sasrec_forward.2} parent=11 // pred_region
        _
      $region44: #{time_sasrec_forward.2} parent=11 // pred_fallthru
        _
      // Predicated region
      $region45: #{time_sasrec_forward.2} parent=11 // pred_check
        %p516 = pneg %p304
      $region46: #{time_sasrec_forward.2} parent=11 // pred_check_branch
        %518 = sbr.rel (%p516) target = $region48
      $region47: #{time_sasrec_forward.2} parent=11 // pred_region
        _
      $region48: #{time_sasrec_forward.2} parent=11 // pred_fallthru
        _
      // Predicated region
      $region49: #{time_sasrec_forward.2} parent=11 // pred_check
        %p519 = pneg %p325
      $region50: #{time_sasrec_forward.2} parent=11 // pred_check_branch
        %521 = sbr.rel (%p519) target = $region52
      $region51: #{time_sasrec_forward.2} parent=11 // pred_region
        _
      $region52: #{time_sasrec_forward.2} parent=11 // pred_fallthru
        _
      // Predicated region
      $region53: #{time_sasrec_forward.2} parent=11 // pred_check
        %p522 = pneg %p346
      $region54: #{time_sasrec_forward.2} parent=11 // pred_check_branch
        %524 = sbr.rel (%p522) target = $region56
      $region55: #{time_sasrec_forward.2} parent=11 // pred_region
        _
      $region56: #{time_sasrec_forward.2} parent=11 // pred_fallthru
        _
      // Predicated region
      $region57: #{time_sasrec_forward.2} parent=11 // pred_check
        %p525 = pneg %p367
      $region58: #{time_sasrec_forward.2} parent=11 // pred_check_branch
        %527 = sbr.rel (%p525) target = $region60
      $region59: #{time_sasrec_forward.2} parent=11 // pred_region
        _
      $region60: #{time_sasrec_forward.2} parent=11 // pred_fallthru
        _
      // Predicated region
      $region61: #{time_sasrec_forward.2} parent=11 // pred_check
        %p528 = pneg %p388
      $region62: #{time_sasrec_forward.2} parent=11 // pred_check_branch
        %530 = sbr.rel (%p528) target = $region64
      $region63: #{time_sasrec_forward.2} parent=11 // pred_region
        _
      $region64: #{time_sasrec_forward.2} parent=11 // pred_fallthru
        _
      // Predicated region
      $region65: #{time_sasrec_forward.2} parent=11 // pred_check
        %p531 = pneg %p409
      $region66: #{time_sasrec_forward.2} parent=11 // pred_check_branch
        %533 = sbr.rel (%p531) target = $region68
      $region67: #{time_sasrec_forward.2} parent=11 // pred_region
        _
      $region68: #{time_sasrec_forward.2} parent=11 // pred_fallthru
        _
      // Predicated region
      $region69: #{time_sasrec_forward.2} parent=11 // pred_check
        %p534 = pneg %p430
      $region70: #{time_sasrec_forward.2} parent=11 // pred_check_branch
        %536 = sbr.rel (%p534) target = $region72
      $region71: #{time_sasrec_forward.2} parent=11 // pred_region
        _
      $region72: #{time_sasrec_forward.2} parent=11 // pred_fallthru
        _
      // Predicated region
      $region73: #{time_sasrec_forward.2} parent=11 // pred_check
        %p537 = pneg %p451
      $region74: #{time_sasrec_forward.2} parent=11 // pred_check_branch
        %539 = sbr.rel (%p537) target = $region76
      $region75: #{time_sasrec_forward.2} parent=11 // pred_region
        _
      $region76: #{time_sasrec_forward.2} parent=11 // pred_fallthru
        _
    $region12: #{time_sasrec_forward.2} parent=5 // pred_fallthru
      _
    %p540 = scmp.lt.s32.totalorder %s25, 4
    // Predicated region
    $region77: #{time_sasrec_forward.2} parent=5 // pred_check
      %p541 = pneg %p540
    $region78: #{time_sasrec_forward.2} parent=5 // pred_check_branch
      %543 = sbr.rel (%p541) target = $region80
    $region79: #{time_sasrec_forward.2} parent=5 // pred_region
      // Predicated region
      $region81: #{time_sasrec_forward.2} parent=79 // pred_check
        %p544 = pneg %p57
      $region82: #{time_sasrec_forward.2} parent=79 // pred_check_branch
        %546 = sbr.rel (%p544) target = $region84
      $region83: #{time_sasrec_forward.2} parent=79 // pred_region
        %s547 = smul.u32 8, %s32
        %p548 = scmp.lt.s32.totalorder %s547, 15
        %s549 = scalar_select %p548, %s547, 15
        %s550 = smul.addr %s549, 8
        %s551 = scalar_lea.vmem %s0, %s550
        %s552 = smul.u32 8, %s32
      $region84: #{time_sasrec_forward.2} parent=79 // pred_fallthru
        _
      // Predicated region
      $region85: #{time_sasrec_forward.2} parent=79 // pred_check
        %p553 = pneg %p83
      $region86: #{time_sasrec_forward.2} parent=79 // pred_check_branch
        %555 = sbr.rel (%p553) target = $region88
      $region87: #{time_sasrec_forward.2} parent=79 // pred_region
        %s556 = smul.u32 8, %s32
        %p557 = scmp.lt.s32.totalorder %s556, 15
        %s558 = scalar_select %p557, %s556, 15
        %s559 = scalar_lea.vmem %s1, %s558
        %s560 = smul.u32 8, %s32
      $region88: #{time_sasrec_forward.2} parent=79 // pred_fallthru
        _
      // Predicated region
      $region89: #{time_sasrec_forward.2} parent=79 // pred_check
        %p561 = pneg %p130
      $region90: #{time_sasrec_forward.2} parent=79 // pred_check_branch
        %563 = sbr.rel (%p561) target = $region92
      $region91: #{time_sasrec_forward.2} parent=79 // pred_region
        %s564 = smul.u32 8, %s32
        %p565 = scmp.lt.s32.totalorder %s564, 15
        %s566 = scalar_select %p565, %s564, 15
        %s567 = scalar_lea.vmem %s3, %s566
        %s568 = smul.u32 8, %s32
      $region92: #{time_sasrec_forward.2} parent=79 // pred_fallthru
        _
    $region80: #{time_sasrec_forward.2} parent=5 // pred_fallthru
      _
    %p569 = scmp.le.s32.totalorder 1, %s25
    %p570 = scmp.lt.s32.totalorder %s25, 5
    %p571 = pnand %p569, %p570
    %p572 = pneg %p571
    // Predicated region
    $region93: #{time_sasrec_forward.2} parent=5 // pred_check
      _
    $region94: #{time_sasrec_forward.2} parent=5 // pred_check_branch
      %574 = sbr.rel (%p571) target = $region96
    $region95: #{time_sasrec_forward.2} parent=5 // pred_region
      %s575 = ssub.s32 %s25, 1
      %s576 = smul.u32 8, %s34
      %p577 = scmp.lt.s32.totalorder %s576, 15
      %s578 = scalar_select %p577, %s576, 15
      %s579 = smul.addr %s578, 8
      %s580 = scalar_lea.vmem %s0, %s579
      %p581 = pneg %p63
      %p582 = pneg %p60
      %s583 = smul.u32 8, %s34
      %p584 = scmp.lt.s32.totalorder %s583, 15
      %s585 = scalar_select %p584, %s583, 15
      %s586 = scalar_lea.vmem %s1, %s585
      %p587 = pneg %p89
      %p588 = pneg %p86
      %p589 = pneg %p110
      %p590 = pneg %p107
      %s591 = smul.u32 8, %s34
      %p592 = scmp.lt.s32.totalorder %s591, 15
      %s593 = scalar_select %p592, %s591, 15
      %s594 = scalar_lea.vmem %s3, %s593
      %p595 = pneg %p136
      %p596 = pneg %p133
      %p597 = pneg %p157
      %p598 = pneg %p154
      %p599 = pneg %p178
      %p600 = pneg %p175
      %p601 = pneg %p199
      %p602 = pneg %p196
      %p603 = pneg %p220
      %p604 = pneg %p217
      %p605 = pneg %p241
      %p606 = pneg %p238
      %p607 = pneg %p262
      %p608 = pneg %p259
      %p609 = pneg %p283
      %p610 = pneg %p280
      %p611 = pneg %p304
      %p612 = pneg %p301
      %p613 = pneg %p325
      %p614 = pneg %p322
      %p615 = pneg %p346
      %p616 = pneg %p343
      %p617 = pneg %p367
      %p618 = pneg %p364
      %p619 = pneg %p388
      %p620 = pneg %p385
      %p621 = pneg %p409
      %p622 = pneg %p406
      %p623 = pneg %p430
      %p624 = pneg %p427
      %p625 = pneg %p451
      %p626 = pneg %p448
      %p627 = pneg %p477
      %p628 = pneg %p474
      %s629 = smul.u32 8, %s34
      %p630 = scmp.lt.s32.totalorder %s629, 15
      %s631 = scalar_select %p630, %s629, 15
      %s632 = scalar_lea.vmem %s19, %s631
      %s633 = smul.u32 8, %s34
      %p634 = scmp.lt.s32.totalorder %s633, 15
      %s635 = scalar_select %p634, %s633, 15
      %s636 = smul.addr %s635, 8
      %s637 = scalar_lea.vmem %s0, %s636
      %s638 = smul.u32 8, %s34
      %s639 = smul.u32 8, %s34
      %p640 = scmp.lt.s32.totalorder %s639, 15
      %s641 = scalar_select %p640, %s639, 15
      %s642 = scalar_lea.vmem %s1, %s641
      %s643 = smul.u32 8, %s34
      %s644 = smul.u32 8, %s34
      %p645 = scmp.lt.s32.totalorder %s644, 15
      %s646 = scalar_select %p645, %s644, 15
      %s647 = scalar_lea.vmem %s3, %s646
      %s648 = smul.u32 8, %s34
      %s649 = smul.u32 8, %s34
      %p650 = scmp.lt.s32.totalorder %s649, 15
      %s651 = scalar_select %p650, %s649, 15
      %s652 = scalar_lea.vmem %s19, %s651
      %s653 = smul.u32 8, %s34
      %p655 = scmp.eq.s32.totalorder %s35, 0
      // Predicated region
      $region97: #{time_sasrec_forward.2} parent=95 // pred_check
        %p656 = pneg %p655
      $region98: #{time_sasrec_forward.2} parent=95 // pred_check_branch
        %658 = sbr.rel (%p656) target = $region100
      $region99: #{time_sasrec_forward.2} parent=95 // pred_region
        %v659 = vld [vmem:[%s637] sm:$0xff]
        %v660 = vld [vmem:[%s637 + $0x8] sm:$0xff]
        %v661 = vld [vmem:[%s637 + $0x10] sm:$0xff]
        %v662 = vld [vmem:[%s637 + $0x18] sm:$0xff]
        %v663 = vld [vmem:[%s637 + $0x20] sm:$0xff]
        %v664 = vld [vmem:[%s637 + $0x28] sm:$0xff]
        %v665 = vld [vmem:[%s637 + $0x30] sm:$0xff]
        %v666 = vld [vmem:[%s637 + $0x38] sm:$0xff]
        %v667 = vld [vmem:[%s642] sm:$0x1]
        %v668 = vld [vmem:[%s642 + $0x1] sm:$0x1]
        %v669 = vld [vmem:[%s642 + $0x2] sm:$0x1]
        %v670 = vld [vmem:[%s642 + $0x3] sm:$0x1]
        %v671 = vld [vmem:[%s642 + $0x4] sm:$0x1]
        %v672 = vld [vmem:[%s642 + $0x5] sm:$0x1]
        %v673 = vld [vmem:[%s642 + $0x6] sm:$0x1]
        %v674 = vld [vmem:[%s642 + $0x7] sm:$0x1]
        %v675 = vpack.c.bf16 %v660, %v659
        %v676 = vpack.c.bf16 %v662, %v661
        %v677 = vpack.c.bf16 %v664, %v663
        %v678 = vpack.c.bf16 %v666, %v665
        %v679 = vld [vmem:[%s4] sm:$0xf]
        %v680 = vld [vmem:[%s4 + $0x4] sm:$0xf]
        %v681 = vld [vmem:[%s4 + $0x8] sm:$0xf]
        %v682 = vld [vmem:[%s4 + $0xc] sm:$0xf]
        %v683 = vld [vmem:[%s4 + $0x10] sm:$0xf]
        %v684 = vld [vmem:[%s4 + $0x14] sm:$0xf]
        %v685 = vld [vmem:[%s4 + $0x18] sm:$0xf]
        %v686 = vld [vmem:[%s4 + $0x1c] sm:$0xf]
        %v695 = vunpack.c.l.b16 %v679
        %v696 = vunpack.c.l.b16 %v680
        %v697 = vunpack.c.l.b16 %v681
        %v698 = vunpack.c.l.b16 %v682
        %v699 = vunpack.c.l.b16 %v683
        %v700 = vunpack.c.l.b16 %v684
        %v701 = vunpack.c.l.b16 %v685
        %v702 = vunpack.c.l.b16 %v686
        %v703 = vpack.c.b16 %v696, %v695
        %v704 = vpack.c.b16 %v698, %v697
        %v705 = vpack.c.b16 %v700, %v699
        %v706 = vpack.c.b16 %v702, %v701
        %vm711 = vcmask 523264
        %v713 = vsel %vm711, %v675, 0
        %v716 = vsel %vm711, %v676, 0
        %v719 = vsel %vm711, %v677, 0
        %v722 = vsel %vm711, %v678, 0
        %724 = vmatpush.bf16.msra.mxu0 0
        %725 = vmatpush.bf16.msra.mxu0 0
        %726 = vmatpush.bf16.msra.mxu0 0
        %727 = vmatpush.bf16.msra.mxu0 0
        %728 = vmatpush.bf16.msra.mxu0 %v706
        %729 = vmatpush.bf16.msra.mxu0 %v705
        %730 = vmatpush.bf16.msra.mxu0 %v704
        %731 = vmatpush.bf16.msra.mxu0 %v703
        %732 = vmatmul.bf16.gmra.mxu0 %v713
        %v733 = vpop.f32.mrf.mxu0
        %v734 = vadd.f32 0.0, %v733
        %v735 = vpop.f32.mrf.mxu0
        %v736 = vadd.f32 0.0, %v735
        %737 = vmatmul.bf16.gmra.mxu0 %v716
        %v738 = vpop.f32.mrf.mxu0
        %v739 = vadd.f32 0.0, %v738
        %v740 = vpop.f32.mrf.mxu0
        %v741 = vadd.f32 0.0, %v740
        %742 = vmatmul.bf16.gmra.mxu0 %v719
        %v743 = vpop.f32.mrf.mxu0
        %v744 = vadd.f32 0.0, %v743
        %v745 = vpop.f32.mrf.mxu0
        %v746 = vadd.f32 0.0, %v745
        %747 = vmatmul.bf16.gmra.mxu0 %v722
        %v748 = vpop.f32.mrf.mxu0
        %v749 = vadd.f32 0.0, %v748
        %v750 = vpop.f32.mrf.mxu0
        %v751 = vadd.f32 0.0, %v750
        %752 = vdwg.mxu0
        %v753 = vpack.c.bf16 %v667, %v667
        %v754 = vpack.c.bf16 %v668, %v668
        %v755 = vpack.c.bf16 %v669, %v669
        %v756 = vpack.c.bf16 %v670, %v670
        %v757 = vpack.c.bf16 %v671, %v671
        %v758 = vpack.c.bf16 %v672, %v672
        %v759 = vpack.c.bf16 %v673, %v673
        %v760 = vpack.c.bf16 %v674, %v674
        %v761 = vld [vmem:[%s5] sm:$0xf]
        %v762 = vld [vmem:[%s5 + $0x4] sm:$0xf]
        %v763 = vld [vmem:[%s5 + $0x8] sm:$0xf]
        %v764 = vld [vmem:[%s5 + $0xc] sm:$0xf]
        %v765 = vld [vmem:[%s5 + $0x10] sm:$0xf]
        %v766 = vld [vmem:[%s5 + $0x14] sm:$0xf]
        %v767 = vld [vmem:[%s5 + $0x18] sm:$0xf]
        %v768 = vld [vmem:[%s5 + $0x1c] sm:$0xf]
        %v777 = vunpack.c.l.b16 %v753
        %v778 = vunpack.c.l.b16 %v754
        %v779 = vunpack.c.l.b16 %v755
        %v780 = vunpack.c.l.b16 %v756
        %v781 = vunpack.c.l.b16 %v757
        %v782 = vunpack.c.l.b16 %v758
        %v783 = vunpack.c.l.b16 %v759
        %v784 = vunpack.c.l.b16 %v760
        %v785 = vrot.slane %v778, 7
        %vm786 = vcmask 1041409
        %v787 = vsel %vm786, %v785, %v777
        %v788 = vrot.slane %v779, 6
        %vm789 = vcmask 1042434
        %v790 = vsel %vm789, %v788, %v787
        %v791 = vrot.slane %v780, 5
        %vm792 = vcmask 1043459
        %v793 = vsel %vm792, %v791, %v790
        %v794 = vrot.slane %v781, 4
        %vm795 = vcmask 1044484
        %v796 = vsel %vm795, %v794, %v793
        %v797 = vrot.slane %v782, 3
        %vm798 = vcmask 1045509
        %v799 = vsel %vm798, %v797, %v796
        %v800 = vrot.slane %v783, 2
        %vm801 = vcmask 1046534
        %v802 = vsel %vm801, %v800, %v799
        %v803 = vrot.slane %v784, 1
        %vm804 = vcmask 1047559
        %v805 = vsel %vm804, %v803, %v802
        %v806 = vpack.c.b16 %v805, %v805
        %v815 = vunpack.c.l.b16 %v761
        %v816 = vunpack.c.l.b16 %v762
        %v817 = vunpack.c.l.b16 %v763
        %v818 = vunpack.c.l.b16 %v764
        %v819 = vunpack.c.l.b16 %v765
        %v820 = vunpack.c.l.b16 %v766
        %v821 = vunpack.c.l.b16 %v767
        %v822 = vunpack.c.l.b16 %v768
        %v823 = vpack.c.b16 %v816, %v815
        %v824 = vpack.c.b16 %v818, %v817
        %v825 = vpack.c.b16 %v820, %v819
        %v826 = vpack.c.b16 %v822, %v821
        %v832 = vsel %vm711, %v806, 0
        %834 = vmatpush.bf16.msra.mxu0 0
        %835 = vmatpush.bf16.msra.mxu0 0
        %836 = vmatpush.bf16.msra.mxu0 0
        %837 = vmatpush.bf16.msra.mxu0 0
        %838 = vmatpush.bf16.msra.mxu0 %v826
        %839 = vmatpush.bf16.msra.mxu0 %v825
        %840 = vmatpush.bf16.msra.mxu0 %v824
        %841 = vmatpush.bf16.msra.mxu0 %v823
        %842 = vmatmul.bf16.gmra.mxu0 %v832
        %v843 = vpop.f32.mrf.mxu0
        %v844 = vadd.f32 0.0, %v843
        %v845 = vpop.f32.mrf.mxu0
        %846 = vdwg.mxu0
        %v848 = vrot.slane %v844, 1
        %v849 = vrot.slane %v844, 2
        %v850 = vrot.slane %v844, 3
        %v851 = vrot.slane %v844, 4
        %v852 = vrot.slane %v844, 5
        %v853 = vrot.slane %v844, 6
        %v854 = vrot.slane %v844, 7
        %v855 = vperm.slane %v844, 0
        %v856 = vperm.slane %v848, 0
        %v857 = vperm.slane %v849, 0
        %v858 = vperm.slane %v850, 0
        %v859 = vperm.slane %v851, 0
        %v860 = vperm.slane %v852, 0
        %v861 = vperm.slane %v853, 0
        %v862 = vperm.slane %v854, 0
        %v871 = vadd.f32 %v734, %v855
        %v872 = vadd.f32 %v736, %v856
        %v873 = vadd.f32 %v739, %v857
        %v874 = vadd.f32 %v741, %v858
        %v875 = vadd.f32 %v744, %v859
        %v876 = vadd.f32 %v746, %v860
        %v877 = vadd.f32 %v749, %v861
        %v878 = vadd.f32 %v751, %v862
        %v879 = vld [vmem:[%s6] sm:$0x1]
        %v881 = vperm.slane %v879, 0
        %v883 = vadd.f32 %v871, %v881
        %v884 = vadd.f32 %v872, %v881
        %v885 = vadd.f32 %v873, %v881
        %v886 = vadd.f32 %v874, %v881
        %v887 = vadd.f32 %v875, %v881
        %v888 = vadd.f32 %v876, %v881
        %v889 = vadd.f32 %v877, %v881
        %v890 = vadd.f32 %v878, %v881
        %v891 = vxor.u32 %v883, 2147483648
        %v892 = vxor.u32 %v884, 2147483648
        %v893 = vxor.u32 %v885, 2147483648
        %v894 = vxor.u32 %v886, 2147483648
        %v895 = vxor.u32 %v887, 2147483648
        %v896 = vxor.u32 %v888, 2147483648
        %v897 = vxor.u32 %v889, 2147483648
        %v898 = vxor.u32 %v890, 2147483648
        %v899 = vmul.f32 %v891, 1.442695
        %v900 = vpow.pop %v899
        %v901 = vmul.f32 %v892, 1.442695
        %v902 = vpow.pop %v901
        %v903 = vmul.f32 %v893, 1.442695
        %v904 = vpow.pop %v903
        %v905 = vmul.f32 %v894, 1.442695
        %v906 = vpow.pop %v905
        %v907 = vmul.f32 %v895, 1.442695
        %v908 = vpow.pop %v907
        %v909 = vmul.f32 %v896, 1.442695
        %v910 = vpow.pop %v909
        %v911 = vmul.f32 %v897, 1.442695
        %v912 = vpow.pop %v911
        %v913 = vmul.f32 %v898, 1.442695
        %v914 = vpow.pop %v913
        %v915 = vadd.f32 %v900, 1.0
        %v916 = vadd.f32 %v902, 1.0
        %v917 = vadd.f32 %v904, 1.0
        %v918 = vadd.f32 %v906, 1.0
        %v919 = vadd.f32 %v908, 1.0
        %v920 = vadd.f32 %v910, 1.0
        %v921 = vadd.f32 %v912, 1.0
        %v922 = vadd.f32 %v914, 1.0
        %v923 = vrcp.pop %v915
        %v924 = vmul.f32 %v915, %v923
        %v925 = vsub.f32 1.0, %v924
        %v926 = vmul.f32 %v923, %v925
        %v927 = vadd.f32 %v923, %v926
        %vm928 = vweird.f32 %v915
        %vm929 = vweird.f32 %v923
        %vm930 = vmor %vm928, %vm929
        %v931 = vsel %vm930, %v923, %v927
        %v932 = vand.u32 2147483647, %v915
        %vm933 = vcmp.eq.f32.partialorder %v932, 8.507059e+37
        %v934 = vand.u32 %v915, 2147483648
        %v935 = vor.u32 1.1754944e-38, %v934
        %v936 = vsel %vm933, %v935, %v931
        %v937 = vmul.f32 1.0, %v936
        %v938 = vrcp.pop %v916
        %v939 = vmul.f32 %v916, %v938
        %v940 = vsub.f32 1.0, %v939
        %v941 = vmul.f32 %v938, %v940
        %v942 = vadd.f32 %v938, %v941
        %vm943 = vweird.f32 %v916
        %vm944 = vweird.f32 %v938
        %vm945 = vmor %vm943, %vm944
        %v946 = vsel %vm945, %v938, %v942
        %v947 = vand.u32 2147483647, %v916
        %vm948 = vcmp.eq.f32.partialorder %v947, 8.507059e+37
        %v949 = vand.u32 %v916, 2147483648
        %v950 = vor.u32 1.1754944e-38, %v949
        %v951 = vsel %vm948, %v950, %v946
        %v952 = vmul.f32 1.0, %v951
        %v953 = vrcp.pop %v917
        %v954 = vmul.f32 %v917, %v953
        %v955 = vsub.f32 1.0, %v954
        %v956 = vmul.f32 %v953, %v955
        %v957 = vadd.f32 %v953, %v956
        %vm958 = vweird.f32 %v917
        %vm959 = vweird.f32 %v953
        %vm960 = vmor %vm958, %vm959
        %v961 = vsel %vm960, %v953, %v957
        %v962 = vand.u32 2147483647, %v917
        %vm963 = vcmp.eq.f32.partialorder %v962, 8.507059e+37
        %v964 = vand.u32 %v917, 2147483648
        %v965 = vor.u32 1.1754944e-38, %v964
        %v966 = vsel %vm963, %v965, %v961
        %v967 = vmul.f32 1.0, %v966
        %v968 = vrcp.pop %v918
        %v969 = vmul.f32 %v918, %v968
        %v970 = vsub.f32 1.0, %v969
        %v971 = vmul.f32 %v968, %v970
        %v972 = vadd.f32 %v968, %v971
        %vm973 = vweird.f32 %v918
        %vm974 = vweird.f32 %v968
        %vm975 = vmor %vm973, %vm974
        %v976 = vsel %vm975, %v968, %v972
        %v977 = vand.u32 2147483647, %v918
        %vm978 = vcmp.eq.f32.partialorder %v977, 8.507059e+37
        %v979 = vand.u32 %v918, 2147483648
        %v980 = vor.u32 1.1754944e-38, %v979
        %v981 = vsel %vm978, %v980, %v976
        %v982 = vmul.f32 1.0, %v981
        %v983 = vrcp.pop %v919
        %v984 = vmul.f32 %v919, %v983
        %v985 = vsub.f32 1.0, %v984
        %v986 = vmul.f32 %v983, %v985
        %v987 = vadd.f32 %v983, %v986
        %vm988 = vweird.f32 %v919
        %vm989 = vweird.f32 %v983
        %vm990 = vmor %vm988, %vm989
        %v991 = vsel %vm990, %v983, %v987
        %v992 = vand.u32 2147483647, %v919
        %vm993 = vcmp.eq.f32.partialorder %v992, 8.507059e+37
        %v994 = vand.u32 %v919, 2147483648
        %v995 = vor.u32 1.1754944e-38, %v994
        %v996 = vsel %vm993, %v995, %v991
        %v997 = vmul.f32 1.0, %v996
        %v998 = vrcp.pop %v920
        %v999 = vmul.f32 %v920, %v998
        %v1000 = vsub.f32 1.0, %v999
        %v1001 = vmul.f32 %v998, %v1000
        %v1002 = vadd.f32 %v998, %v1001
        %vm1003 = vweird.f32 %v920
        %vm1004 = vweird.f32 %v998
        %vm1005 = vmor %vm1003, %vm1004
        %v1006 = vsel %vm1005, %v998, %v1002
        %v1007 = vand.u32 2147483647, %v920
        %vm1008 = vcmp.eq.f32.partialorder %v1007, 8.507059e+37
        %v1009 = vand.u32 %v920, 2147483648
        %v1010 = vor.u32 1.1754944e-38, %v1009
        %v1011 = vsel %vm1008, %v1010, %v1006
        %v1012 = vmul.f32 1.0, %v1011
        %v1013 = vrcp.pop %v921
        %v1014 = vmul.f32 %v921, %v1013
        %v1015 = vsub.f32 1.0, %v1014
        %v1016 = vmul.f32 %v1013, %v1015
        %v1017 = vadd.f32 %v1013, %v1016
        %vm1018 = vweird.f32 %v921
        %vm1019 = vweird.f32 %v1013
        %vm1020 = vmor %vm1018, %vm1019
        %v1021 = vsel %vm1020, %v1013, %v1017
        %v1022 = vand.u32 2147483647, %v921
        %vm1023 = vcmp.eq.f32.partialorder %v1022, 8.507059e+37
        %v1024 = vand.u32 %v921, 2147483648
        %v1025 = vor.u32 1.1754944e-38, %v1024
        %v1026 = vsel %vm1023, %v1025, %v1021
        %v1027 = vmul.f32 1.0, %v1026
        %v1028 = vrcp.pop %v922
        %v1029 = vmul.f32 %v922, %v1028
        %v1030 = vsub.f32 1.0, %v1029
        %v1031 = vmul.f32 %v1028, %v1030
        %v1032 = vadd.f32 %v1028, %v1031
        %vm1033 = vweird.f32 %v922
        %vm1034 = vweird.f32 %v1028
        %vm1035 = vmor %vm1033, %vm1034
        %v1036 = vsel %vm1035, %v1028, %v1032
        %v1037 = vand.u32 2147483647, %v922
        %vm1038 = vcmp.eq.f32.partialorder %v1037, 8.507059e+37
        %v1039 = vand.u32 %v922, 2147483648
        %v1040 = vor.u32 1.1754944e-38, %v1039
        %v1041 = vsel %vm1038, %v1040, %v1036
        %v1042 = vmul.f32 1.0, %v1041
        %v1043 = vmul.f32 %v659, %v937
        %v1044 = vmul.f32 %v660, %v952
        %v1045 = vmul.f32 %v661, %v967
        %v1046 = vmul.f32 %v662, %v982
        %v1047 = vmul.f32 %v663, %v997
        %v1048 = vmul.f32 %v664, %v1012
        %v1049 = vmul.f32 %v665, %v1027
        %v1050 = vmul.f32 %v666, %v1042
        %v1051 = vsub.f32 1.0, %v937
        %v1052 = vsub.f32 1.0, %v952
        %v1053 = vsub.f32 1.0, %v967
        %v1054 = vsub.f32 1.0, %v982
        %v1055 = vsub.f32 1.0, %v997
        %v1056 = vsub.f32 1.0, %v1012
        %v1057 = vsub.f32 1.0, %v1027
        %v1058 = vsub.f32 1.0, %v1042
        %v1067 = vperm.slane %v667, 0
        %v1068 = vperm.slane %v668, 0
        %v1069 = vperm.slane %v669, 0
        %v1070 = vperm.slane %v670, 0
        %v1071 = vperm.slane %v671, 0
        %v1072 = vperm.slane %v672, 0
        %v1073 = vperm.slane %v673, 0
        %v1074 = vperm.slane %v674, 0
        %v1083 = vmul.f32 %v1067, %v1051
        %v1084 = vmul.f32 %v1068, %v1052
        %v1085 = vmul.f32 %v1069, %v1053
        %v1086 = vmul.f32 %v1070, %v1054
        %v1087 = vmul.f32 %v1071, %v1055
        %v1088 = vmul.f32 %v1072, %v1056
        %v1089 = vmul.f32 %v1073, %v1057
        %v1090 = vmul.f32 %v1074, %v1058
        %v1091 = vadd.f32 %v1043, %v1083
        %v1092 = vadd.f32 %v1044, %v1084
        %v1093 = vadd.f32 %v1045, %v1085
        %v1094 = vadd.f32 %v1046, %v1086
        %v1095 = vadd.f32 %v1047, %v1087
        %v1096 = vadd.f32 %v1048, %v1088
        %v1097 = vadd.f32 %v1049, %v1089
        %v1098 = vadd.f32 %v1050, %v1090
        %v1099 = vld [vmem:[%s2] sm:$0xff]
        %v1100 = vadd.f32 %v1091, %v1099
        %v1101 = vadd.f32 %v1092, %v1099
        %v1102 = vadd.f32 %v1093, %v1099
        %v1103 = vadd.f32 %v1094, %v1099
        %v1104 = vadd.f32 %v1095, %v1099
        %v1105 = vadd.f32 %v1096, %v1099
        %v1106 = vadd.f32 %v1097, %v1099
        %v1107 = vadd.f32 %v1098, %v1099
        %1108 = vst.msk [vmem:[#allocation2] sm:$0xff] %vm711, %v1100
        %1109 = vst.msk [vmem:[#allocation2 + $0x8] sm:$0xff] %vm711, %v1101
        %1110 = vst.msk [vmem:[#allocation2 + $0x10] sm:$0xff] %vm711, %v1102
        %1111 = vst.msk [vmem:[#allocation2 + $0x18] sm:$0xff] %vm711, %v1103
        %1112 = vst.msk [vmem:[#allocation2 + $0x20] sm:$0xff] %vm711, %v1104
        %1113 = vst.msk [vmem:[#allocation2 + $0x28] sm:$0xff] %vm711, %v1105
        %1114 = vst.msk [vmem:[#allocation2 + $0x30] sm:$0xff] %vm711, %v1106
        %1115 = vst.msk [vmem:[#allocation2 + $0x38] sm:$0xff] %vm711, %v1107
      $region100: #{time_sasrec_forward.2} parent=95 // pred_fallthru
        _
      %v1116 = vld [vmem:[#allocation2] sm:$0xff]
      %v1117 = vld [vmem:[#allocation2 + $0x8] sm:$0xff]
      %v1118 = vld [vmem:[#allocation2 + $0x10] sm:$0xff]
      %v1119 = vld [vmem:[#allocation2 + $0x18] sm:$0xff]
      %v1120 = vld [vmem:[#allocation2 + $0x20] sm:$0xff]
      %v1121 = vld [vmem:[#allocation2 + $0x28] sm:$0xff]
      %v1122 = vld [vmem:[#allocation2 + $0x30] sm:$0xff]
      %v1123 = vld [vmem:[#allocation2 + $0x38] sm:$0xff]
      %v1124 = vpack.c.bf16 %v1117, %v1116
      %v1125 = vpack.c.bf16 %v1119, %v1118
      %v1126 = vpack.c.bf16 %v1121, %v1120
      %v1127 = vpack.c.bf16 %v1123, %v1122
      %s1128 = smul.u32 %s35, 16
      %s1129 = smul.addr %s1128, 4
      %s1130 = scalar_lea.vmem %s7, %s1129
      %v1131 = vld [vmem:[%s1130] sm:$0xff]
      %v1132 = vld [vmem:[%s1130 + $0x8] sm:$0xff]
      %v1133 = vld [vmem:[%s1130 + $0x10] sm:$0xff]
      %v1134 = vld [vmem:[%s1130 + $0x18] sm:$0xff]
      %v1135 = vld [vmem:[%s1130 + $0x20] sm:$0xff]
      %v1136 = vld [vmem:[%s1130 + $0x28] sm:$0xff]
      %v1137 = vld [vmem:[%s1130 + $0x30] sm:$0xff]
      %v1138 = vld [vmem:[%s1130 + $0x38] sm:$0xff]
      %s1139 = smul.u32 %s35, 2
      %s1140 = scalar_lea.vmem %s8, %s1139
      %v1141 = vld [vmem:[%s1140] sm:$0x3]
      %v1143 = vperm.slane %v1141, 0
      %v1144 = vperm.slane %v1141, 1
      %v1155 = vunpack.c.l.b16 %v1131
      %v1156 = vunpack.c.h.b16 %v1131
      %v1157 = vunpack.c.l.b16 %v1132
      %v1158 = vunpack.c.h.b16 %v1132
      %v1159 = vunpack.c.l.b16 %v1133
      %v1160 = vunpack.c.h.b16 %v1133
      %v1161 = vunpack.c.l.b16 %v1134
      %v1162 = vunpack.c.h.b16 %v1134
      %v1163 = vunpack.c.l.b16 %v1135
      %v1164 = vunpack.c.h.b16 %v1135
      %v1165 = vunpack.c.l.b16 %v1136
      %v1166 = vunpack.c.h.b16 %v1136
      %v1167 = vunpack.c.l.b16 %v1137
      %v1168 = vunpack.c.h.b16 %v1137
      %v1169 = vunpack.c.l.b16 %v1138
      %v1170 = vunpack.c.h.b16 %v1138
      %v1171 = vpack.c.b16 %v1157, %v1155
      %v1172 = vpack.c.b16 %v1158, %v1156
      %v1173 = vpack.c.b16 %v1161, %v1159
      %v1174 = vpack.c.b16 %v1162, %v1160
      %v1175 = vpack.c.b16 %v1165, %v1163
      %v1176 = vpack.c.b16 %v1166, %v1164
      %v1177 = vpack.c.b16 %v1169, %v1167
      %v1178 = vpack.c.b16 %v1170, %v1168
      %vm1187 = vcmask 523264
      %v1189 = vsel %vm1187, %v1124, 0
      %v1192 = vsel %vm1187, %v1125, 0
      %v1195 = vsel %vm1187, %v1126, 0
      %v1198 = vsel %vm1187, %v1127, 0
      %1200 = vmatpush.bf16.msra.mxu0 0
      %1201 = vmatpush.bf16.msra.mxu0 0
      %1202 = vmatpush.bf16.msra.mxu0 0
      %1203 = vmatpush.bf16.msra.mxu0 0
      %1204 = vmatpush.bf16.msra.mxu0 %v1177
      %1205 = vmatpush.bf16.msra.mxu0 %v1175
      %1206 = vmatpush.bf16.msra.mxu0 %v1173
      %1207 = vmatpush.bf16.msra.mxu0 %v1171
      %1208 = vmatmul.bf16.gmra.mxu0 %v1189
      %v1209 = vpop.f32.mrf.mxu0
      %v1210 = vadd.f32 %v1143, %v1209
      %v1211 = vpop.f32.mrf.mxu0
      %v1212 = vadd.f32 %v1143, %v1211
      %1213 = vmatmul.bf16.gmra.mxu0 %v1192
      %v1214 = vpop.f32.mrf.mxu0
      %v1215 = vadd.f32 %v1143, %v1214
      %v1216 = vpop.f32.mrf.mxu0
      %v1217 = vadd.f32 %v1143, %v1216
      %1218 = vmatmul.bf16.gmra.mxu0 %v1195
      %v1219 = vpop.f32.mrf.mxu0
      %v1220 = vadd.f32 %v1143, %v1219
      %v1221 = vpop.f32.mrf.mxu0
      %v1222 = vadd.f32 %v1143, %v1221
      %1223 = vmatmul.bf16.gmra.mxu0 %v1198
      %v1224 = vpop.f32.mrf.mxu0
      %v1225 = vadd.f32 %v1143, %v1224
      %v1226 = vpop.f32.mrf.mxu0
      %v1227 = vadd.f32 %v1143, %v1226
      %1228 = vdwg.mxu0
      %1229 = vmatpush.bf16.msra.mxu0 0
      %1230 = vmatpush.bf16.msra.mxu0 0
      %1231 = vmatpush.bf16.msra.mxu0 0
      %1232 = vmatpush.bf16.msra.mxu0 0
      %1233 = vmatpush.bf16.msra.mxu0 %v1178
      %1234 = vmatpush.bf16.msra.mxu0 %v1176
      %1235 = vmatpush.bf16.msra.mxu0 %v1174
      %1236 = vmatpush.bf16.msra.mxu0 %v1172
      %1237 = vmatmul.bf16.gmra.mxu0 %v1189
      %v1238 = vpop.f32.mrf.mxu0
      %v1239 = vadd.f32 %v1144, %v1238
      %v1240 = vpop.f32.mrf.mxu0
      %v1241 = vadd.f32 %v1144, %v1240
      %1242 = vmatmul.bf16.gmra.mxu0 %v1192
      %v1243 = vpop.f32.mrf.mxu0
      %v1244 = vadd.f32 %v1144, %v1243
      %v1245 = vpop.f32.mrf.mxu0
      %v1246 = vadd.f32 %v1144, %v1245
      %1247 = vmatmul.bf16.gmra.mxu0 %v1195
      %v1248 = vpop.f32.mrf.mxu0
      %v1249 = vadd.f32 %v1144, %v1248
      %v1250 = vpop.f32.mrf.mxu0
      %v1251 = vadd.f32 %v1144, %v1250
      %1252 = vmatmul.bf16.gmra.mxu0 %v1198
      %v1253 = vpop.f32.mrf.mxu0
      %v1254 = vadd.f32 %v1144, %v1253
      %v1255 = vpop.f32.mrf.mxu0
      %v1256 = vadd.f32 %v1144, %v1255
      %1257 = vdwg.mxu0
      %v1258 = vld [vmem:[%s647] sm:$0x1]
      %v1259 = vld [vmem:[%s647 + $0x1] sm:$0x1]
      %v1260 = vld [vmem:[%s647 + $0x2] sm:$0x1]
      %v1261 = vld [vmem:[%s647 + $0x3] sm:$0x1]
      %v1262 = vld [vmem:[%s647 + $0x4] sm:$0x1]
      %v1263 = vld [vmem:[%s647 + $0x5] sm:$0x1]
      %v1264 = vld [vmem:[%s647 + $0x6] sm:$0x1]
      %v1265 = vld [vmem:[%s647 + $0x7] sm:$0x1]
      %v1266 = vsub.f32 1.0, %v1258
      %v1267 = vsub.f32 1.0, %v1259
      %v1268 = vsub.f32 1.0, %v1260
      %v1269 = vsub.f32 1.0, %v1261
      %v1270 = vsub.f32 1.0, %v1262
      %v1271 = vsub.f32 1.0, %v1263
      %v1272 = vsub.f32 1.0, %v1264
      %v1273 = vsub.f32 1.0, %v1265
      %v1274 = vmul.f32 %v1266, -1e+30
      %v1275 = vmul.f32 %v1267, -1e+30
      %v1276 = vmul.f32 %v1268, -1e+30
      %v1277 = vmul.f32 %v1269, -1e+30
      %v1278 = vmul.f32 %v1270, -1e+30
      %v1279 = vmul.f32 %v1271, -1e+30
      %v1280 = vmul.f32 %v1272, -1e+30
      %v1281 = vmul.f32 %v1273, -1e+30
      %v1282 = vpack.c.bf16 %v1210, %v1210
      %v1283 = vpack.c.bf16 %v1212, %v1212
      %v1284 = vpack.c.bf16 %v1215, %v1215
      %v1285 = vpack.c.bf16 %v1217, %v1217
      %v1286 = vpack.c.bf16 %v1220, %v1220
      %v1287 = vpack.c.bf16 %v1222, %v1222
      %v1288 = vpack.c.bf16 %v1225, %v1225
      %v1289 = vpack.c.bf16 %v1227, %v1227
      %v1290 = vpack.c.bf16 %v1239, %v1239
      %v1291 = vpack.c.bf16 %v1241, %v1241
      %v1292 = vpack.c.bf16 %v1244, %v1244
      %v1293 = vpack.c.bf16 %v1246, %v1246
      %v1294 = vpack.c.bf16 %v1249, %v1249
      %v1295 = vpack.c.bf16 %v1251, %v1251
      %v1296 = vpack.c.bf16 %v1254, %v1254
      %v1297 = vpack.c.bf16 %v1256, %v1256
      %v1306 = vperm.slane %v1274, 0
      %v1307 = vperm.slane %v1275, 0
      %v1308 = vperm.slane %v1276, 0
      %v1309 = vperm.slane %v1277, 0
      %v1310 = vperm.slane %v1278, 0
      %v1311 = vperm.slane %v1279, 0
      %v1312 = vperm.slane %v1280, 0
      %v1313 = vperm.slane %v1281, 0
      %v1323 = vunpack.c.l.b16 %v1282
      %v1324 = vpack.c.b16 %v1323, %v1323
      %1325 = vrot.lane.b32.xlu0 %v1324, 64
      %v1326 = vpop.permute.xlu0 %1325
      %vm1327 = vcmask 261120
      %v1329 = vsel %vm1327, %v1282, 0
      %v1332 = vsel %vm1327, %v1326, 0
      %1334 = vmatpush.bf16.xpose.msra.mxu0 0
      %1335 = vmatpush.bf16.xpose.msra.mxu0 0
      %1336 = vmatpush.bf16.xpose.msra.mxu0 0
      %1337 = vmatpush.bf16.xpose.msra.mxu0 0
      %1338 = vmatpush.bf16.xpose.msra.mxu0 0
      %1339 = vmatpush.bf16.xpose.msra.mxu0 0
      %1340 = vmatpush.bf16.xpose.msra.mxu0 0
      %1341 = vmatpush.bf16.xpose.msra.mxu0 %v1332
      %1342 = vmatmul.bf16.gmra.mxu0 %v1329
      %v1343 = vpop.f32.mrf.mxu0
      %v1344 = vadd.f32 %v1306, %v1343
      %v1345 = vpop.f32.mrf.mxu0
      %1346 = vdwg.mxu0
      %v1348 = vunpack.c.l.b16 %v1283
      %v1349 = vpack.c.b16 %v1348, %v1348
      %1350 = vrot.lane.b32.xlu0 %v1349, 64
      %v1351 = vpop.permute.xlu0 %1350
      %v1353 = vsel %vm1327, %v1283, 0
      %v1356 = vsel %vm1327, %v1351, 0
      %1358 = vmatpush.bf16.xpose.msra.mxu0 0
      %1359 = vmatpush.bf16.xpose.msra.mxu0 0
      %1360 = vmatpush.bf16.xpose.msra.mxu0 0
      %1361 = vmatpush.bf16.xpose.msra.mxu0 0
      %1362 = vmatpush.bf16.xpose.msra.mxu0 0
      %1363 = vmatpush.bf16.xpose.msra.mxu0 0
      %1364 = vmatpush.bf16.xpose.msra.mxu0 0
      %1365 = vmatpush.bf16.xpose.msra.mxu0 %v1356
      %1366 = vmatmul.bf16.gmra.mxu0 %v1353
      %v1367 = vpop.f32.mrf.mxu0
      %v1368 = vadd.f32 %v1307, %v1367
      %v1369 = vpop.f32.mrf.mxu0
      %1370 = vdwg.mxu0
      %v1372 = vunpack.c.l.b16 %v1284
      %v1373 = vpack.c.b16 %v1372, %v1372
      %1374 = vrot.lane.b32.xlu0 %v1373, 64
      %v1375 = vpop.permute.xlu0 %1374
      %v1377 = vsel %vm1327, %v1284, 0
      %v1380 = vsel %vm1327, %v1375, 0
      %1382 = vmatpush.bf16.xpose.msra.mxu0 0
      %1383 = vmatpush.bf16.xpose.msra.mxu0 0
      %1384 = vmatpush.bf16.xpose.msra.mxu0 0
      %1385 = vmatpush.bf16.xpose.msra.mxu0 0
      %1386 = vmatpush.bf16.xpose.msra.mxu0 0
      %1387 = vmatpush.bf16.xpose.msra.mxu0 0
      %1388 = vmatpush.bf16.xpose.msra.mxu0 0
      %1389 = vmatpush.bf16.xpose.msra.mxu0 %v1380
      %1390 = vmatmul.bf16.gmra.mxu0 %v1377
      %v1391 = vpop.f32.mrf.mxu0
      %v1392 = vadd.f32 %v1308, %v1391
      %v1393 = vpop.f32.mrf.mxu0
      %1394 = vdwg.mxu0
      %v1396 = vunpack.c.l.b16 %v1285
      %v1397 = vpack.c.b16 %v1396, %v1396
      %1398 = vrot.lane.b32.xlu0 %v1397, 64
      %v1399 = vpop.permute.xlu0 %1398
      %v1401 = vsel %vm1327, %v1285, 0
      %v1404 = vsel %vm1327, %v1399, 0
      %1406 = vmatpush.bf16.xpose.msra.mxu0 0
      %1407 = vmatpush.bf16.xpose.msra.mxu0 0
      %1408 = vmatpush.bf16.xpose.msra.mxu0 0
      %1409 = vmatpush.bf16.xpose.msra.mxu0 0
      %1410 = vmatpush.bf16.xpose.msra.mxu0 0
      %1411 = vmatpush.bf16.xpose.msra.mxu0 0
      %1412 = vmatpush.bf16.xpose.msra.mxu0 0
      %1413 = vmatpush.bf16.xpose.msra.mxu0 %v1404
      %1414 = vmatmul.bf16.gmra.mxu0 %v1401
      %v1415 = vpop.f32.mrf.mxu0
      %v1416 = vadd.f32 %v1309, %v1415
      %v1417 = vpop.f32.mrf.mxu0
      %1418 = vdwg.mxu0
      %v1420 = vunpack.c.l.b16 %v1286
      %v1421 = vpack.c.b16 %v1420, %v1420
      %1422 = vrot.lane.b32.xlu0 %v1421, 64
      %v1423 = vpop.permute.xlu0 %1422
      %v1425 = vsel %vm1327, %v1286, 0
      %v1428 = vsel %vm1327, %v1423, 0
      %1430 = vmatpush.bf16.xpose.msra.mxu0 0
      %1431 = vmatpush.bf16.xpose.msra.mxu0 0
      %1432 = vmatpush.bf16.xpose.msra.mxu0 0
      %1433 = vmatpush.bf16.xpose.msra.mxu0 0
      %1434 = vmatpush.bf16.xpose.msra.mxu0 0
      %1435 = vmatpush.bf16.xpose.msra.mxu0 0
      %1436 = vmatpush.bf16.xpose.msra.mxu0 0
      %1437 = vmatpush.bf16.xpose.msra.mxu0 %v1428
      %1438 = vmatmul.bf16.gmra.mxu0 %v1425
      %v1439 = vpop.f32.mrf.mxu0
      %v1440 = vadd.f32 %v1310, %v1439
      %v1441 = vpop.f32.mrf.mxu0
      %1442 = vdwg.mxu0
      %v1444 = vunpack.c.l.b16 %v1287
      %v1445 = vpack.c.b16 %v1444, %v1444
      %1446 = vrot.lane.b32.xlu0 %v1445, 64
      %v1447 = vpop.permute.xlu0 %1446
      %v1449 = vsel %vm1327, %v1287, 0
      %v1452 = vsel %vm1327, %v1447, 0
      %1454 = vmatpush.bf16.xpose.msra.mxu0 0
      %1455 = vmatpush.bf16.xpose.msra.mxu0 0
      %1456 = vmatpush.bf16.xpose.msra.mxu0 0
      %1457 = vmatpush.bf16.xpose.msra.mxu0 0
      %1458 = vmatpush.bf16.xpose.msra.mxu0 0
      %1459 = vmatpush.bf16.xpose.msra.mxu0 0
      %1460 = vmatpush.bf16.xpose.msra.mxu0 0
      %1461 = vmatpush.bf16.xpose.msra.mxu0 %v1452
      %1462 = vmatmul.bf16.gmra.mxu0 %v1449
      %v1463 = vpop.f32.mrf.mxu0
      %v1464 = vadd.f32 %v1311, %v1463
      %v1465 = vpop.f32.mrf.mxu0
      %1466 = vdwg.mxu0
      %v1468 = vunpack.c.l.b16 %v1288
      %v1469 = vpack.c.b16 %v1468, %v1468
      %1470 = vrot.lane.b32.xlu0 %v1469, 64
      %v1471 = vpop.permute.xlu0 %1470
      %v1473 = vsel %vm1327, %v1288, 0
      %v1476 = vsel %vm1327, %v1471, 0
      %1478 = vmatpush.bf16.xpose.msra.mxu0 0
      %1479 = vmatpush.bf16.xpose.msra.mxu0 0
      %1480 = vmatpush.bf16.xpose.msra.mxu0 0
      %1481 = vmatpush.bf16.xpose.msra.mxu0 0
      %1482 = vmatpush.bf16.xpose.msra.mxu0 0
      %1483 = vmatpush.bf16.xpose.msra.mxu0 0
      %1484 = vmatpush.bf16.xpose.msra.mxu0 0
      %1485 = vmatpush.bf16.xpose.msra.mxu0 %v1476
      %1486 = vmatmul.bf16.gmra.mxu0 %v1473
      %v1487 = vpop.f32.mrf.mxu0
      %v1488 = vadd.f32 %v1312, %v1487
      %v1489 = vpop.f32.mrf.mxu0
      %1490 = vdwg.mxu0
      %v1492 = vunpack.c.l.b16 %v1289
      %v1493 = vpack.c.b16 %v1492, %v1492
      %1494 = vrot.lane.b32.xlu0 %v1493, 64
      %v1495 = vpop.permute.xlu0 %1494
      %v1497 = vsel %vm1327, %v1289, 0
      %v1500 = vsel %vm1327, %v1495, 0
      %1502 = vmatpush.bf16.xpose.msra.mxu0 0
      %1503 = vmatpush.bf16.xpose.msra.mxu0 0
      %1504 = vmatpush.bf16.xpose.msra.mxu0 0
      %1505 = vmatpush.bf16.xpose.msra.mxu0 0
      %1506 = vmatpush.bf16.xpose.msra.mxu0 0
      %1507 = vmatpush.bf16.xpose.msra.mxu0 0
      %1508 = vmatpush.bf16.xpose.msra.mxu0 0
      %1509 = vmatpush.bf16.xpose.msra.mxu0 %v1500
      %1510 = vmatmul.bf16.gmra.mxu0 %v1497
      %v1511 = vpop.f32.mrf.mxu0
      %v1512 = vadd.f32 %v1313, %v1511
      %v1513 = vpop.f32.mrf.mxu0
      %1514 = vdwg.mxu0
      %vm1515 = vcmask 64512
      %v1516 = vsel %vm1515, %v1344, -inf
      %1517 = vmax.xlane.f32.xlu0 %v1516
      %v1518 = vpop.xlane.xlu0 %1517
      %v1519 = vsel %vm1515, %v1368, -inf
      %1520 = vmax.xlane.f32.xlu0 %v1519
      %v1521 = vpop.xlane.xlu0 %1520
      %v1522 = vsel %vm1515, %v1392, -inf
      %1523 = vmax.xlane.f32.xlu0 %v1522
      %v1524 = vpop.xlane.xlu0 %1523
      %v1525 = vsel %vm1515, %v1416, -inf
      %1526 = vmax.xlane.f32.xlu0 %v1525
      %v1527 = vpop.xlane.xlu0 %1526
      %v1528 = vsel %vm1515, %v1440, -inf
      %1529 = vmax.xlane.f32.xlu0 %v1528
      %v1530 = vpop.xlane.xlu0 %1529
      %v1531 = vsel %vm1515, %v1464, -inf
      %1532 = vmax.xlane.f32.xlu0 %v1531
      %v1533 = vpop.xlane.xlu0 %1532
      %v1534 = vsel %vm1515, %v1488, -inf
      %1535 = vmax.xlane.f32.xlu0 %v1534
      %v1536 = vpop.xlane.xlu0 %1535
      %v1537 = vsel %vm1515, %v1512, -inf
      %1538 = vmax.xlane.f32.xlu0 %v1537
      %v1539 = vpop.xlane.xlu0 %1538
      %v1540 = vsub.f32 %v1344, %v1518
      %v1541 = vsub.f32 %v1368, %v1521
      %v1542 = vsub.f32 %v1392, %v1524
      %v1543 = vsub.f32 %v1416, %v1527
      %v1544 = vsub.f32 %v1440, %v1530
      %v1545 = vsub.f32 %v1464, %v1533
      %v1546 = vsub.f32 %v1488, %v1536
      %v1547 = vsub.f32 %v1512, %v1539
      %v1548 = vmul.f32 %v1540, 1.442695
      %v1549 = vpow.pop %v1548
      %v1550 = vmul.f32 %v1541, 1.442695
      %v1551 = vpow.pop %v1550
      %v1552 = vmul.f32 %v1542, 1.442695
      %v1553 = vpow.pop %v1552
      %v1554 = vmul.f32 %v1543, 1.442695
      %v1555 = vpow.pop %v1554
      %v1556 = vmul.f32 %v1544, 1.442695
      %v1557 = vpow.pop %v1556
      %v1558 = vmul.f32 %v1545, 1.442695
      %v1559 = vpow.pop %v1558
      %v1560 = vmul.f32 %v1546, 1.442695
      %v1561 = vpow.pop %v1560
      %v1562 = vmul.f32 %v1547, 1.442695
      %v1563 = vpow.pop %v1562
      %v1564 = vsel %vm1515, %v1549, 0.0
      %1565 = vadd.xlane.f32.xlu0 %v1564
      %v1566 = vpop.xlane.xlu0 %1565
      %v1567 = vsel %vm1515, %v1551, 0.0
      %1568 = vadd.xlane.f32.xlu0 %v1567
      %v1569 = vpop.xlane.xlu0 %1568
      %v1570 = vsel %vm1515, %v1553, 0.0
      %1571 = vadd.xlane.f32.xlu0 %v1570
      %v1572 = vpop.xlane.xlu0 %1571
      %v1573 = vsel %vm1515, %v1555, 0.0
      %1574 = vadd.xlane.f32.xlu0 %v1573
      %v1575 = vpop.xlane.xlu0 %1574
      %v1576 = vsel %vm1515, %v1557, 0.0
      %1577 = vadd.xlane.f32.xlu0 %v1576
      %v1578 = vpop.xlane.xlu0 %1577
      %v1579 = vsel %vm1515, %v1559, 0.0
      %1580 = vadd.xlane.f32.xlu0 %v1579
      %v1581 = vpop.xlane.xlu0 %1580
      %v1582 = vsel %vm1515, %v1561, 0.0
      %1583 = vadd.xlane.f32.xlu0 %v1582
      %v1584 = vpop.xlane.xlu0 %1583
      %v1585 = vsel %vm1515, %v1563, 0.0
      %1586 = vadd.xlane.f32.xlu0 %v1585
      %v1587 = vpop.xlane.xlu0 %1586
      %v1588 = vrcp.pop %v1566
      %v1589 = vrcp.pop %v1569
      %v1590 = vrcp.pop %v1572
      %v1591 = vrcp.pop %v1575
      %v1592 = vrcp.pop %v1578
      %v1593 = vrcp.pop %v1581
      %v1594 = vrcp.pop %v1584
      %v1595 = vrcp.pop %v1587
      %v1596 = vmul.f32 %v1549, %v1588
      %v1597 = vmul.f32 %v1551, %v1589
      %v1598 = vmul.f32 %v1553, %v1590
      %v1599 = vmul.f32 %v1555, %v1591
      %v1600 = vmul.f32 %v1557, %v1592
      %v1601 = vmul.f32 %v1559, %v1593
      %v1602 = vmul.f32 %v1561, %v1594
      %v1603 = vmul.f32 %v1563, %v1595
      %v1604 = vpack.c.bf16 %v1596, %v1596
      %v1605 = vpack.c.bf16 %v1597, %v1597
      %v1606 = vpack.c.bf16 %v1598, %v1598
      %v1607 = vpack.c.bf16 %v1599, %v1599
      %v1608 = vpack.c.bf16 %v1600, %v1600
      %v1609 = vpack.c.bf16 %v1601, %v1601
      %v1610 = vpack.c.bf16 %v1602, %v1602
      %v1611 = vpack.c.bf16 %v1603, %v1603
      %v1613 = vsel %vm1515, %v1604, 0
      %vm1615 = vcmask 1043456
      %v1617 = vsel %vm1615, %v1290, 0
      %1619 = vmatpush.bf16.msra.mxu0 0
      %1620 = vmatpush.bf16.msra.mxu0 0
      %1621 = vmatpush.bf16.msra.mxu0 0
      %1622 = vmatpush.bf16.msra.mxu0 0
      %1623 = vmatpush.bf16.msra.mxu0 0
      %1624 = vmatpush.bf16.msra.mxu0 0
      %1625 = vmatpush.bf16.msra.mxu0 0
      %1626 = vmatpush.bf16.msra.mxu0 %v1617
      %1627 = vmatmul.bf16.gmra.mxu0 %v1613
      %v1628 = vpop.f32.mrf.mxu0
      %v1629 = vadd.f32 0.0, %v1628
      %v1630 = vpop.f32.mrf.mxu0
      %1631 = vdwg.mxu0
      %v1633 = vsel %vm1515, %v1605, 0
      %v1636 = vsel %vm1615, %v1291, 0
      %1638 = vmatpush.bf16.msra.mxu0 0
      %1639 = vmatpush.bf16.msra.mxu0 0
      %1640 = vmatpush.bf16.msra.mxu0 0
      %1641 = vmatpush.bf16.msra.mxu0 0
      %1642 = vmatpush.bf16.msra.mxu0 0
      %1643 = vmatpush.bf16.msra.mxu0 0
      %1644 = vmatpush.bf16.msra.mxu0 0
      %1645 = vmatpush.bf16.msra.mxu0 %v1636
      %1646 = vmatmul.bf16.gmra.mxu0 %v1633
      %v1647 = vpop.f32.mrf.mxu0
      %v1648 = vadd.f32 0.0, %v1647
      %v1649 = vpop.f32.mrf.mxu0
      %1650 = vdwg.mxu0
      %v1652 = vsel %vm1515, %v1606, 0
      %v1655 = vsel %vm1615, %v1292, 0
      %1657 = vmatpush.bf16.msra.mxu0 0
      %1658 = vmatpush.bf16.msra.mxu0 0
      %1659 = vmatpush.bf16.msra.mxu0 0
      %1660 = vmatpush.bf16.msra.mxu0 0
      %1661 = vmatpush.bf16.msra.mxu0 0
      %1662 = vmatpush.bf16.msra.mxu0 0
      %1663 = vmatpush.bf16.msra.mxu0 0
      %1664 = vmatpush.bf16.msra.mxu0 %v1655
      %1665 = vmatmul.bf16.gmra.mxu0 %v1652
      %v1666 = vpop.f32.mrf.mxu0
      %v1667 = vadd.f32 0.0, %v1666
      %v1668 = vpop.f32.mrf.mxu0
      %1669 = vdwg.mxu0
      %v1671 = vsel %vm1515, %v1607, 0
      %v1674 = vsel %vm1615, %v1293, 0
      %1676 = vmatpush.bf16.msra.mxu0 0
      %1677 = vmatpush.bf16.msra.mxu0 0
      %1678 = vmatpush.bf16.msra.mxu0 0
      %1679 = vmatpush.bf16.msra.mxu0 0
      %1680 = vmatpush.bf16.msra.mxu0 0
      %1681 = vmatpush.bf16.msra.mxu0 0
      %1682 = vmatpush.bf16.msra.mxu0 0
      %1683 = vmatpush.bf16.msra.mxu0 %v1674
      %1684 = vmatmul.bf16.gmra.mxu0 %v1671
      %v1685 = vpop.f32.mrf.mxu0
      %v1686 = vadd.f32 0.0, %v1685
      %v1687 = vpop.f32.mrf.mxu0
      %1688 = vdwg.mxu0
      %v1690 = vsel %vm1515, %v1608, 0
      %v1693 = vsel %vm1615, %v1294, 0
      %1695 = vmatpush.bf16.msra.mxu0 0
      %1696 = vmatpush.bf16.msra.mxu0 0
      %1697 = vmatpush.bf16.msra.mxu0 0
      %1698 = vmatpush.bf16.msra.mxu0 0
      %1699 = vmatpush.bf16.msra.mxu0 0
      %1700 = vmatpush.bf16.msra.mxu0 0
      %1701 = vmatpush.bf16.msra.mxu0 0
      %1702 = vmatpush.bf16.msra.mxu0 %v1693
      %1703 = vmatmul.bf16.gmra.mxu0 %v1690
      %v1704 = vpop.f32.mrf.mxu0
      %v1705 = vadd.f32 0.0, %v1704
      %v1706 = vpop.f32.mrf.mxu0
      %1707 = vdwg.mxu0
      %v1709 = vsel %vm1515, %v1609, 0
      %v1712 = vsel %vm1615, %v1295, 0
      %1714 = vmatpush.bf16.msra.mxu0 0
      %1715 = vmatpush.bf16.msra.mxu0 0
      %1716 = vmatpush.bf16.msra.mxu0 0
      %1717 = vmatpush.bf16.msra.mxu0 0
      %1718 = vmatpush.bf16.msra.mxu0 0
      %1719 = vmatpush.bf16.msra.mxu0 0
      %1720 = vmatpush.bf16.msra.mxu0 0
      %1721 = vmatpush.bf16.msra.mxu0 %v1712
      %1722 = vmatmul.bf16.gmra.mxu0 %v1709
      %v1723 = vpop.f32.mrf.mxu0
      %v1724 = vadd.f32 0.0, %v1723
      %v1725 = vpop.f32.mrf.mxu0
      %1726 = vdwg.mxu0
      %v1728 = vsel %vm1515, %v1610, 0
      %v1731 = vsel %vm1615, %v1296, 0
      %1733 = vmatpush.bf16.msra.mxu0 0
      %1734 = vmatpush.bf16.msra.mxu0 0
      %1735 = vmatpush.bf16.msra.mxu0 0
      %1736 = vmatpush.bf16.msra.mxu0 0
      %1737 = vmatpush.bf16.msra.mxu0 0
      %1738 = vmatpush.bf16.msra.mxu0 0
      %1739 = vmatpush.bf16.msra.mxu0 0
      %1740 = vmatpush.bf16.msra.mxu0 %v1731
      %1741 = vmatmul.bf16.gmra.mxu0 %v1728
      %v1742 = vpop.f32.mrf.mxu0
      %v1743 = vadd.f32 0.0, %v1742
      %v1744 = vpop.f32.mrf.mxu0
      %1745 = vdwg.mxu0
      %v1747 = vsel %vm1515, %v1611, 0
      %v1750 = vsel %vm1615, %v1297, 0
      %1752 = vmatpush.bf16.msra.mxu0 0
      %1753 = vmatpush.bf16.msra.mxu0 0
      %1754 = vmatpush.bf16.msra.mxu0 0
      %1755 = vmatpush.bf16.msra.mxu0 0
      %1756 = vmatpush.bf16.msra.mxu0 0
      %1757 = vmatpush.bf16.msra.mxu0 0
      %1758 = vmatpush.bf16.msra.mxu0 0
      %1759 = vmatpush.bf16.msra.mxu0 %v1750
      %1760 = vmatmul.bf16.gmra.mxu0 %v1747
      %v1761 = vpop.f32.mrf.mxu0
      %v1762 = vadd.f32 0.0, %v1761
      %v1763 = vpop.f32.mrf.mxu0
      %1764 = vdwg.mxu0
      %1765 = vst.msk [vmem:[#allocation3] sm:$0xff] %vm1327, %v1629
      %1766 = vst.msk [vmem:[#allocation3 + $0x8] sm:$0xff] %vm1327, %v1648
      %1767 = vst.msk [vmem:[#allocation3 + $0x10] sm:$0xff] %vm1327, %v1667
      %1768 = vst.msk [vmem:[#allocation3 + $0x18] sm:$0xff] %vm1327, %v1686
      %1769 = vst.msk [vmem:[#allocation3 + $0x20] sm:$0xff] %vm1327, %v1705
      %1770 = vst.msk [vmem:[#allocation3 + $0x28] sm:$0xff] %vm1327, %v1724
      %1771 = vst.msk [vmem:[#allocation3 + $0x30] sm:$0xff] %vm1327, %v1743
      %1772 = vst.msk [vmem:[#allocation3 + $0x38] sm:$0xff] %vm1327, %v1762
      %1773 = vrot.lane.b32.xlu0 %v1324, 96
      %v1774 = vpop.permute.xlu0 %1773
      %1775 = vrot.lane.b32.xlu0 %v1324, 32
      %v1776 = vpop.permute.xlu0 %1775
      %v1778 = vsel %vm1327, %v1774, 0
      %v1781 = vsel %vm1327, %v1776, 0
      %1783 = vmatpush.bf16.xpose.msra.mxu0 0
      %1784 = vmatpush.bf16.xpose.msra.mxu0 0
      %1785 = vmatpush.bf16.xpose.msra.mxu0 0
      %1786 = vmatpush.bf16.xpose.msra.mxu0 0
      %1787 = vmatpush.bf16.xpose.msra.mxu0 0
      %1788 = vmatpush.bf16.xpose.msra.mxu0 0
      %1789 = vmatpush.bf16.xpose.msra.mxu0 0
      %1790 = vmatpush.bf16.xpose.msra.mxu0 %v1781
      %1791 = vmatmul.bf16.gmra.mxu0 %v1778
      %v1792 = vpop.f32.mrf.mxu0
      %v1793 = vadd.f32 %v1306, %v1792
      %v1794 = vpop.f32.mrf.mxu0
      %1795 = vdwg.mxu0
      %1796 = vrot.lane.b32.xlu0 %v1349, 96
      %v1797 = vpop.permute.xlu0 %1796
      %1798 = vrot.lane.b32.xlu0 %v1349, 32
      %v1799 = vpop.permute.xlu0 %1798
      %v1801 = vsel %vm1327, %v1797, 0
      %v1804 = vsel %vm1327, %v1799, 0
      %1806 = vmatpush.bf16.xpose.msra.mxu0 0
      %1807 = vmatpush.bf16.xpose.msra.mxu0 0
      %1808 = vmatpush.bf16.xpose.msra.mxu0 0
      %1809 = vmatpush.bf16.xpose.msra.mxu0 0
      %1810 = vmatpush.bf16.xpose.msra.mxu0 0
      %1811 = vmatpush.bf16.xpose.msra.mxu0 0
      %1812 = vmatpush.bf16.xpose.msra.mxu0 0
      %1813 = vmatpush.bf16.xpose.msra.mxu0 %v1804
      %1814 = vmatmul.bf16.gmra.mxu0 %v1801
      %v1815 = vpop.f32.mrf.mxu0
      %v1816 = vadd.f32 %v1307, %v1815
      %v1817 = vpop.f32.mrf.mxu0
      %1818 = vdwg.mxu0
      %1819 = vrot.lane.b32.xlu0 %v1373, 96
      %v1820 = vpop.permute.xlu0 %1819
      %1821 = vrot.lane.b32.xlu0 %v1373, 32
      %v1822 = vpop.permute.xlu0 %1821
      %v1824 = vsel %vm1327, %v1820, 0
      %v1827 = vsel %vm1327, %v1822, 0
      %1829 = vmatpush.bf16.xpose.msra.mxu0 0
      %1830 = vmatpush.bf16.xpose.msra.mxu0 0
      %1831 = vmatpush.bf16.xpose.msra.mxu0 0
      %1832 = vmatpush.bf16.xpose.msra.mxu0 0
      %1833 = vmatpush.bf16.xpose.msra.mxu0 0
      %1834 = vmatpush.bf16.xpose.msra.mxu0 0
      %1835 = vmatpush.bf16.xpose.msra.mxu0 0
      %1836 = vmatpush.bf16.xpose.msra.mxu0 %v1827
      %1837 = vmatmul.bf16.gmra.mxu0 %v1824
      %v1838 = vpop.f32.mrf.mxu0
      %v1839 = vadd.f32 %v1308, %v1838
      %v1840 = vpop.f32.mrf.mxu0
      %1841 = vdwg.mxu0
      %1842 = vrot.lane.b32.xlu0 %v1397, 96
      %v1843 = vpop.permute.xlu0 %1842
      %1844 = vrot.lane.b32.xlu0 %v1397, 32
      %v1845 = vpop.permute.xlu0 %1844
      %v1847 = vsel %vm1327, %v1843, 0
      %v1850 = vsel %vm1327, %v1845, 0
      %1852 = vmatpush.bf16.xpose.msra.mxu0 0
      %1853 = vmatpush.bf16.xpose.msra.mxu0 0
      %1854 = vmatpush.bf16.xpose.msra.mxu0 0
      %1855 = vmatpush.bf16.xpose.msra.mxu0 0
      %1856 = vmatpush.bf16.xpose.msra.mxu0 0
      %1857 = vmatpush.bf16.xpose.msra.mxu0 0
      %1858 = vmatpush.bf16.xpose.msra.mxu0 0
      %1859 = vmatpush.bf16.xpose.msra.mxu0 %v1850
      %1860 = vmatmul.bf16.gmra.mxu0 %v1847
      %v1861 = vpop.f32.mrf.mxu0
      %v1862 = vadd.f32 %v1309, %v1861
      %v1863 = vpop.f32.mrf.mxu0
      %1864 = vdwg.mxu0
      %1865 = vrot.lane.b32.xlu0 %v1421, 96
      %v1866 = vpop.permute.xlu0 %1865
      %1867 = vrot.lane.b32.xlu0 %v1421, 32
      %v1868 = vpop.permute.xlu0 %1867
      %v1870 = vsel %vm1327, %v1866, 0
      %v1873 = vsel %vm1327, %v1868, 0
      %1875 = vmatpush.bf16.xpose.msra.mxu0 0
      %1876 = vmatpush.bf16.xpose.msra.mxu0 0
      %1877 = vmatpush.bf16.xpose.msra.mxu0 0
      %1878 = vmatpush.bf16.xpose.msra.mxu0 0
      %1879 = vmatpush.bf16.xpose.msra.mxu0 0
      %1880 = vmatpush.bf16.xpose.msra.mxu0 0
      %1881 = vmatpush.bf16.xpose.msra.mxu0 0
      %1882 = vmatpush.bf16.xpose.msra.mxu0 %v1873
      %1883 = vmatmul.bf16.gmra.mxu0 %v1870
      %v1884 = vpop.f32.mrf.mxu0
      %v1885 = vadd.f32 %v1310, %v1884
      %v1886 = vpop.f32.mrf.mxu0
      %1887 = vdwg.mxu0
      %1888 = vrot.lane.b32.xlu0 %v1445, 96
      %v1889 = vpop.permute.xlu0 %1888
      %1890 = vrot.lane.b32.xlu0 %v1445, 32
      %v1891 = vpop.permute.xlu0 %1890
      %v1893 = vsel %vm1327, %v1889, 0
      %v1896 = vsel %vm1327, %v1891, 0
      %1898 = vmatpush.bf16.xpose.msra.mxu0 0
      %1899 = vmatpush.bf16.xpose.msra.mxu0 0
      %1900 = vmatpush.bf16.xpose.msra.mxu0 0
      %1901 = vmatpush.bf16.xpose.msra.mxu0 0
      %1902 = vmatpush.bf16.xpose.msra.mxu0 0
      %1903 = vmatpush.bf16.xpose.msra.mxu0 0
      %1904 = vmatpush.bf16.xpose.msra.mxu0 0
      %1905 = vmatpush.bf16.xpose.msra.mxu0 %v1896
      %1906 = vmatmul.bf16.gmra.mxu0 %v1893
      %v1907 = vpop.f32.mrf.mxu0
      %v1908 = vadd.f32 %v1311, %v1907
      %v1909 = vpop.f32.mrf.mxu0
      %1910 = vdwg.mxu0
      %1911 = vrot.lane.b32.xlu0 %v1469, 96
      %v1912 = vpop.permute.xlu0 %1911
      %1913 = vrot.lane.b32.xlu0 %v1469, 32
      %v1914 = vpop.permute.xlu0 %1913
      %v1916 = vsel %vm1327, %v1912, 0
      %v1919 = vsel %vm1327, %v1914, 0
      %1921 = vmatpush.bf16.xpose.msra.mxu0 0
      %1922 = vmatpush.bf16.xpose.msra.mxu0 0
      %1923 = vmatpush.bf16.xpose.msra.mxu0 0
      %1924 = vmatpush.bf16.xpose.msra.mxu0 0
      %1925 = vmatpush.bf16.xpose.msra.mxu0 0
      %1926 = vmatpush.bf16.xpose.msra.mxu0 0
      %1927 = vmatpush.bf16.xpose.msra.mxu0 0
      %1928 = vmatpush.bf16.xpose.msra.mxu0 %v1919
      %1929 = vmatmul.bf16.gmra.mxu0 %v1916
      %v1930 = vpop.f32.mrf.mxu0
      %v1931 = vadd.f32 %v1312, %v1930
      %v1932 = vpop.f32.mrf.mxu0
      %1933 = vdwg.mxu0
      %1934 = vrot.lane.b32.xlu0 %v1493, 96
      %v1935 = vpop.permute.xlu0 %1934
      %1936 = vrot.lane.b32.xlu0 %v1493, 32
      %v1937 = vpop.permute.xlu0 %1936
      %v1939 = vsel %vm1327, %v1935, 0
      %v1942 = vsel %vm1327, %v1937, 0
      %1944 = vmatpush.bf16.xpose.msra.mxu0 0
      %1945 = vmatpush.bf16.xpose.msra.mxu0 0
      %1946 = vmatpush.bf16.xpose.msra.mxu0 0
      %1947 = vmatpush.bf16.xpose.msra.mxu0 0
      %1948 = vmatpush.bf16.xpose.msra.mxu0 0
      %1949 = vmatpush.bf16.xpose.msra.mxu0 0
      %1950 = vmatpush.bf16.xpose.msra.mxu0 0
      %1951 = vmatpush.bf16.xpose.msra.mxu0 %v1942
      %1952 = vmatmul.bf16.gmra.mxu0 %v1939
      %v1953 = vpop.f32.mrf.mxu0
      %v1954 = vadd.f32 %v1313, %v1953
      %v1955 = vpop.f32.mrf.mxu0
      %1956 = vdwg.mxu0
      %v1957 = vsel %vm1515, %v1793, -inf
      %1958 = vmax.xlane.f32.xlu0 %v1957
      %v1959 = vpop.xlane.xlu0 %1958
      %v1960 = vsel %vm1515, %v1816, -inf
      %1961 = vmax.xlane.f32.xlu0 %v1960
      %v1962 = vpop.xlane.xlu0 %1961
      %v1963 = vsel %vm1515, %v1839, -inf
      %1964 = vmax.xlane.f32.xlu0 %v1963
      %v1965 = vpop.xlane.xlu0 %1964
      %v1966 = vsel %vm1515, %v1862, -inf
      %1967 = vmax.xlane.f32.xlu0 %v1966
      %v1968 = vpop.xlane.xlu0 %1967
      %v1969 = vsel %vm1515, %v1885, -inf
      %1970 = vmax.xlane.f32.xlu0 %v1969
      %v1971 = vpop.xlane.xlu0 %1970
      %v1972 = vsel %vm1515, %v1908, -inf
      %1973 = vmax.xlane.f32.xlu0 %v1972
      %v1974 = vpop.xlane.xlu0 %1973
      %v1975 = vsel %vm1515, %v1931, -inf
      %1976 = vmax.xlane.f32.xlu0 %v1975
      %v1977 = vpop.xlane.xlu0 %1976
      %v1978 = vsel %vm1515, %v1954, -inf
      %1979 = vmax.xlane.f32.xlu0 %v1978
      %v1980 = vpop.xlane.xlu0 %1979
      %v1981 = vsub.f32 %v1793, %v1959
      %v1982 = vsub.f32 %v1816, %v1962
      %v1983 = vsub.f32 %v1839, %v1965
      %v1984 = vsub.f32 %v1862, %v1968
      %v1985 = vsub.f32 %v1885, %v1971
      %v1986 = vsub.f32 %v1908, %v1974
      %v1987 = vsub.f32 %v1931, %v1977
      %v1988 = vsub.f32 %v1954, %v1980
      %v1989 = vmul.f32 %v1981, 1.442695
      %v1990 = vpow.pop %v1989
      %v1991 = vmul.f32 %v1982, 1.442695
      %v1992 = vpow.pop %v1991
      %v1993 = vmul.f32 %v1983, 1.442695
      %v1994 = vpow.pop %v1993
      %v1995 = vmul.f32 %v1984, 1.442695
      %v1996 = vpow.pop %v1995
      %v1997 = vmul.f32 %v1985, 1.442695
      %v1998 = vpow.pop %v1997
      %v1999 = vmul.f32 %v1986, 1.442695
      %v2000 = vpow.pop %v1999
      %v2001 = vmul.f32 %v1987, 1.442695
      %v2002 = vpow.pop %v2001
      %v2003 = vmul.f32 %v1988, 1.442695
      %v2004 = vpow.pop %v2003
      %v2005 = vsel %vm1515, %v1990, 0.0
      %2006 = vadd.xlane.f32.xlu0 %v2005
      %v2007 = vpop.xlane.xlu0 %2006
      %v2008 = vsel %vm1515, %v1992, 0.0
      %2009 = vadd.xlane.f32.xlu0 %v2008
      %v2010 = vpop.xlane.xlu0 %2009
      %v2011 = vsel %vm1515, %v1994, 0.0
      %2012 = vadd.xlane.f32.xlu0 %v2011
      %v2013 = vpop.xlane.xlu0 %2012
      %v2014 = vsel %vm1515, %v1996, 0.0
      %2015 = vadd.xlane.f32.xlu0 %v2014
      %v2016 = vpop.xlane.xlu0 %2015
      %v2017 = vsel %vm1515, %v1998, 0.0
      %2018 = vadd.xlane.f32.xlu0 %v2017
      %v2019 = vpop.xlane.xlu0 %2018
      %v2020 = vsel %vm1515, %v2000, 0.0
      %2021 = vadd.xlane.f32.xlu0 %v2020
      %v2022 = vpop.xlane.xlu0 %2021
      %v2023 = vsel %vm1515, %v2002, 0.0
      %2024 = vadd.xlane.f32.xlu0 %v2023
      %v2025 = vpop.xlane.xlu0 %2024
      %v2026 = vsel %vm1515, %v2004, 0.0
      %2027 = vadd.xlane.f32.xlu0 %v2026
      %v2028 = vpop.xlane.xlu0 %2027
      %v2029 = vrcp.pop %v2007
      %v2030 = vrcp.pop %v2010
      %v2031 = vrcp.pop %v2013
      %v2032 = vrcp.pop %v2016
      %v2033 = vrcp.pop %v2019
      %v2034 = vrcp.pop %v2022
      %v2035 = vrcp.pop %v2025
      %v2036 = vrcp.pop %v2028
      %v2037 = vmul.f32 %v1990, %v2029
      %v2038 = vmul.f32 %v1992, %v2030
      %v2039 = vmul.f32 %v1994, %v2031
      %v2040 = vmul.f32 %v1996, %v2032
      %v2041 = vmul.f32 %v1998, %v2033
      %v2042 = vmul.f32 %v2000, %v2034
      %v2043 = vmul.f32 %v2002, %v2035
      %v2044 = vmul.f32 %v2004, %v2036
      %v2045 = vpack.c.bf16 %v2037, %v2037
      %v2046 = vpack.c.bf16 %v2038, %v2038
      %v2047 = vpack.c.bf16 %v2039, %v2039
      %v2048 = vpack.c.bf16 %v2040, %v2040
      %v2049 = vpack.c.bf16 %v2041, %v2041
      %v2050 = vpack.c.bf16 %v2042, %v2042
      %v2051 = vpack.c.bf16 %v2043, %v2043
      %v2052 = vpack.c.bf16 %v2044, %v2044
      %v2054 = vunpack.c.l.b16 %v1290
      %v2055 = vpack.c.b16 %v2054, %v2054
      %2056 = vrot.lane.b32.xlu0 %v2055, 96
      %v2057 = vpop.permute.xlu0 %2056
      %v2059 = vsel %vm1515, %v2045, 0
      %v2062 = vsel %vm1615, %v2057, 0
      %2064 = vmatpush.bf16.msra.mxu0 0
      %2065 = vmatpush.bf16.msra.mxu0 0
      %2066 = vmatpush.bf16.msra.mxu0 0
      %2067 = vmatpush.bf16.msra.mxu0 0
      %2068 = vmatpush.bf16.msra.mxu0 0
      %2069 = vmatpush.bf16.msra.mxu0 0
      %2070 = vmatpush.bf16.msra.mxu0 0
      %2071 = vmatpush.bf16.msra.mxu0 %v2062
      %2072 = vmatmul.bf16.gmra.mxu0 %v2059
      %v2073 = vpop.f32.mrf.mxu0
      %v2074 = vadd.f32 0.0, %v2073
      %v2075 = vpop.f32.mrf.mxu0
      %2076 = vdwg.mxu0
      %v2078 = vunpack.c.l.b16 %v1291
      %v2079 = vpack.c.b16 %v2078, %v2078
      %2080 = vrot.lane.b32.xlu0 %v2079, 96
      %v2081 = vpop.permute.xlu0 %2080
      %v2083 = vsel %vm1515, %v2046, 0
      %v2086 = vsel %vm1615, %v2081, 0
      %2088 = vmatpush.bf16.msra.mxu0 0
      %2089 = vmatpush.bf16.msra.mxu0 0
      %2090 = vmatpush.bf16.msra.mxu0 0
      %2091 = vmatpush.bf16.msra.mxu0 0
      %2092 = vmatpush.bf16.msra.mxu0 0
      %2093 = vmatpush.bf16.msra.mxu0 0
      %2094 = vmatpush.bf16.msra.mxu0 0
      %2095 = vmatpush.bf16.msra.mxu0 %v2086
      %2096 = vmatmul.bf16.gmra.mxu0 %v2083
      %v2097 = vpop.f32.mrf.mxu0
      %v2098 = vadd.f32 0.0, %v2097
      %v2099 = vpop.f32.mrf.mxu0
      %2100 = vdwg.mxu0
      %v2102 = vunpack.c.l.b16 %v1292
      %v2103 = vpack.c.b16 %v2102, %v2102
      %2104 = vrot.lane.b32.xlu0 %v2103, 96
      %v2105 = vpop.permute.xlu0 %2104
      %v2107 = vsel %vm1515, %v2047, 0
      %v2110 = vsel %vm1615, %v2105, 0
      %2112 = vmatpush.bf16.msra.mxu0 0
      %2113 = vmatpush.bf16.msra.mxu0 0
      %2114 = vmatpush.bf16.msra.mxu0 0
      %2115 = vmatpush.bf16.msra.mxu0 0
      %2116 = vmatpush.bf16.msra.mxu0 0
      %2117 = vmatpush.bf16.msra.mxu0 0
      %2118 = vmatpush.bf16.msra.mxu0 0
      %2119 = vmatpush.bf16.msra.mxu0 %v2110
      %2120 = vmatmul.bf16.gmra.mxu0 %v2107
      %v2121 = vpop.f32.mrf.mxu0
      %v2122 = vadd.f32 0.0, %v2121
      %v2123 = vpop.f32.mrf.mxu0
      %2124 = vdwg.mxu0
      %v2126 = vunpack.c.l.b16 %v1293
      %v2127 = vpack.c.b16 %v2126, %v2126
      %2128 = vrot.lane.b32.xlu0 %v2127, 96
      %v2129 = vpop.permute.xlu0 %2128
      %v2131 = vsel %vm1515, %v2048, 0
      %v2134 = vsel %vm1615, %v2129, 0
      %2136 = vmatpush.bf16.msra.mxu0 0
      %2137 = vmatpush.bf16.msra.mxu0 0
      %2138 = vmatpush.bf16.msra.mxu0 0
      %2139 = vmatpush.bf16.msra.mxu0 0
      %2140 = vmatpush.bf16.msra.mxu0 0
      %2141 = vmatpush.bf16.msra.mxu0 0
      %2142 = vmatpush.bf16.msra.mxu0 0
      %2143 = vmatpush.bf16.msra.mxu0 %v2134
      %2144 = vmatmul.bf16.gmra.mxu0 %v2131
      %v2145 = vpop.f32.mrf.mxu0
      %v2146 = vadd.f32 0.0, %v2145
      %v2147 = vpop.f32.mrf.mxu0
      %2148 = vdwg.mxu0
      %v2150 = vunpack.c.l.b16 %v1294
      %v2151 = vpack.c.b16 %v2150, %v2150
      %2152 = vrot.lane.b32.xlu0 %v2151, 96
      %v2153 = vpop.permute.xlu0 %2152
      %v2155 = vsel %vm1515, %v2049, 0
      %v2158 = vsel %vm1615, %v2153, 0
      %2160 = vmatpush.bf16.msra.mxu0 0
      %2161 = vmatpush.bf16.msra.mxu0 0
      %2162 = vmatpush.bf16.msra.mxu0 0
      %2163 = vmatpush.bf16.msra.mxu0 0
      %2164 = vmatpush.bf16.msra.mxu0 0
      %2165 = vmatpush.bf16.msra.mxu0 0
      %2166 = vmatpush.bf16.msra.mxu0 0
      %2167 = vmatpush.bf16.msra.mxu0 %v2158
      %2168 = vmatmul.bf16.gmra.mxu0 %v2155
      %v2169 = vpop.f32.mrf.mxu0
      %v2170 = vadd.f32 0.0, %v2169
      %v2171 = vpop.f32.mrf.mxu0
      %2172 = vdwg.mxu0
      %v2174 = vunpack.c.l.b16 %v1295
      %v2175 = vpack.c.b16 %v2174, %v2174
      %2176 = vrot.lane.b32.xlu0 %v2175, 96
      %v2177 = vpop.permute.xlu0 %2176
      %v2179 = vsel %vm1515, %v2050, 0
      %v2182 = vsel %vm1615, %v2177, 0
      %2184 = vmatpush.bf16.msra.mxu0 0
      %2185 = vmatpush.bf16.msra.mxu0 0
      %2186 = vmatpush.bf16.msra.mxu0 0
      %2187 = vmatpush.bf16.msra.mxu0 0
      %2188 = vmatpush.bf16.msra.mxu0 0
      %2189 = vmatpush.bf16.msra.mxu0 0
      %2190 = vmatpush.bf16.msra.mxu0 0
      %2191 = vmatpush.bf16.msra.mxu0 %v2182
      %2192 = vmatmul.bf16.gmra.mxu0 %v2179
      %v2193 = vpop.f32.mrf.mxu0
      %v2194 = vadd.f32 0.0, %v2193
      %v2195 = vpop.f32.mrf.mxu0
      %2196 = vdwg.mxu0
      %v2198 = vunpack.c.l.b16 %v1296
      %v2199 = vpack.c.b16 %v2198, %v2198
      %2200 = vrot.lane.b32.xlu0 %v2199, 96
      %v2201 = vpop.permute.xlu0 %2200
      %v2203 = vsel %vm1515, %v2051, 0
      %v2206 = vsel %vm1615, %v2201, 0
      %2208 = vmatpush.bf16.msra.mxu0 0
      %2209 = vmatpush.bf16.msra.mxu0 0
      %2210 = vmatpush.bf16.msra.mxu0 0
      %2211 = vmatpush.bf16.msra.mxu0 0
      %2212 = vmatpush.bf16.msra.mxu0 0
      %2213 = vmatpush.bf16.msra.mxu0 0
      %2214 = vmatpush.bf16.msra.mxu0 0
      %2215 = vmatpush.bf16.msra.mxu0 %v2206
      %2216 = vmatmul.bf16.gmra.mxu0 %v2203
      %v2217 = vpop.f32.mrf.mxu0
      %v2218 = vadd.f32 0.0, %v2217
      %v2219 = vpop.f32.mrf.mxu0
      %2220 = vdwg.mxu0
      %v2222 = vunpack.c.l.b16 %v1297
      %v2223 = vpack.c.b16 %v2222, %v2222
      %2224 = vrot.lane.b32.xlu0 %v2223, 96
      %v2225 = vpop.permute.xlu0 %2224
      %v2227 = vsel %vm1515, %v2052, 0
      %v2230 = vsel %vm1615, %v2225, 0
      %2232 = vmatpush.bf16.msra.mxu0 0
      %2233 = vmatpush.bf16.msra.mxu0 0
      %2234 = vmatpush.bf16.msra.mxu0 0
      %2235 = vmatpush.bf16.msra.mxu0 0
      %2236 = vmatpush.bf16.msra.mxu0 0
      %2237 = vmatpush.bf16.msra.mxu0 0
      %2238 = vmatpush.bf16.msra.mxu0 0
      %2239 = vmatpush.bf16.msra.mxu0 %v2230
      %2240 = vmatmul.bf16.gmra.mxu0 %v2227
      %v2241 = vpop.f32.mrf.mxu0
      %v2242 = vadd.f32 0.0, %v2241
      %v2243 = vpop.f32.mrf.mxu0
      %2244 = vdwg.mxu0
      %2253 = vrot.lane.b32.xlu0 %v2074, 32
      %v2254 = vpop.permute.xlu0 %2253
      %2255 = vrot.lane.b32.xlu0 %v2098, 32
      %v2256 = vpop.permute.xlu0 %2255
      %2257 = vrot.lane.b32.xlu0 %v2122, 32
      %v2258 = vpop.permute.xlu0 %2257
      %2259 = vrot.lane.b32.xlu0 %v2146, 32
      %v2260 = vpop.permute.xlu0 %2259
      %2261 = vrot.lane.b32.xlu0 %v2170, 32
      %v2262 = vpop.permute.xlu0 %2261
      %2263 = vrot.lane.b32.xlu0 %v2194, 32
      %v2264 = vpop.permute.xlu0 %2263
      %2265 = vrot.lane.b32.xlu0 %v2218, 32
      %v2266 = vpop.permute.xlu0 %2265
      %2267 = vrot.lane.b32.xlu0 %v2242, 32
      %v2268 = vpop.permute.xlu0 %2267
      %vm2277 = vcmask 523520
      %2278 = vst.msk [vmem:[#allocation3] sm:$0xff] %vm2277, %v2254
      %2279 = vst.msk [vmem:[#allocation3 + $0x8] sm:$0xff] %vm2277, %v2256
      %2280 = vst.msk [vmem:[#allocation3 + $0x10] sm:$0xff] %vm2277, %v2258
      %2281 = vst.msk [vmem:[#allocation3 + $0x18] sm:$0xff] %vm2277, %v2260
      %2282 = vst.msk [vmem:[#allocation3 + $0x20] sm:$0xff] %vm2277, %v2262
      %2283 = vst.msk [vmem:[#allocation3 + $0x28] sm:$0xff] %vm2277, %v2264
      %2284 = vst.msk [vmem:[#allocation3 + $0x30] sm:$0xff] %vm2277, %v2266
      %2285 = vst.msk [vmem:[#allocation3 + $0x38] sm:$0xff] %vm2277, %v2268
      %v2286 = vld [vmem:[#allocation3] sm:$0xff]
      %v2287 = vld [vmem:[#allocation3 + $0x8] sm:$0xff]
      %v2288 = vld [vmem:[#allocation3 + $0x10] sm:$0xff]
      %v2289 = vld [vmem:[#allocation3 + $0x18] sm:$0xff]
      %v2290 = vld [vmem:[#allocation3 + $0x20] sm:$0xff]
      %v2291 = vld [vmem:[#allocation3 + $0x28] sm:$0xff]
      %v2292 = vld [vmem:[#allocation3 + $0x30] sm:$0xff]
      %v2293 = vld [vmem:[#allocation3 + $0x38] sm:$0xff]
      %v2294 = vpack.c.bf16 %v2287, %v2286
      %v2295 = vpack.c.bf16 %v2289, %v2288
      %v2296 = vpack.c.bf16 %v2291, %v2290
      %v2297 = vpack.c.bf16 %v2293, %v2292
      %s2298 = smul.u32 %s35, 8
      %s2299 = smul.addr %s2298, 4
      %s2300 = scalar_lea.vmem %s9, %s2299
      %v2301 = vld [vmem:[%s2300] sm:$0xf]
      %v2302 = vld [vmem:[%s2300 + $0x4] sm:$0xf]
      %v2303 = vld [vmem:[%s2300 + $0x8] sm:$0xf]
      %v2304 = vld [vmem:[%s2300 + $0xc] sm:$0xf]
      %v2305 = vld [vmem:[%s2300 + $0x10] sm:$0xf]
      %v2306 = vld [vmem:[%s2300 + $0x14] sm:$0xf]
      %v2307 = vld [vmem:[%s2300 + $0x18] sm:$0xf]
      %v2308 = vld [vmem:[%s2300 + $0x1c] sm:$0xf]
      %s2309 = scalar_lea.vmem %s10, %s35
      %v2310 = vld [vmem:[%s2309] sm:$0x1]
      %v2312 = vperm.slane %v2310, 0
      %v2322 = vunpack.c.l.b16 %v2301
      %v2323 = vunpack.c.l.b16 %v2302
      %v2324 = vunpack.c.l.b16 %v2303
      %v2325 = vunpack.c.l.b16 %v2304
      %v2326 = vunpack.c.l.b16 %v2305
      %v2327 = vunpack.c.l.b16 %v2306
      %v2328 = vunpack.c.l.b16 %v2307
      %v2329 = vunpack.c.l.b16 %v2308
      %v2330 = vpack.c.b16 %v2323, %v2322
      %v2331 = vpack.c.b16 %v2325, %v2324
      %v2332 = vpack.c.b16 %v2327, %v2326
      %v2333 = vpack.c.b16 %v2329, %v2328
      %v2339 = vsel %vm1187, %v2294, 0
      %v2342 = vsel %vm1187, %v2295, 0
      %v2345 = vsel %vm1187, %v2296, 0
      %v2348 = vsel %vm1187, %v2297, 0
      %2350 = vmatpush.bf16.msra.mxu0 0
      %2351 = vmatpush.bf16.msra.mxu0 0
      %2352 = vmatpush.bf16.msra.mxu0 0
      %2353 = vmatpush.bf16.msra.mxu0 0
      %2354 = vmatpush.bf16.msra.mxu0 %v2333
      %2355 = vmatpush.bf16.msra.mxu0 %v2332
      %2356 = vmatpush.bf16.msra.mxu0 %v2331
      %2357 = vmatpush.bf16.msra.mxu0 %v2330
      %2358 = vmatmul.bf16.gmra.mxu0 %v2339
      %v2359 = vpop.f32.mrf.mxu0
      %v2360 = vadd.f32 %v2312, %v2359
      %v2361 = vpop.f32.mrf.mxu0
      %v2362 = vadd.f32 %v2312, %v2361
      %2363 = vmatmul.bf16.gmra.mxu0 %v2342
      %v2364 = vpop.f32.mrf.mxu0
      %v2365 = vadd.f32 %v2312, %v2364
      %v2366 = vpop.f32.mrf.mxu0
      %v2367 = vadd.f32 %v2312, %v2366
      %2368 = vmatmul.bf16.gmra.mxu0 %v2345
      %v2369 = vpop.f32.mrf.mxu0
      %v2370 = vadd.f32 %v2312, %v2369
      %v2371 = vpop.f32.mrf.mxu0
      %v2372 = vadd.f32 %v2312, %v2371
      %2373 = vmatmul.bf16.gmra.mxu0 %v2348
      %v2374 = vpop.f32.mrf.mxu0
      %v2375 = vadd.f32 %v2312, %v2374
      %v2376 = vpop.f32.mrf.mxu0
      %v2377 = vadd.f32 %v2312, %v2376
      %2378 = vdwg.mxu0
      %v2379 = vadd.f32 %v1116, %v2360
      %v2380 = vadd.f32 %v1117, %v2362
      %v2381 = vadd.f32 %v1118, %v2365
      %v2382 = vadd.f32 %v1119, %v2367
      %v2383 = vadd.f32 %v1120, %v2370
      %v2384 = vadd.f32 %v1121, %v2372
      %v2385 = vadd.f32 %v1122, %v2375
      %v2386 = vadd.f32 %v1123, %v2377
      %s2387 = scalar_lea.vmem %s11, %s35
      %v2388 = vld [vmem:[%s2387] sm:$0x1]
      %s2389 = scalar_lea.vmem %s12, %s35
      %v2390 = vld [vmem:[%s2389] sm:$0x1]
      %v2391 = vsel %vm1187, %v2379, 0.0
      %2392 = vadd.xlane.f32.xlu0 %v2391
      %v2393 = vpop.xlane.xlu0 %2392
      %v2394 = vsel %vm1187, %v2380, 0.0
      %2395 = vadd.xlane.f32.xlu0 %v2394
      %v2396 = vpop.xlane.xlu0 %2395
      %v2397 = vsel %vm1187, %v2381, 0.0
      %2398 = vadd.xlane.f32.xlu0 %v2397
      %v2399 = vpop.xlane.xlu0 %2398
      %v2400 = vsel %vm1187, %v2382, 0.0
      %2401 = vadd.xlane.f32.xlu0 %v2400
      %v2402 = vpop.xlane.xlu0 %2401
      %v2403 = vsel %vm1187, %v2383, 0.0
      %2404 = vadd.xlane.f32.xlu0 %v2403
      %v2405 = vpop.xlane.xlu0 %2404
      %v2406 = vsel %vm1187, %v2384, 0.0
      %2407 = vadd.xlane.f32.xlu0 %v2406
      %v2408 = vpop.xlane.xlu0 %2407
      %v2409 = vsel %vm1187, %v2385, 0.0
      %2410 = vadd.xlane.f32.xlu0 %v2409
      %v2411 = vpop.xlane.xlu0 %2410
      %v2412 = vsel %vm1187, %v2386, 0.0
      %2413 = vadd.xlane.f32.xlu0 %v2412
      %v2414 = vpop.xlane.xlu0 %2413
      %v2415 = vrcp.pop 64.0
      %v2416 = vmul.f32 64.0, %v2415
      %v2417 = vsub.f32 1.0, %v2416
      %v2418 = vmul.f32 %v2415, %v2417
      %v2419 = vadd.f32 %v2415, %v2418
      %vm2420 = vweird.f32 %v2415
      %v2421 = vsel %vm2420, %v2415, %v2419
      %v2422 = vmul.f32 %v2393, %v2421
      %v2423 = vmul.f32 %v2396, %v2421
      %v2424 = vmul.f32 %v2399, %v2421
      %v2425 = vmul.f32 %v2402, %v2421
      %v2426 = vmul.f32 %v2405, %v2421
      %v2427 = vmul.f32 %v2408, %v2421
      %v2428 = vmul.f32 %v2411, %v2421
      %v2429 = vmul.f32 %v2414, %v2421
      %v2430 = vsub.f32 %v2379, %v2422
      %v2431 = vsub.f32 %v2380, %v2423
      %v2432 = vsub.f32 %v2381, %v2424
      %v2433 = vsub.f32 %v2382, %v2425
      %v2434 = vsub.f32 %v2383, %v2426
      %v2435 = vsub.f32 %v2384, %v2427
      %v2436 = vsub.f32 %v2385, %v2428
      %v2437 = vsub.f32 %v2386, %v2429
      %v2438 = vmul.f32 %v2430, %v2430
      %v2439 = vmul.f32 %v2431, %v2431
      %v2440 = vmul.f32 %v2432, %v2432
      %v2441 = vmul.f32 %v2433, %v2433
      %v2442 = vmul.f32 %v2434, %v2434
      %v2443 = vmul.f32 %v2435, %v2435
      %v2444 = vmul.f32 %v2436, %v2436
      %v2445 = vmul.f32 %v2437, %v2437
      %v2446 = vsel %vm1187, %v2438, 0.0
      %2447 = vadd.xlane.f32.xlu0 %v2446
      %v2448 = vpop.xlane.xlu0 %2447
      %v2449 = vsel %vm1187, %v2439, 0.0
      %2450 = vadd.xlane.f32.xlu0 %v2449
      %v2451 = vpop.xlane.xlu0 %2450
      %v2452 = vsel %vm1187, %v2440, 0.0
      %2453 = vadd.xlane.f32.xlu0 %v2452
      %v2454 = vpop.xlane.xlu0 %2453
      %v2455 = vsel %vm1187, %v2441, 0.0
      %2456 = vadd.xlane.f32.xlu0 %v2455
      %v2457 = vpop.xlane.xlu0 %2456
      %v2458 = vsel %vm1187, %v2442, 0.0
      %2459 = vadd.xlane.f32.xlu0 %v2458
      %v2460 = vpop.xlane.xlu0 %2459
      %v2461 = vsel %vm1187, %v2443, 0.0
      %2462 = vadd.xlane.f32.xlu0 %v2461
      %v2463 = vpop.xlane.xlu0 %2462
      %v2464 = vsel %vm1187, %v2444, 0.0
      %2465 = vadd.xlane.f32.xlu0 %v2464
      %v2466 = vpop.xlane.xlu0 %2465
      %v2467 = vsel %vm1187, %v2445, 0.0
      %2468 = vadd.xlane.f32.xlu0 %v2467
      %v2469 = vpop.xlane.xlu0 %2468
      %v2470 = vmul.f32 %v2448, %v2421
      %v2471 = vmul.f32 %v2451, %v2421
      %v2472 = vmul.f32 %v2454, %v2421
      %v2473 = vmul.f32 %v2457, %v2421
      %v2474 = vmul.f32 %v2460, %v2421
      %v2475 = vmul.f32 %v2463, %v2421
      %v2476 = vmul.f32 %v2466, %v2421
      %v2477 = vmul.f32 %v2469, %v2421
      %v2478 = vadd.f32 %v2470, 1e-05
      %v2479 = vadd.f32 %v2471, 1e-05
      %v2480 = vadd.f32 %v2472, 1e-05
      %v2481 = vadd.f32 %v2473, 1e-05
      %v2482 = vadd.f32 %v2474, 1e-05
      %v2483 = vadd.f32 %v2475, 1e-05
      %v2484 = vadd.f32 %v2476, 1e-05
      %v2485 = vadd.f32 %v2477, 1e-05
      %v2486 = vrsqrt.pop %v2478
      %v2487 = vmul.f32 %v2486, %v2478
      %v2488 = vmul.f32 %v2487, %v2486
      %v2489 = vmul.f32 0.5, %v2488
      %v2490 = vsub.f32 1.5, %v2489
      %v2491 = vmul.f32 %v2486, %v2490
      %vm2492 = vweird.f32 %v2478
      %vm2493 = vweird.f32 %v2486
      %vm2494 = vmor %vm2492, %vm2493
      %v2495 = vsel %vm2494, %v2486, %v2491
      %v2496 = vrsqrt.pop %v2479
      %v2497 = vmul.f32 %v2496, %v2479
      %v2498 = vmul.f32 %v2497, %v2496
      %v2499 = vmul.f32 0.5, %v2498
      %v2500 = vsub.f32 1.5, %v2499
      %v2501 = vmul.f32 %v2496, %v2500
      %vm2502 = vweird.f32 %v2479
      %vm2503 = vweird.f32 %v2496
      %vm2504 = vmor %vm2502, %vm2503
      %v2505 = vsel %vm2504, %v2496, %v2501
      %v2506 = vrsqrt.pop %v2480
      %v2507 = vmul.f32 %v2506, %v2480
      %v2508 = vmul.f32 %v2507, %v2506
      %v2509 = vmul.f32 0.5, %v2508
      %v2510 = vsub.f32 1.5, %v2509
      %v2511 = vmul.f32 %v2506, %v2510
      %vm2512 = vweird.f32 %v2480
      %vm2513 = vweird.f32 %v2506
      %vm2514 = vmor %vm2512, %vm2513
      %v2515 = vsel %vm2514, %v2506, %v2511
      %v2516 = vrsqrt.pop %v2481
      %v2517 = vmul.f32 %v2516, %v2481
      %v2518 = vmul.f32 %v2517, %v2516
      %v2519 = vmul.f32 0.5, %v2518
      %v2520 = vsub.f32 1.5, %v2519
      %v2521 = vmul.f32 %v2516, %v2520
      %vm2522 = vweird.f32 %v2481
      %vm2523 = vweird.f32 %v2516
      %vm2524 = vmor %vm2522, %vm2523
      %v2525 = vsel %vm2524, %v2516, %v2521
      %v2526 = vrsqrt.pop %v2482
      %v2527 = vmul.f32 %v2526, %v2482
      %v2528 = vmul.f32 %v2527, %v2526
      %v2529 = vmul.f32 0.5, %v2528
      %v2530 = vsub.f32 1.5, %v2529
      %v2531 = vmul.f32 %v2526, %v2530
      %vm2532 = vweird.f32 %v2482
      %vm2533 = vweird.f32 %v2526
      %vm2534 = vmor %vm2532, %vm2533
      %v2535 = vsel %vm2534, %v2526, %v2531
      %v2536 = vrsqrt.pop %v2483
      %v2537 = vmul.f32 %v2536, %v2483
      %v2538 = vmul.f32 %v2537, %v2536
      %v2539 = vmul.f32 0.5, %v2538
      %v2540 = vsub.f32 1.5, %v2539
      %v2541 = vmul.f32 %v2536, %v2540
      %vm2542 = vweird.f32 %v2483
      %vm2543 = vweird.f32 %v2536
      %vm2544 = vmor %vm2542, %vm2543
      %v2545 = vsel %vm2544, %v2536, %v2541
      %v2546 = vrsqrt.pop %v2484
      %v2547 = vmul.f32 %v2546, %v2484
      %v2548 = vmul.f32 %v2547, %v2546
      %v2549 = vmul.f32 0.5, %v2548
      %v2550 = vsub.f32 1.5, %v2549
      %v2551 = vmul.f32 %v2546, %v2550
      %vm2552 = vweird.f32 %v2484
      %vm2553 = vweird.f32 %v2546
      %vm2554 = vmor %vm2552, %vm2553
      %v2555 = vsel %vm2554, %v2546, %v2551
      %v2556 = vrsqrt.pop %v2485
      %v2557 = vmul.f32 %v2556, %v2485
      %v2558 = vmul.f32 %v2557, %v2556
      %v2559 = vmul.f32 0.5, %v2558
      %v2560 = vsub.f32 1.5, %v2559
      %v2561 = vmul.f32 %v2556, %v2560
      %vm2562 = vweird.f32 %v2485
      %vm2563 = vweird.f32 %v2556
      %vm2564 = vmor %vm2562, %vm2563
      %v2565 = vsel %vm2564, %v2556, %v2561
      %v2566 = vmul.f32 %v2430, %v2495
      %v2567 = vmul.f32 %v2431, %v2505
      %v2568 = vmul.f32 %v2432, %v2515
      %v2569 = vmul.f32 %v2433, %v2525
      %v2570 = vmul.f32 %v2434, %v2535
      %v2571 = vmul.f32 %v2435, %v2545
      %v2572 = vmul.f32 %v2436, %v2555
      %v2573 = vmul.f32 %v2437, %v2565
      %v2575 = vperm.slane %v2388, 0
      %v2577 = vmul.f32 %v2566, %v2575
      %v2578 = vmul.f32 %v2567, %v2575
      %v2579 = vmul.f32 %v2568, %v2575
      %v2580 = vmul.f32 %v2569, %v2575
      %v2581 = vmul.f32 %v2570, %v2575
      %v2582 = vmul.f32 %v2571, %v2575
      %v2583 = vmul.f32 %v2572, %v2575
      %v2584 = vmul.f32 %v2573, %v2575
      %v2586 = vperm.slane %v2390, 0
      %v2588 = vadd.f32 %v2577, %v2586
      %v2589 = vadd.f32 %v2578, %v2586
      %v2590 = vadd.f32 %v2579, %v2586
      %v2591 = vadd.f32 %v2580, %v2586
      %v2592 = vadd.f32 %v2581, %v2586
      %v2593 = vadd.f32 %v2582, %v2586
      %v2594 = vadd.f32 %v2583, %v2586
      %v2595 = vadd.f32 %v2584, %v2586
      %v2596 = vpack.c.bf16 %v2589, %v2588
      %v2597 = vpack.c.bf16 %v2591, %v2590
      %v2598 = vpack.c.bf16 %v2593, %v2592
      %v2599 = vpack.c.bf16 %v2595, %v2594
      %s2600 = smul.addr %s1128, 4
      %s2601 = scalar_lea.vmem %s13, %s2600
      %v2602 = vld [vmem:[%s2601] sm:$0xff]
      %v2603 = vld [vmem:[%s2601 + $0x8] sm:$0xff]
      %v2604 = vld [vmem:[%s2601 + $0x10] sm:$0xff]
      %v2605 = vld [vmem:[%s2601 + $0x18] sm:$0xff]
      %v2606 = vld [vmem:[%s2601 + $0x20] sm:$0xff]
      %v2607 = vld [vmem:[%s2601 + $0x28] sm:$0xff]
      %v2608 = vld [vmem:[%s2601 + $0x30] sm:$0xff]
      %v2609 = vld [vmem:[%s2601 + $0x38] sm:$0xff]
      %s2610 = scalar_lea.vmem %s14, %s1139
      %v2611 = vld [vmem:[%s2610] sm:$0x3]
      %v2613 = vperm.slane %v2611, 0
      %v2614 = vperm.slane %v2611, 1
      %v2625 = vunpack.c.l.b16 %v2602
      %v2626 = vunpack.c.h.b16 %v2602
      %v2627 = vunpack.c.l.b16 %v2603
      %v2628 = vunpack.c.h.b16 %v2603
      %v2629 = vunpack.c.l.b16 %v2604
      %v2630 = vunpack.c.h.b16 %v2604
      %v2631 = vunpack.c.l.b16 %v2605
      %v2632 = vunpack.c.h.b16 %v2605
      %v2633 = vunpack.c.l.b16 %v2606
      %v2634 = vunpack.c.h.b16 %v2606
      %v2635 = vunpack.c.l.b16 %v2607
      %v2636 = vunpack.c.h.b16 %v2607
      %v2637 = vunpack.c.l.b16 %v2608
      %v2638 = vunpack.c.h.b16 %v2608
      %v2639 = vunpack.c.l.b16 %v2609
      %v2640 = vunpack.c.h.b16 %v2609
      %v2641 = vpack.c.b16 %v2627, %v2625
      %v2642 = vpack.c.b16 %v2628, %v2626
      %v2643 = vpack.c.b16 %v2631, %v2629
      %v2644 = vpack.c.b16 %v2632, %v2630
      %v2645 = vpack.c.b16 %v2635, %v2633
      %v2646 = vpack.c.b16 %v2636, %v2634
      %v2647 = vpack.c.b16 %v2639, %v2637
      %v2648 = vpack.c.b16 %v2640, %v2638
      %v2658 = vsel %vm1187, %v2596, 0
      %v2661 = vsel %vm1187, %v2597, 0
      %v2664 = vsel %vm1187, %v2598, 0
      %v2667 = vsel %vm1187, %v2599, 0
      %2669 = vmatpush.bf16.msra.mxu0 0
      %2670 = vmatpush.bf16.msra.mxu0 0
      %2671 = vmatpush.bf16.msra.mxu0 0
      %2672 = vmatpush.bf16.msra.mxu0 0
      %2673 = vmatpush.bf16.msra.mxu0 %v2647
      %2674 = vmatpush.bf16.msra.mxu0 %v2645
      %2675 = vmatpush.bf16.msra.mxu0 %v2643
      %2676 = vmatpush.bf16.msra.mxu0 %v2641
      %2677 = vmatmul.bf16.gmra.mxu0 %v2658
      %v2678 = vpop.f32.mrf.mxu0
      %v2679 = vadd.f32 %v2613, %v2678
      %v2680 = vpop.f32.mrf.mxu0
      %v2681 = vadd.f32 %v2613, %v2680
      %2682 = vmatmul.bf16.gmra.mxu0 %v2661
      %v2683 = vpop.f32.mrf.mxu0
      %v2684 = vadd.f32 %v2613, %v2683
      %v2685 = vpop.f32.mrf.mxu0
      %v2686 = vadd.f32 %v2613, %v2685
      %2687 = vmatmul.bf16.gmra.mxu0 %v2664
      %v2688 = vpop.f32.mrf.mxu0
      %v2689 = vadd.f32 %v2613, %v2688
      %v2690 = vpop.f32.mrf.mxu0
      %v2691 = vadd.f32 %v2613, %v2690
      %2692 = vmatmul.bf16.gmra.mxu0 %v2667
      %v2693 = vpop.f32.mrf.mxu0
      %v2694 = vadd.f32 %v2613, %v2693
      %v2695 = vpop.f32.mrf.mxu0
      %v2696 = vadd.f32 %v2613, %v2695
      %2697 = vdwg.mxu0
      %2698 = vmatpush.bf16.msra.mxu0 0
      %2699 = vmatpush.bf16.msra.mxu0 0
      %2700 = vmatpush.bf16.msra.mxu0 0
      %2701 = vmatpush.bf16.msra.mxu0 0
      %2702 = vmatpush.bf16.msra.mxu0 %v2648
      %2703 = vmatpush.bf16.msra.mxu0 %v2646
      %2704 = vmatpush.bf16.msra.mxu0 %v2644
      %2705 = vmatpush.bf16.msra.mxu0 %v2642
      %2706 = vmatmul.bf16.gmra.mxu0 %v2658
      %v2707 = vpop.f32.mrf.mxu0
      %v2708 = vadd.f32 %v2614, %v2707
      %v2709 = vpop.f32.mrf.mxu0
      %v2710 = vadd.f32 %v2614, %v2709
      %2711 = vmatmul.bf16.gmra.mxu0 %v2661
      %v2712 = vpop.f32.mrf.mxu0
      %v2713 = vadd.f32 %v2614, %v2712
      %v2714 = vpop.f32.mrf.mxu0
      %v2715 = vadd.f32 %v2614, %v2714
      %2716 = vmatmul.bf16.gmra.mxu0 %v2664
      %v2717 = vpop.f32.mrf.mxu0
      %v2718 = vadd.f32 %v2614, %v2717
      %v2719 = vpop.f32.mrf.mxu0
      %v2720 = vadd.f32 %v2614, %v2719
      %2721 = vmatmul.bf16.gmra.mxu0 %v2667
      %v2722 = vpop.f32.mrf.mxu0
      %v2723 = vadd.f32 %v2614, %v2722
      %v2724 = vpop.f32.mrf.mxu0
      %v2725 = vadd.f32 %v2614, %v2724
      %2726 = vdwg.mxu0
      %v2727 = vmul.f32 %v2679, 0.5
      %v2728 = vmul.f32 %v2708, 0.5
      %v2729 = vmul.f32 %v2681, 0.5
      %v2730 = vmul.f32 %v2710, 0.5
      %v2731 = vmul.f32 %v2684, 0.5
      %v2732 = vmul.f32 %v2713, 0.5
      %v2733 = vmul.f32 %v2686, 0.5
      %v2734 = vmul.f32 %v2715, 0.5
      %v2735 = vmul.f32 %v2689, 0.5
      %v2736 = vmul.f32 %v2718, 0.5
      %v2737 = vmul.f32 %v2691, 0.5
      %v2738 = vmul.f32 %v2720, 0.5
      %v2739 = vmul.f32 %v2694, 0.5
      %v2740 = vmul.f32 %v2723, 0.5
      %v2741 = vmul.f32 %v2696, 0.5
      %v2742 = vmul.f32 %v2725, 0.5
      %v2743 = vmul.f32 %v2679, 0.70710677
      %v2744 = vmul.f32 %v2708, 0.70710677
      %v2745 = vmul.f32 %v2681, 0.70710677
      %v2746 = vmul.f32 %v2710, 0.70710677
      %v2747 = vmul.f32 %v2684, 0.70710677
      %v2748 = vmul.f32 %v2713, 0.70710677
      %v2749 = vmul.f32 %v2686, 0.70710677
      %v2750 = vmul.f32 %v2715, 0.70710677
      %v2751 = vmul.f32 %v2689, 0.70710677
      %v2752 = vmul.f32 %v2718, 0.70710677
      %v2753 = vmul.f32 %v2691, 0.70710677
      %v2754 = vmul.f32 %v2720, 0.70710677
      %v2755 = vmul.f32 %v2694, 0.70710677
      %v2756 = vmul.f32 %v2723, 0.70710677
      %v2757 = vmul.f32 %v2696, 0.70710677
      %v2758 = vmul.f32 %v2725, 0.70710677
      %v2759 = vmul.f32 %v2743, %v2743
      %v2760 = vmin.f32 16.0, %v2759
      %v2761 = vmul.f32 %v2760, 2.1237322e-06
      %v2762 = vadd.f32 %v2761, 0.00028619796
      %v2763 = vmul.f32 %v2760, %v2762
      %v2764 = vadd.f32 %v2763, 0.0036580483
      %v2765 = vmul.f32 %v2760, %v2764
      %v2766 = vadd.f32 %v2765, 0.05243302
      %v2767 = vmul.f32 %v2760, %v2766
      %v2768 = vadd.f32 %v2767, 0.18741608
      %v2769 = vmul.f32 %v2760, %v2768
      %v2770 = vadd.f32 %v2769, 1.1283791
      %v2771 = vmul.f32 %v2743, %v2770
      %v2772 = vmul.f32 %v2760, 3.8918573e-05
      %v2773 = vadd.f32 %v2772, 0.001143296
      %v2774 = vmul.f32 %v2760, %v2773
      %v2775 = vadd.f32 %v2774, 0.014752088
      %v2776 = vmul.f32 %v2760, %v2775
      %v2777 = vadd.f32 %v2776, 0.112945676
      %v2778 = vmul.f32 %v2760, %v2777
      %v2779 = vadd.f32 %v2778, 0.4994258
      %v2780 = vmul.f32 %v2760, %v2779
      %v2781 = vadd.f32 %v2780, 1.0
      %v2782 = vrcp.pop %v2781
      %v2783 = vmul.f32 %v2781, %v2782
      %v2784 = vsub.f32 1.0, %v2783
      %v2785 = vmul.f32 %v2782, %v2784
      %v2786 = vadd.f32 %v2782, %v2785
      %vm2787 = vweird.f32 %v2781
      %vm2788 = vweird.f32 %v2782
      %vm2789 = vmor %vm2787, %vm2788
      %v2790 = vsel %vm2789, %v2782, %v2786
      %v2791 = vand.u32 2147483647, %v2781
      %vm2792 = vcmp.eq.f32.partialorder %v2791, 8.507059e+37
      %v2793 = vand.u32 %v2781, 2147483648
      %v2794 = vor.u32 1.1754944e-38, %v2793
      %v2795 = vsel %vm2792, %v2794, %v2790
      %v2796 = vmul.f32 %v2771, %v2795
      %v2797 = vmin.f32 %v2796, 1.0
      %v2798 = vmax.f32 %v2797, -1.0
      %v2799 = vmul.f32 %v2744, %v2744
      %v2800 = vmin.f32 16.0, %v2799
      %v2801 = vmul.f32 %v2800, 2.1237322e-06
      %v2802 = vadd.f32 %v2801, 0.00028619796
      %v2803 = vmul.f32 %v2800, %v2802
      %v2804 = vadd.f32 %v2803, 0.0036580483
      %v2805 = vmul.f32 %v2800, %v2804
      %v2806 = vadd.f32 %v2805, 0.05243302
      %v2807 = vmul.f32 %v2800, %v2806
      %v2808 = vadd.f32 %v2807, 0.18741608
      %v2809 = vmul.f32 %v2800, %v2808
      %v2810 = vadd.f32 %v2809, 1.1283791
      %v2811 = vmul.f32 %v2744, %v2810
      %v2812 = vmul.f32 %v2800, 3.8918573e-05
      %v2813 = vadd.f32 %v2812, 0.001143296
      %v2814 = vmul.f32 %v2800, %v2813
      %v2815 = vadd.f32 %v2814, 0.014752088
      %v2816 = vmul.f32 %v2800, %v2815
      %v2817 = vadd.f32 %v2816, 0.112945676
      %v2818 = vmul.f32 %v2800, %v2817
      %v2819 = vadd.f32 %v2818, 0.4994258
      %v2820 = vmul.f32 %v2800, %v2819
      %v2821 = vadd.f32 %v2820, 1.0
      %v2822 = vrcp.pop %v2821
      %v2823 = vmul.f32 %v2821, %v2822
      %v2824 = vsub.f32 1.0, %v2823
      %v2825 = vmul.f32 %v2822, %v2824
      %v2826 = vadd.f32 %v2822, %v2825
      %vm2827 = vweird.f32 %v2821
      %vm2828 = vweird.f32 %v2822
      %vm2829 = vmor %vm2827, %vm2828
      %v2830 = vsel %vm2829, %v2822, %v2826
      %v2831 = vand.u32 2147483647, %v2821
      %vm2832 = vcmp.eq.f32.partialorder %v2831, 8.507059e+37
      %v2833 = vand.u32 %v2821, 2147483648
      %v2834 = vor.u32 1.1754944e-38, %v2833
      %v2835 = vsel %vm2832, %v2834, %v2830
      %v2836 = vmul.f32 %v2811, %v2835
      %v2837 = vmin.f32 %v2836, 1.0
      %v2838 = vmax.f32 %v2837, -1.0
      %v2839 = vmul.f32 %v2745, %v2745
      %v2840 = vmin.f32 16.0, %v2839
      %v2841 = vmul.f32 %v2840, 2.1237322e-06
      %v2842 = vadd.f32 %v2841, 0.00028619796
      %v2843 = vmul.f32 %v2840, %v2842
      %v2844 = vadd.f32 %v2843, 0.0036580483
      %v2845 = vmul.f32 %v2840, %v2844
      %v2846 = vadd.f32 %v2845, 0.05243302
      %v2847 = vmul.f32 %v2840, %v2846
      %v2848 = vadd.f32 %v2847, 0.18741608
      %v2849 = vmul.f32 %v2840, %v2848
      %v2850 = vadd.f32 %v2849, 1.1283791
      %v2851 = vmul.f32 %v2745, %v2850
      %v2852 = vmul.f32 %v2840, 3.8918573e-05
      %v2853 = vadd.f32 %v2852, 0.001143296
      %v2854 = vmul.f32 %v2840, %v2853
      %v2855 = vadd.f32 %v2854, 0.014752088
      %v2856 = vmul.f32 %v2840, %v2855
      %v2857 = vadd.f32 %v2856, 0.112945676
      %v2858 = vmul.f32 %v2840, %v2857
      %v2859 = vadd.f32 %v2858, 0.4994258
      %v2860 = vmul.f32 %v2840, %v2859
      %v2861 = vadd.f32 %v2860, 1.0
      %v2862 = vrcp.pop %v2861
      %v2863 = vmul.f32 %v2861, %v2862
      %v2864 = vsub.f32 1.0, %v2863
      %v2865 = vmul.f32 %v2862, %v2864
      %v2866 = vadd.f32 %v2862, %v2865
      %vm2867 = vweird.f32 %v2861
      %vm2868 = vweird.f32 %v2862
      %vm2869 = vmor %vm2867, %vm2868
      %v2870 = vsel %vm2869, %v2862, %v2866
      %v2871 = vand.u32 2147483647, %v2861
      %vm2872 = vcmp.eq.f32.partialorder %v2871, 8.507059e+37
      %v2873 = vand.u32 %v2861, 2147483648
      %v2874 = vor.u32 1.1754944e-38, %v2873
      %v2875 = vsel %vm2872, %v2874, %v2870
      %v2876 = vmul.f32 %v2851, %v2875
      %v2877 = vmin.f32 %v2876, 1.0
      %v2878 = vmax.f32 %v2877, -1.0
      %v2879 = vmul.f32 %v2746, %v2746
      %v2880 = vmin.f32 16.0, %v2879
      %v2881 = vmul.f32 %v2880, 2.1237322e-06
      %v2882 = vadd.f32 %v2881, 0.00028619796
      %v2883 = vmul.f32 %v2880, %v2882
      %v2884 = vadd.f32 %v2883, 0.0036580483
      %v2885 = vmul.f32 %v2880, %v2884
      %v2886 = vadd.f32 %v2885, 0.05243302
      %v2887 = vmul.f32 %v2880, %v2886
      %v2888 = vadd.f32 %v2887, 0.18741608
      %v2889 = vmul.f32 %v2880, %v2888
      %v2890 = vadd.f32 %v2889, 1.1283791
      %v2891 = vmul.f32 %v2746, %v2890
      %v2892 = vmul.f32 %v2880, 3.8918573e-05
      %v2893 = vadd.f32 %v2892, 0.001143296
      %v2894 = vmul.f32 %v2880, %v2893
      %v2895 = vadd.f32 %v2894, 0.014752088
      %v2896 = vmul.f32 %v2880, %v2895
      %v2897 = vadd.f32 %v2896, 0.112945676
      %v2898 = vmul.f32 %v2880, %v2897
      %v2899 = vadd.f32 %v2898, 0.4994258
      %v2900 = vmul.f32 %v2880, %v2899
      %v2901 = vadd.f32 %v2900, 1.0
      %v2902 = vrcp.pop %v2901
      %v2903 = vmul.f32 %v2901, %v2902
      %v2904 = vsub.f32 1.0, %v2903
      %v2905 = vmul.f32 %v2902, %v2904
      %v2906 = vadd.f32 %v2902, %v2905
      %vm2907 = vweird.f32 %v2901
      %vm2908 = vweird.f32 %v2902
      %vm2909 = vmor %vm2907, %vm2908
      %v2910 = vsel %vm2909, %v2902, %v2906
      %v2911 = vand.u32 2147483647, %v2901
      %vm2912 = vcmp.eq.f32.partialorder %v2911, 8.507059e+37
      %v2913 = vand.u32 %v2901, 2147483648
      %v2914 = vor.u32 1.1754944e-38, %v2913
      %v2915 = vsel %vm2912, %v2914, %v2910
      %v2916 = vmul.f32 %v2891, %v2915
      %v2917 = vmin.f32 %v2916, 1.0
      %v2918 = vmax.f32 %v2917, -1.0
      %v2919 = vmul.f32 %v2747, %v2747
      %v2920 = vmin.f32 16.0, %v2919
      %v2921 = vmul.f32 %v2920, 2.1237322e-06
      %v2922 = vadd.f32 %v2921, 0.00028619796
      %v2923 = vmul.f32 %v2920, %v2922
      %v2924 = vadd.f32 %v2923, 0.0036580483
      %v2925 = vmul.f32 %v2920, %v2924
      %v2926 = vadd.f32 %v2925, 0.05243302
      %v2927 = vmul.f32 %v2920, %v2926
      %v2928 = vadd.f32 %v2927, 0.18741608
      %v2929 = vmul.f32 %v2920, %v2928
      %v2930 = vadd.f32 %v2929, 1.1283791
      %v2931 = vmul.f32 %v2747, %v2930
      %v2932 = vmul.f32 %v2920, 3.8918573e-05
      %v2933 = vadd.f32 %v2932, 0.001143296
      %v2934 = vmul.f32 %v2920, %v2933
      %v2935 = vadd.f32 %v2934, 0.014752088
      %v2936 = vmul.f32 %v2920, %v2935
      %v2937 = vadd.f32 %v2936, 0.112945676
      %v2938 = vmul.f32 %v2920, %v2937
      %v2939 = vadd.f32 %v2938, 0.4994258
      %v2940 = vmul.f32 %v2920, %v2939
      %v2941 = vadd.f32 %v2940, 1.0
      %v2942 = vrcp.pop %v2941
      %v2943 = vmul.f32 %v2941, %v2942
      %v2944 = vsub.f32 1.0, %v2943
      %v2945 = vmul.f32 %v2942, %v2944
      %v2946 = vadd.f32 %v2942, %v2945
      %vm2947 = vweird.f32 %v2941
      %vm2948 = vweird.f32 %v2942
      %vm2949 = vmor %vm2947, %vm2948
      %v2950 = vsel %vm2949, %v2942, %v2946
      %v2951 = vand.u32 2147483647, %v2941
      %vm2952 = vcmp.eq.f32.partialorder %v2951, 8.507059e+37
      %v2953 = vand.u32 %v2941, 2147483648
      %v2954 = vor.u32 1.1754944e-38, %v2953
      %v2955 = vsel %vm2952, %v2954, %v2950
      %v2956 = vmul.f32 %v2931, %v2955
      %v2957 = vmin.f32 %v2956, 1.0
      %v2958 = vmax.f32 %v2957, -1.0
      %v2959 = vmul.f32 %v2748, %v2748
      %v2960 = vmin.f32 16.0, %v2959
      %v2961 = vmul.f32 %v2960, 2.1237322e-06
      %v2962 = vadd.f32 %v2961, 0.00028619796
      %v2963 = vmul.f32 %v2960, %v2962
      %v2964 = vadd.f32 %v2963, 0.0036580483
      %v2965 = vmul.f32 %v2960, %v2964
      %v2966 = vadd.f32 %v2965, 0.05243302
      %v2967 = vmul.f32 %v2960, %v2966
      %v2968 = vadd.f32 %v2967, 0.18741608
      %v2969 = vmul.f32 %v2960, %v2968
      %v2970 = vadd.f32 %v2969, 1.1283791
      %v2971 = vmul.f32 %v2748, %v2970
      %v2972 = vmul.f32 %v2960, 3.8918573e-05
      %v2973 = vadd.f32 %v2972, 0.001143296
      %v2974 = vmul.f32 %v2960, %v2973
      %v2975 = vadd.f32 %v2974, 0.014752088
      %v2976 = vmul.f32 %v2960, %v2975
      %v2977 = vadd.f32 %v2976, 0.112945676
      %v2978 = vmul.f32 %v2960, %v2977
      %v2979 = vadd.f32 %v2978, 0.4994258
      %v2980 = vmul.f32 %v2960, %v2979
      %v2981 = vadd.f32 %v2980, 1.0
      %v2982 = vrcp.pop %v2981
      %v2983 = vmul.f32 %v2981, %v2982
      %v2984 = vsub.f32 1.0, %v2983
      %v2985 = vmul.f32 %v2982, %v2984
      %v2986 = vadd.f32 %v2982, %v2985
      %vm2987 = vweird.f32 %v2981
      %vm2988 = vweird.f32 %v2982
      %vm2989 = vmor %vm2987, %vm2988
      %v2990 = vsel %vm2989, %v2982, %v2986
      %v2991 = vand.u32 2147483647, %v2981
      %vm2992 = vcmp.eq.f32.partialorder %v2991, 8.507059e+37
      %v2993 = vand.u32 %v2981, 2147483648
      %v2994 = vor.u32 1.1754944e-38, %v2993
      %v2995 = vsel %vm2992, %v2994, %v2990
      %v2996 = vmul.f32 %v2971, %v2995
      %v2997 = vmin.f32 %v2996, 1.0
      %v2998 = vmax.f32 %v2997, -1.0
      %v2999 = vmul.f32 %v2749, %v2749
      %v3000 = vmin.f32 16.0, %v2999
      %v3001 = vmul.f32 %v3000, 2.1237322e-06
      %v3002 = vadd.f32 %v3001, 0.00028619796
      %v3003 = vmul.f32 %v3000, %v3002
      %v3004 = vadd.f32 %v3003, 0.0036580483
      %v3005 = vmul.f32 %v3000, %v3004
      %v3006 = vadd.f32 %v3005, 0.05243302
      %v3007 = vmul.f32 %v3000, %v3006
      %v3008 = vadd.f32 %v3007, 0.18741608
      %v3009 = vmul.f32 %v3000, %v3008
      %v3010 = vadd.f32 %v3009, 1.1283791
      %v3011 = vmul.f32 %v2749, %v3010
      %v3012 = vmul.f32 %v3000, 3.8918573e-05
      %v3013 = vadd.f32 %v3012, 0.001143296
      %v3014 = vmul.f32 %v3000, %v3013
      %v3015 = vadd.f32 %v3014, 0.014752088
      %v3016 = vmul.f32 %v3000, %v3015
      %v3017 = vadd.f32 %v3016, 0.112945676
      %v3018 = vmul.f32 %v3000, %v3017
      %v3019 = vadd.f32 %v3018, 0.4994258
      %v3020 = vmul.f32 %v3000, %v3019
      %v3021 = vadd.f32 %v3020, 1.0
      %v3022 = vrcp.pop %v3021
      %v3023 = vmul.f32 %v3021, %v3022
      %v3024 = vsub.f32 1.0, %v3023
      %v3025 = vmul.f32 %v3022, %v3024
      %v3026 = vadd.f32 %v3022, %v3025
      %vm3027 = vweird.f32 %v3021
      %vm3028 = vweird.f32 %v3022
      %vm3029 = vmor %vm3027, %vm3028
      %v3030 = vsel %vm3029, %v3022, %v3026
      %v3031 = vand.u32 2147483647, %v3021
      %vm3032 = vcmp.eq.f32.partialorder %v3031, 8.507059e+37
      %v3033 = vand.u32 %v3021, 2147483648
      %v3034 = vor.u32 1.1754944e-38, %v3033
      %v3035 = vsel %vm3032, %v3034, %v3030
      %v3036 = vmul.f32 %v3011, %v3035
      %v3037 = vmin.f32 %v3036, 1.0
      %v3038 = vmax.f32 %v3037, -1.0
      %v3039 = vmul.f32 %v2750, %v2750
      %v3040 = vmin.f32 16.0, %v3039
      %v3041 = vmul.f32 %v3040, 2.1237322e-06
      %v3042 = vadd.f32 %v3041, 0.00028619796
      %v3043 = vmul.f32 %v3040, %v3042
      %v3044 = vadd.f32 %v3043, 0.0036580483
      %v3045 = vmul.f32 %v3040, %v3044
      %v3046 = vadd.f32 %v3045, 0.05243302
      %v3047 = vmul.f32 %v3040, %v3046
      %v3048 = vadd.f32 %v3047, 0.18741608
      %v3049 = vmul.f32 %v3040, %v3048
      %v3050 = vadd.f32 %v3049, 1.1283791
      %v3051 = vmul.f32 %v2750, %v3050
      %v3052 = vmul.f32 %v3040, 3.8918573e-05
      %v3053 = vadd.f32 %v3052, 0.001143296
      %v3054 = vmul.f32 %v3040, %v3053
      %v3055 = vadd.f32 %v3054, 0.014752088
      %v3056 = vmul.f32 %v3040, %v3055
      %v3057 = vadd.f32 %v3056, 0.112945676
      %v3058 = vmul.f32 %v3040, %v3057
      %v3059 = vadd.f32 %v3058, 0.4994258
      %v3060 = vmul.f32 %v3040, %v3059
      %v3061 = vadd.f32 %v3060, 1.0
      %v3062 = vrcp.pop %v3061
      %v3063 = vmul.f32 %v3061, %v3062
      %v3064 = vsub.f32 1.0, %v3063
      %v3065 = vmul.f32 %v3062, %v3064
      %v3066 = vadd.f32 %v3062, %v3065
      %vm3067 = vweird.f32 %v3061
      %vm3068 = vweird.f32 %v3062
      %vm3069 = vmor %vm3067, %vm3068
      %v3070 = vsel %vm3069, %v3062, %v3066
      %v3071 = vand.u32 2147483647, %v3061
      %vm3072 = vcmp.eq.f32.partialorder %v3071, 8.507059e+37
      %v3073 = vand.u32 %v3061, 2147483648
      %v3074 = vor.u32 1.1754944e-38, %v3073
      %v3075 = vsel %vm3072, %v3074, %v3070
      %v3076 = vmul.f32 %v3051, %v3075
      %v3077 = vmin.f32 %v3076, 1.0
      %v3078 = vmax.f32 %v3077, -1.0
      %v3079 = vmul.f32 %v2751, %v2751
      %v3080 = vmin.f32 16.0, %v3079
      %v3081 = vmul.f32 %v3080, 2.1237322e-06
      %v3082 = vadd.f32 %v3081, 0.00028619796
      %v3083 = vmul.f32 %v3080, %v3082
      %v3084 = vadd.f32 %v3083, 0.0036580483
      %v3085 = vmul.f32 %v3080, %v3084
      %v3086 = vadd.f32 %v3085, 0.05243302
      %v3087 = vmul.f32 %v3080, %v3086
      %v3088 = vadd.f32 %v3087, 0.18741608
      %v3089 = vmul.f32 %v3080, %v3088
      %v3090 = vadd.f32 %v3089, 1.1283791
      %v3091 = vmul.f32 %v2751, %v3090
      %v3092 = vmul.f32 %v3080, 3.8918573e-05
      %v3093 = vadd.f32 %v3092, 0.001143296
      %v3094 = vmul.f32 %v3080, %v3093
      %v3095 = vadd.f32 %v3094, 0.014752088
      %v3096 = vmul.f32 %v3080, %v3095
      %v3097 = vadd.f32 %v3096, 0.112945676
      %v3098 = vmul.f32 %v3080, %v3097
      %v3099 = vadd.f32 %v3098, 0.4994258
      %v3100 = vmul.f32 %v3080, %v3099
      %v3101 = vadd.f32 %v3100, 1.0
      %v3102 = vrcp.pop %v3101
      %v3103 = vmul.f32 %v3101, %v3102
      %v3104 = vsub.f32 1.0, %v3103
      %v3105 = vmul.f32 %v3102, %v3104
      %v3106 = vadd.f32 %v3102, %v3105
      %vm3107 = vweird.f32 %v3101
      %vm3108 = vweird.f32 %v3102
      %vm3109 = vmor %vm3107, %vm3108
      %v3110 = vsel %vm3109, %v3102, %v3106
      %v3111 = vand.u32 2147483647, %v3101
      %vm3112 = vcmp.eq.f32.partialorder %v3111, 8.507059e+37
      %v3113 = vand.u32 %v3101, 2147483648
      %v3114 = vor.u32 1.1754944e-38, %v3113
      %v3115 = vsel %vm3112, %v3114, %v3110
      %v3116 = vmul.f32 %v3091, %v3115
      %v3117 = vmin.f32 %v3116, 1.0
      %v3118 = vmax.f32 %v3117, -1.0
      %v3119 = vmul.f32 %v2752, %v2752
      %v3120 = vmin.f32 16.0, %v3119
      %v3121 = vmul.f32 %v3120, 2.1237322e-06
      %v3122 = vadd.f32 %v3121, 0.00028619796
      %v3123 = vmul.f32 %v3120, %v3122
      %v3124 = vadd.f32 %v3123, 0.0036580483
      %v3125 = vmul.f32 %v3120, %v3124
      %v3126 = vadd.f32 %v3125, 0.05243302
      %v3127 = vmul.f32 %v3120, %v3126
      %v3128 = vadd.f32 %v3127, 0.18741608
      %v3129 = vmul.f32 %v3120, %v3128
      %v3130 = vadd.f32 %v3129, 1.1283791
      %v3131 = vmul.f32 %v2752, %v3130
      %v3132 = vmul.f32 %v3120, 3.8918573e-05
      %v3133 = vadd.f32 %v3132, 0.001143296
      %v3134 = vmul.f32 %v3120, %v3133
      %v3135 = vadd.f32 %v3134, 0.014752088
      %v3136 = vmul.f32 %v3120, %v3135
      %v3137 = vadd.f32 %v3136, 0.112945676
      %v3138 = vmul.f32 %v3120, %v3137
      %v3139 = vadd.f32 %v3138, 0.4994258
      %v3140 = vmul.f32 %v3120, %v3139
      %v3141 = vadd.f32 %v3140, 1.0
      %v3142 = vrcp.pop %v3141
      %v3143 = vmul.f32 %v3141, %v3142
      %v3144 = vsub.f32 1.0, %v3143
      %v3145 = vmul.f32 %v3142, %v3144
      %v3146 = vadd.f32 %v3142, %v3145
      %vm3147 = vweird.f32 %v3141
      %vm3148 = vweird.f32 %v3142
      %vm3149 = vmor %vm3147, %vm3148
      %v3150 = vsel %vm3149, %v3142, %v3146
      %v3151 = vand.u32 2147483647, %v3141
      %vm3152 = vcmp.eq.f32.partialorder %v3151, 8.507059e+37
      %v3153 = vand.u32 %v3141, 2147483648
      %v3154 = vor.u32 1.1754944e-38, %v3153
      %v3155 = vsel %vm3152, %v3154, %v3150
      %v3156 = vmul.f32 %v3131, %v3155
      %v3157 = vmin.f32 %v3156, 1.0
      %v3158 = vmax.f32 %v3157, -1.0
      %v3159 = vmul.f32 %v2753, %v2753
      %v3160 = vmin.f32 16.0, %v3159
      %v3161 = vmul.f32 %v3160, 2.1237322e-06
      %v3162 = vadd.f32 %v3161, 0.00028619796
      %v3163 = vmul.f32 %v3160, %v3162
      %v3164 = vadd.f32 %v3163, 0.0036580483
      %v3165 = vmul.f32 %v3160, %v3164
      %v3166 = vadd.f32 %v3165, 0.05243302
      %v3167 = vmul.f32 %v3160, %v3166
      %v3168 = vadd.f32 %v3167, 0.18741608
      %v3169 = vmul.f32 %v3160, %v3168
      %v3170 = vadd.f32 %v3169, 1.1283791
      %v3171 = vmul.f32 %v2753, %v3170
      %v3172 = vmul.f32 %v3160, 3.8918573e-05
      %v3173 = vadd.f32 %v3172, 0.001143296
      %v3174 = vmul.f32 %v3160, %v3173
      %v3175 = vadd.f32 %v3174, 0.014752088
      %v3176 = vmul.f32 %v3160, %v3175
      %v3177 = vadd.f32 %v3176, 0.112945676
      %v3178 = vmul.f32 %v3160, %v3177
      %v3179 = vadd.f32 %v3178, 0.4994258
      %v3180 = vmul.f32 %v3160, %v3179
      %v3181 = vadd.f32 %v3180, 1.0
      %v3182 = vrcp.pop %v3181
      %v3183 = vmul.f32 %v3181, %v3182
      %v3184 = vsub.f32 1.0, %v3183
      %v3185 = vmul.f32 %v3182, %v3184
      %v3186 = vadd.f32 %v3182, %v3185
      %vm3187 = vweird.f32 %v3181
      %vm3188 = vweird.f32 %v3182
      %vm3189 = vmor %vm3187, %vm3188
      %v3190 = vsel %vm3189, %v3182, %v3186
      %v3191 = vand.u32 2147483647, %v3181
      %vm3192 = vcmp.eq.f32.partialorder %v3191, 8.507059e+37
      %v3193 = vand.u32 %v3181, 2147483648
      %v3194 = vor.u32 1.1754944e-38, %v3193
      %v3195 = vsel %vm3192, %v3194, %v3190
      %v3196 = vmul.f32 %v3171, %v3195
      %v3197 = vmin.f32 %v3196, 1.0
      %v3198 = vmax.f32 %v3197, -1.0
      %v3199 = vmul.f32 %v2754, %v2754
      %v3200 = vmin.f32 16.0, %v3199
      %v3201 = vmul.f32 %v3200, 2.1237322e-06
      %v3202 = vadd.f32 %v3201, 0.00028619796
      %v3203 = vmul.f32 %v3200, %v3202
      %v3204 = vadd.f32 %v3203, 0.0036580483
      %v3205 = vmul.f32 %v3200, %v3204
      %v3206 = vadd.f32 %v3205, 0.05243302
      %v3207 = vmul.f32 %v3200, %v3206
      %v3208 = vadd.f32 %v3207, 0.18741608
      %v3209 = vmul.f32 %v3200, %v3208
      %v3210 = vadd.f32 %v3209, 1.1283791
      %v3211 = vmul.f32 %v2754, %v3210
      %v3212 = vmul.f32 %v3200, 3.8918573e-05
      %v3213 = vadd.f32 %v3212, 0.001143296
      %v3214 = vmul.f32 %v3200, %v3213
      %v3215 = vadd.f32 %v3214, 0.014752088
      %v3216 = vmul.f32 %v3200, %v3215
      %v3217 = vadd.f32 %v3216, 0.112945676
      %v3218 = vmul.f32 %v3200, %v3217
      %v3219 = vadd.f32 %v3218, 0.4994258
      %v3220 = vmul.f32 %v3200, %v3219
      %v3221 = vadd.f32 %v3220, 1.0
      %v3222 = vrcp.pop %v3221
      %v3223 = vmul.f32 %v3221, %v3222
      %v3224 = vsub.f32 1.0, %v3223
      %v3225 = vmul.f32 %v3222, %v3224
      %v3226 = vadd.f32 %v3222, %v3225
      %vm3227 = vweird.f32 %v3221
      %vm3228 = vweird.f32 %v3222
      %vm3229 = vmor %vm3227, %vm3228
      %v3230 = vsel %vm3229, %v3222, %v3226
      %v3231 = vand.u32 2147483647, %v3221
      %vm3232 = vcmp.eq.f32.partialorder %v3231, 8.507059e+37
      %v3233 = vand.u32 %v3221, 2147483648
      %v3234 = vor.u32 1.1754944e-38, %v3233
      %v3235 = vsel %vm3232, %v3234, %v3230
      %v3236 = vmul.f32 %v3211, %v3235
      %v3237 = vmin.f32 %v3236, 1.0
      %v3238 = vmax.f32 %v3237, -1.0
      %v3239 = vmul.f32 %v2755, %v2755
      %v3240 = vmin.f32 16.0, %v3239
      %v3241 = vmul.f32 %v3240, 2.1237322e-06
      %v3242 = vadd.f32 %v3241, 0.00028619796
      %v3243 = vmul.f32 %v3240, %v3242
      %v3244 = vadd.f32 %v3243, 0.0036580483
      %v3245 = vmul.f32 %v3240, %v3244
      %v3246 = vadd.f32 %v3245, 0.05243302
      %v3247 = vmul.f32 %v3240, %v3246
      %v3248 = vadd.f32 %v3247, 0.18741608
      %v3249 = vmul.f32 %v3240, %v3248
      %v3250 = vadd.f32 %v3249, 1.1283791
      %v3251 = vmul.f32 %v2755, %v3250
      %v3252 = vmul.f32 %v3240, 3.8918573e-05
      %v3253 = vadd.f32 %v3252, 0.001143296
      %v3254 = vmul.f32 %v3240, %v3253
      %v3255 = vadd.f32 %v3254, 0.014752088
      %v3256 = vmul.f32 %v3240, %v3255
      %v3257 = vadd.f32 %v3256, 0.112945676
      %v3258 = vmul.f32 %v3240, %v3257
      %v3259 = vadd.f32 %v3258, 0.4994258
      %v3260 = vmul.f32 %v3240, %v3259
      %v3261 = vadd.f32 %v3260, 1.0
      %v3262 = vrcp.pop %v3261
      %v3263 = vmul.f32 %v3261, %v3262
      %v3264 = vsub.f32 1.0, %v3263
      %v3265 = vmul.f32 %v3262, %v3264
      %v3266 = vadd.f32 %v3262, %v3265
      %vm3267 = vweird.f32 %v3261
      %vm3268 = vweird.f32 %v3262
      %vm3269 = vmor %vm3267, %vm3268
      %v3270 = vsel %vm3269, %v3262, %v3266
      %v3271 = vand.u32 2147483647, %v3261
      %vm3272 = vcmp.eq.f32.partialorder %v3271, 8.507059e+37
      %v3273 = vand.u32 %v3261, 2147483648
      %v3274 = vor.u32 1.1754944e-38, %v3273
      %v3275 = vsel %vm3272, %v3274, %v3270
      %v3276 = vmul.f32 %v3251, %v3275
      %v3277 = vmin.f32 %v3276, 1.0
      %v3278 = vmax.f32 %v3277, -1.0
      %v3279 = vmul.f32 %v2756, %v2756
      %v3280 = vmin.f32 16.0, %v3279
      %v3281 = vmul.f32 %v3280, 2.1237322e-06
      %v3282 = vadd.f32 %v3281, 0.00028619796
      %v3283 = vmul.f32 %v3280, %v3282
      %v3284 = vadd.f32 %v3283, 0.0036580483
      %v3285 = vmul.f32 %v3280, %v3284
      %v3286 = vadd.f32 %v3285, 0.05243302
      %v3287 = vmul.f32 %v3280, %v3286
      %v3288 = vadd.f32 %v3287, 0.18741608
      %v3289 = vmul.f32 %v3280, %v3288
      %v3290 = vadd.f32 %v3289, 1.1283791
      %v3291 = vmul.f32 %v2756, %v3290
      %v3292 = vmul.f32 %v3280, 3.8918573e-05
      %v3293 = vadd.f32 %v3292, 0.001143296
      %v3294 = vmul.f32 %v3280, %v3293
      %v3295 = vadd.f32 %v3294, 0.014752088
      %v3296 = vmul.f32 %v3280, %v3295
      %v3297 = vadd.f32 %v3296, 0.112945676
      %v3298 = vmul.f32 %v3280, %v3297
      %v3299 = vadd.f32 %v3298, 0.4994258
      %v3300 = vmul.f32 %v3280, %v3299
      %v3301 = vadd.f32 %v3300, 1.0
      %v3302 = vrcp.pop %v3301
      %v3303 = vmul.f32 %v3301, %v3302
      %v3304 = vsub.f32 1.0, %v3303
      %v3305 = vmul.f32 %v3302, %v3304
      %v3306 = vadd.f32 %v3302, %v3305
      %vm3307 = vweird.f32 %v3301
      %vm3308 = vweird.f32 %v3302
      %vm3309 = vmor %vm3307, %vm3308
      %v3310 = vsel %vm3309, %v3302, %v3306
      %v3311 = vand.u32 2147483647, %v3301
      %vm3312 = vcmp.eq.f32.partialorder %v3311, 8.507059e+37
      %v3313 = vand.u32 %v3301, 2147483648
      %v3314 = vor.u32 1.1754944e-38, %v3313
      %v3315 = vsel %vm3312, %v3314, %v3310
      %v3316 = vmul.f32 %v3291, %v3315
      %v3317 = vmin.f32 %v3316, 1.0
      %v3318 = vmax.f32 %v3317, -1.0
      %v3319 = vmul.f32 %v2757, %v2757
      %v3320 = vmin.f32 16.0, %v3319
      %v3321 = vmul.f32 %v3320, 2.1237322e-06
      %v3322 = vadd.f32 %v3321, 0.00028619796
      %v3323 = vmul.f32 %v3320, %v3322
      %v3324 = vadd.f32 %v3323, 0.0036580483
      %v3325 = vmul.f32 %v3320, %v3324
      %v3326 = vadd.f32 %v3325, 0.05243302
      %v3327 = vmul.f32 %v3320, %v3326
      %v3328 = vadd.f32 %v3327, 0.18741608
      %v3329 = vmul.f32 %v3320, %v3328
      %v3330 = vadd.f32 %v3329, 1.1283791
      %v3331 = vmul.f32 %v2757, %v3330
      %v3332 = vmul.f32 %v3320, 3.8918573e-05
      %v3333 = vadd.f32 %v3332, 0.001143296
      %v3334 = vmul.f32 %v3320, %v3333
      %v3335 = vadd.f32 %v3334, 0.014752088
      %v3336 = vmul.f32 %v3320, %v3335
      %v3337 = vadd.f32 %v3336, 0.112945676
      %v3338 = vmul.f32 %v3320, %v3337
      %v3339 = vadd.f32 %v3338, 0.4994258
      %v3340 = vmul.f32 %v3320, %v3339
      %v3341 = vadd.f32 %v3340, 1.0
      %v3342 = vrcp.pop %v3341
      %v3343 = vmul.f32 %v3341, %v3342
      %v3344 = vsub.f32 1.0, %v3343
      %v3345 = vmul.f32 %v3342, %v3344
      %v3346 = vadd.f32 %v3342, %v3345
      %vm3347 = vweird.f32 %v3341
      %vm3348 = vweird.f32 %v3342
      %vm3349 = vmor %vm3347, %vm3348
      %v3350 = vsel %vm3349, %v3342, %v3346
      %v3351 = vand.u32 2147483647, %v3341
      %vm3352 = vcmp.eq.f32.partialorder %v3351, 8.507059e+37
      %v3353 = vand.u32 %v3341, 2147483648
      %v3354 = vor.u32 1.1754944e-38, %v3353
      %v3355 = vsel %vm3352, %v3354, %v3350
      %v3356 = vmul.f32 %v3331, %v3355
      %v3357 = vmin.f32 %v3356, 1.0
      %v3358 = vmax.f32 %v3357, -1.0
      %v3359 = vmul.f32 %v2758, %v2758
      %v3360 = vmin.f32 16.0, %v3359
      %v3361 = vmul.f32 %v3360, 2.1237322e-06
      %v3362 = vadd.f32 %v3361, 0.00028619796
      %v3363 = vmul.f32 %v3360, %v3362
      %v3364 = vadd.f32 %v3363, 0.0036580483
      %v3365 = vmul.f32 %v3360, %v3364
      %v3366 = vadd.f32 %v3365, 0.05243302
      %v3367 = vmul.f32 %v3360, %v3366
      %v3368 = vadd.f32 %v3367, 0.18741608
      %v3369 = vmul.f32 %v3360, %v3368
      %v3370 = vadd.f32 %v3369, 1.1283791
      %v3371 = vmul.f32 %v2758, %v3370
      %v3372 = vmul.f32 %v3360, 3.8918573e-05
      %v3373 = vadd.f32 %v3372, 0.001143296
      %v3374 = vmul.f32 %v3360, %v3373
      %v3375 = vadd.f32 %v3374, 0.014752088
      %v3376 = vmul.f32 %v3360, %v3375
      %v3377 = vadd.f32 %v3376, 0.112945676
      %v3378 = vmul.f32 %v3360, %v3377
      %v3379 = vadd.f32 %v3378, 0.4994258
      %v3380 = vmul.f32 %v3360, %v3379
      %v3381 = vadd.f32 %v3380, 1.0
      %v3382 = vrcp.pop %v3381
      %v3383 = vmul.f32 %v3381, %v3382
      %v3384 = vsub.f32 1.0, %v3383
      %v3385 = vmul.f32 %v3382, %v3384
      %v3386 = vadd.f32 %v3382, %v3385
      %vm3387 = vweird.f32 %v3381
      %vm3388 = vweird.f32 %v3382
      %vm3389 = vmor %vm3387, %vm3388
      %v3390 = vsel %vm3389, %v3382, %v3386
      %v3391 = vand.u32 2147483647, %v3381
      %vm3392 = vcmp.eq.f32.partialorder %v3391, 8.507059e+37
      %v3393 = vand.u32 %v3381, 2147483648
      %v3394 = vor.u32 1.1754944e-38, %v3393
      %v3395 = vsel %vm3392, %v3394, %v3390
      %v3396 = vmul.f32 %v3371, %v3395
      %v3397 = vmin.f32 %v3396, 1.0
      %v3398 = vmax.f32 %v3397, -1.0
      %v3399 = vadd.f32 %v2798, 1.0
      %v3400 = vadd.f32 %v2838, 1.0
      %v3401 = vadd.f32 %v2878, 1.0
      %v3402 = vadd.f32 %v2918, 1.0
      %v3403 = vadd.f32 %v2958, 1.0
      %v3404 = vadd.f32 %v2998, 1.0
      %v3405 = vadd.f32 %v3038, 1.0
      %v3406 = vadd.f32 %v3078, 1.0
      %v3407 = vadd.f32 %v3118, 1.0
      %v3408 = vadd.f32 %v3158, 1.0
      %v3409 = vadd.f32 %v3198, 1.0
      %v3410 = vadd.f32 %v3238, 1.0
      %v3411 = vadd.f32 %v3278, 1.0
      %v3412 = vadd.f32 %v3318, 1.0
      %v3413 = vadd.f32 %v3358, 1.0
      %v3414 = vadd.f32 %v3398, 1.0
      %v3415 = vmul.f32 %v2727, %v3399
      %v3416 = vmul.f32 %v2728, %v3400
      %v3417 = vmul.f32 %v2729, %v3401
      %v3418 = vmul.f32 %v2730, %v3402
      %v3419 = vmul.f32 %v2731, %v3403
      %v3420 = vmul.f32 %v2732, %v3404
      %v3421 = vmul.f32 %v2733, %v3405
      %v3422 = vmul.f32 %v2734, %v3406
      %v3423 = vmul.f32 %v2735, %v3407
      %v3424 = vmul.f32 %v2736, %v3408
      %v3425 = vmul.f32 %v2737, %v3409
      %v3426 = vmul.f32 %v2738, %v3410
      %v3427 = vmul.f32 %v2739, %v3411
      %v3428 = vmul.f32 %v2740, %v3412
      %v3429 = vmul.f32 %v2741, %v3413
      %v3430 = vmul.f32 %v2742, %v3414
      %v3431 = vpack.c.bf16 %v3417, %v3415
      %v3432 = vpack.c.bf16 %v3418, %v3416
      %v3433 = vpack.c.bf16 %v3421, %v3419
      %v3434 = vpack.c.bf16 %v3422, %v3420
      %v3435 = vpack.c.bf16 %v3425, %v3423
      %v3436 = vpack.c.bf16 %v3426, %v3424
      %v3437 = vpack.c.bf16 %v3429, %v3427
      %v3438 = vpack.c.bf16 %v3430, %v3428
      %s3439 = smul.u32 %s35, 32
      %s3440 = smul.addr %s3439, 4
      %s3441 = scalar_lea.vmem %s15, %s3440
      %v3442 = vld [vmem:[%s3441] sm:$0xf]
      %v3443 = vld [vmem:[%s3441 + $0x4] sm:$0xf]
      %v3444 = vld [vmem:[%s3441 + $0x8] sm:$0xf]
      %v3445 = vld [vmem:[%s3441 + $0xc] sm:$0xf]
      %v3446 = vld [vmem:[%s3441 + $0x10] sm:$0xf]
      %v3447 = vld [vmem:[%s3441 + $0x14] sm:$0xf]
      %v3448 = vld [vmem:[%s3441 + $0x18] sm:$0xf]
      %v3449 = vld [vmem:[%s3441 + $0x1c] sm:$0xf]
      %v3450 = vld [vmem:[%s3441 + $0x20] sm:$0xf]
      %v3451 = vld [vmem:[%s3441 + $0x24] sm:$0xf]
      %v3452 = vld [vmem:[%s3441 + $0x28] sm:$0xf]
      %v3453 = vld [vmem:[%s3441 + $0x2c] sm:$0xf]
      %v3454 = vld [vmem:[%s3441 + $0x30] sm:$0xf]
      %v3455 = vld [vmem:[%s3441 + $0x34] sm:$0xf]
      %v3456 = vld [vmem:[%s3441 + $0x38] sm:$0xf]
      %v3457 = vld [vmem:[%s3441 + $0x3c] sm:$0xf]
      %v3458 = vld [vmem:[%s3441 + $0x40] sm:$0xf]
      %v3459 = vld [vmem:[%s3441 + $0x44] sm:$0xf]
      %v3460 = vld [vmem:[%s3441 + $0x48] sm:$0xf]
      %v3461 = vld [vmem:[%s3441 + $0x4c] sm:$0xf]
      %v3462 = vld [vmem:[%s3441 + $0x50] sm:$0xf]
      %v3463 = vld [vmem:[%s3441 + $0x54] sm:$0xf]
      %v3464 = vld [vmem:[%s3441 + $0x58] sm:$0xf]
      %v3465 = vld [vmem:[%s3441 + $0x5c] sm:$0xf]
      %v3466 = vld [vmem:[%s3441 + $0x60] sm:$0xf]
      %v3467 = vld [vmem:[%s3441 + $0x64] sm:$0xf]
      %v3468 = vld [vmem:[%s3441 + $0x68] sm:$0xf]
      %v3469 = vld [vmem:[%s3441 + $0x6c] sm:$0xf]
      %v3470 = vld [vmem:[%s3441 + $0x70] sm:$0xf]
      %v3471 = vld [vmem:[%s3441 + $0x74] sm:$0xf]
      %v3472 = vld [vmem:[%s3441 + $0x78] sm:$0xf]
      %v3473 = vld [vmem:[%s3441 + $0x7c] sm:$0xf]
      %s3474 = scalar_lea.vmem %s16, %s35
      %v3475 = vld [vmem:[%s3474] sm:$0x1]
      %v3477 = vperm.slane %v3475, 0
      %v3511 = vunpack.c.l.b16 %v3442
      %v3512 = vunpack.c.l.b16 %v3443
      %v3513 = vunpack.c.l.b16 %v3444
      %v3514 = vunpack.c.l.b16 %v3445
      %v3515 = vunpack.c.l.b16 %v3446
      %v3516 = vunpack.c.l.b16 %v3447
      %v3517 = vunpack.c.l.b16 %v3448
      %v3518 = vunpack.c.l.b16 %v3449
      %v3519 = vunpack.c.l.b16 %v3450
      %v3520 = vunpack.c.l.b16 %v3451
      %v3521 = vunpack.c.l.b16 %v3452
      %v3522 = vunpack.c.l.b16 %v3453
      %v3523 = vunpack.c.l.b16 %v3454
      %v3524 = vunpack.c.l.b16 %v3455
      %v3525 = vunpack.c.l.b16 %v3456
      %v3526 = vunpack.c.l.b16 %v3457
      %v3527 = vunpack.c.l.b16 %v3458
      %v3528 = vunpack.c.l.b16 %v3459
      %v3529 = vunpack.c.l.b16 %v3460
      %v3530 = vunpack.c.l.b16 %v3461
      %v3531 = vunpack.c.l.b16 %v3462
      %v3532 = vunpack.c.l.b16 %v3463
      %v3533 = vunpack.c.l.b16 %v3464
      %v3534 = vunpack.c.l.b16 %v3465
      %v3535 = vunpack.c.l.b16 %v3466
      %v3536 = vunpack.c.l.b16 %v3467
      %v3537 = vunpack.c.l.b16 %v3468
      %v3538 = vunpack.c.l.b16 %v3469
      %v3539 = vunpack.c.l.b16 %v3470
      %v3540 = vunpack.c.l.b16 %v3471
      %v3541 = vunpack.c.l.b16 %v3472
      %v3542 = vunpack.c.l.b16 %v3473
      %v3543 = vpack.c.b16 %v3512, %v3511
      %v3544 = vpack.c.b16 %v3514, %v3513
      %v3545 = vpack.c.b16 %v3516, %v3515
      %v3546 = vpack.c.b16 %v3518, %v3517
      %v3547 = vpack.c.b16 %v3520, %v3519
      %v3548 = vpack.c.b16 %v3522, %v3521
      %v3549 = vpack.c.b16 %v3524, %v3523
      %v3550 = vpack.c.b16 %v3526, %v3525
      %v3551 = vpack.c.b16 %v3528, %v3527
      %v3552 = vpack.c.b16 %v3530, %v3529
      %v3553 = vpack.c.b16 %v3532, %v3531
      %v3554 = vpack.c.b16 %v3534, %v3533
      %v3555 = vpack.c.b16 %v3536, %v3535
      %v3556 = vpack.c.b16 %v3538, %v3537
      %v3557 = vpack.c.b16 %v3540, %v3539
      %v3558 = vpack.c.b16 %v3542, %v3541
      %3575 = vmatpush.bf16.msra.mxu0 %v3550
      %3576 = vmatpush.bf16.msra.mxu0 %v3549
      %3577 = vmatpush.bf16.msra.mxu0 %v3548
      %3578 = vmatpush.bf16.msra.mxu0 %v3547
      %3579 = vmatpush.bf16.msra.mxu0 %v3546
      %3580 = vmatpush.bf16.msra.mxu0 %v3545
      %3581 = vmatpush.bf16.msra.mxu0 %v3544
      %3582 = vmatpush.bf16.msra.mxu0 %v3543
      %3583 = vmatmul.bf16.gmra.mxu0 %v3431
      %v3584 = vpop.f32.mrf.mxu0
      %v3585 = vadd.f32 %v3477, %v3584
      %v3586 = vpop.f32.mrf.mxu0
      %v3587 = vadd.f32 %v3477, %v3586
      %3588 = vmatmul.bf16.gmra.mxu0 %v3433
      %v3589 = vpop.f32.mrf.mxu0
      %v3590 = vadd.f32 %v3477, %v3589
      %v3591 = vpop.f32.mrf.mxu0
      %v3592 = vadd.f32 %v3477, %v3591
      %3593 = vmatmul.bf16.gmra.mxu0 %v3435
      %v3594 = vpop.f32.mrf.mxu0
      %v3595 = vadd.f32 %v3477, %v3594
      %v3596 = vpop.f32.mrf.mxu0
      %v3597 = vadd.f32 %v3477, %v3596
      %3598 = vmatmul.bf16.gmra.mxu0 %v3437
      %v3599 = vpop.f32.mrf.mxu0
      %v3600 = vadd.f32 %v3477, %v3599
      %v3601 = vpop.f32.mrf.mxu0
      %v3602 = vadd.f32 %v3477, %v3601
      %3603 = vdwg.mxu0
      %3604 = vmatpush.bf16.msra.mxu0 %v3558
      %3605 = vmatpush.bf16.msra.mxu0 %v3557
      %3606 = vmatpush.bf16.msra.mxu0 %v3556
      %3607 = vmatpush.bf16.msra.mxu0 %v3555
      %3608 = vmatpush.bf16.msra.mxu0 %v3554
      %3609 = vmatpush.bf16.msra.mxu0 %v3553
      %3610 = vmatpush.bf16.msra.mxu0 %v3552
      %3611 = vmatpush.bf16.msra.mxu0 %v3551
      %3612 = vmatmul.bf16.gmra.mxu0 %v3432
      %v3613 = vpop.f32.mrf.mxu0
      %v3614 = vadd.f32 %v3585, %v3613
      %v3615 = vpop.f32.mrf.mxu0
      %v3616 = vadd.f32 %v3587, %v3615
      %3617 = vmatmul.bf16.gmra.mxu0 %v3434
      %v3618 = vpop.f32.mrf.mxu0
      %v3619 = vadd.f32 %v3590, %v3618
      %v3620 = vpop.f32.mrf.mxu0
      %v3621 = vadd.f32 %v3592, %v3620
      %3622 = vmatmul.bf16.gmra.mxu0 %v3436
      %v3623 = vpop.f32.mrf.mxu0
      %v3624 = vadd.f32 %v3595, %v3623
      %v3625 = vpop.f32.mrf.mxu0
      %v3626 = vadd.f32 %v3597, %v3625
      %3627 = vmatmul.bf16.gmra.mxu0 %v3438
      %v3628 = vpop.f32.mrf.mxu0
      %v3629 = vadd.f32 %v3600, %v3628
      %v3630 = vpop.f32.mrf.mxu0
      %v3631 = vadd.f32 %v3602, %v3630
      %3632 = vdwg.mxu0
      %v3633 = vadd.f32 %v2588, %v3614
      %v3634 = vadd.f32 %v2589, %v3616
      %v3635 = vadd.f32 %v2590, %v3619
      %v3636 = vadd.f32 %v2591, %v3621
      %v3637 = vadd.f32 %v2592, %v3624
      %v3638 = vadd.f32 %v2593, %v3626
      %v3639 = vadd.f32 %v2594, %v3629
      %v3640 = vadd.f32 %v2595, %v3631
      %s3641 = scalar_lea.vmem %s17, %s35
      %v3642 = vld [vmem:[%s3641] sm:$0x1]
      %s3643 = scalar_lea.vmem %s18, %s35
      %v3644 = vld [vmem:[%s3643] sm:$0x1]
      %v3645 = vsel %vm1187, %v3633, 0.0
      %3646 = vadd.xlane.f32.xlu0 %v3645
      %v3647 = vpop.xlane.xlu0 %3646
      %v3648 = vsel %vm1187, %v3634, 0.0
      %3649 = vadd.xlane.f32.xlu0 %v3648
      %v3650 = vpop.xlane.xlu0 %3649
      %v3651 = vsel %vm1187, %v3635, 0.0
      %3652 = vadd.xlane.f32.xlu0 %v3651
      %v3653 = vpop.xlane.xlu0 %3652
      %v3654 = vsel %vm1187, %v3636, 0.0
      %3655 = vadd.xlane.f32.xlu0 %v3654
      %v3656 = vpop.xlane.xlu0 %3655
      %v3657 = vsel %vm1187, %v3637, 0.0
      %3658 = vadd.xlane.f32.xlu0 %v3657
      %v3659 = vpop.xlane.xlu0 %3658
      %v3660 = vsel %vm1187, %v3638, 0.0
      %3661 = vadd.xlane.f32.xlu0 %v3660
      %v3662 = vpop.xlane.xlu0 %3661
      %v3663 = vsel %vm1187, %v3639, 0.0
      %3664 = vadd.xlane.f32.xlu0 %v3663
      %v3665 = vpop.xlane.xlu0 %3664
      %v3666 = vsel %vm1187, %v3640, 0.0
      %3667 = vadd.xlane.f32.xlu0 %v3666
      %v3668 = vpop.xlane.xlu0 %3667
      %v3669 = vmul.f32 %v3647, %v2421
      %v3670 = vmul.f32 %v3650, %v2421
      %v3671 = vmul.f32 %v3653, %v2421
      %v3672 = vmul.f32 %v3656, %v2421
      %v3673 = vmul.f32 %v3659, %v2421
      %v3674 = vmul.f32 %v3662, %v2421
      %v3675 = vmul.f32 %v3665, %v2421
      %v3676 = vmul.f32 %v3668, %v2421
      %v3677 = vsub.f32 %v3633, %v3669
      %v3678 = vsub.f32 %v3634, %v3670
      %v3679 = vsub.f32 %v3635, %v3671
      %v3680 = vsub.f32 %v3636, %v3672
      %v3681 = vsub.f32 %v3637, %v3673
      %v3682 = vsub.f32 %v3638, %v3674
      %v3683 = vsub.f32 %v3639, %v3675
      %v3684 = vsub.f32 %v3640, %v3676
      %v3685 = vmul.f32 %v3677, %v3677
      %v3686 = vmul.f32 %v3678, %v3678
      %v3687 = vmul.f32 %v3679, %v3679
      %v3688 = vmul.f32 %v3680, %v3680
      %v3689 = vmul.f32 %v3681, %v3681
      %v3690 = vmul.f32 %v3682, %v3682
      %v3691 = vmul.f32 %v3683, %v3683
      %v3692 = vmul.f32 %v3684, %v3684
      %v3693 = vsel %vm1187, %v3685, 0.0
      %3694 = vadd.xlane.f32.xlu0 %v3693
      %v3695 = vpop.xlane.xlu0 %3694
      %v3696 = vsel %vm1187, %v3686, 0.0
      %3697 = vadd.xlane.f32.xlu0 %v3696
      %v3698 = vpop.xlane.xlu0 %3697
      %v3699 = vsel %vm1187, %v3687, 0.0
      %3700 = vadd.xlane.f32.xlu0 %v3699
      %v3701 = vpop.xlane.xlu0 %3700
      %v3702 = vsel %vm1187, %v3688, 0.0
      %3703 = vadd.xlane.f32.xlu0 %v3702
      %v3704 = vpop.xlane.xlu0 %3703
      %v3705 = vsel %vm1187, %v3689, 0.0
      %3706 = vadd.xlane.f32.xlu0 %v3705
      %v3707 = vpop.xlane.xlu0 %3706
      %v3708 = vsel %vm1187, %v3690, 0.0
      %3709 = vadd.xlane.f32.xlu0 %v3708
      %v3710 = vpop.xlane.xlu0 %3709
      %v3711 = vsel %vm1187, %v3691, 0.0
      %3712 = vadd.xlane.f32.xlu0 %v3711
      %v3713 = vpop.xlane.xlu0 %3712
      %v3714 = vsel %vm1187, %v3692, 0.0
      %3715 = vadd.xlane.f32.xlu0 %v3714
      %v3716 = vpop.xlane.xlu0 %3715
      %v3717 = vmul.f32 %v3695, %v2421
      %v3718 = vmul.f32 %v3698, %v2421
      %v3719 = vmul.f32 %v3701, %v2421
      %v3720 = vmul.f32 %v3704, %v2421
      %v3721 = vmul.f32 %v3707, %v2421
      %v3722 = vmul.f32 %v3710, %v2421
      %v3723 = vmul.f32 %v3713, %v2421
      %v3724 = vmul.f32 %v3716, %v2421
      %v3725 = vadd.f32 %v3717, 1e-05
      %v3726 = vadd.f32 %v3718, 1e-05
      %v3727 = vadd.f32 %v3719, 1e-05
      %v3728 = vadd.f32 %v3720, 1e-05
      %v3729 = vadd.f32 %v3721, 1e-05
      %v3730 = vadd.f32 %v3722, 1e-05
      %v3731 = vadd.f32 %v3723, 1e-05
      %v3732 = vadd.f32 %v3724, 1e-05
      %v3733 = vrsqrt.pop %v3725
      %v3734 = vmul.f32 %v3733, %v3725
      %v3735 = vmul.f32 %v3734, %v3733
      %v3736 = vmul.f32 0.5, %v3735
      %v3737 = vsub.f32 1.5, %v3736
      %v3738 = vmul.f32 %v3733, %v3737
      %vm3739 = vweird.f32 %v3725
      %vm3740 = vweird.f32 %v3733
      %vm3741 = vmor %vm3739, %vm3740
      %v3742 = vsel %vm3741, %v3733, %v3738
      %v3743 = vrsqrt.pop %v3726
      %v3744 = vmul.f32 %v3743, %v3726
      %v3745 = vmul.f32 %v3744, %v3743
      %v3746 = vmul.f32 0.5, %v3745
      %v3747 = vsub.f32 1.5, %v3746
      %v3748 = vmul.f32 %v3743, %v3747
      %vm3749 = vweird.f32 %v3726
      %vm3750 = vweird.f32 %v3743
      %vm3751 = vmor %vm3749, %vm3750
      %v3752 = vsel %vm3751, %v3743, %v3748
      %v3753 = vrsqrt.pop %v3727
      %v3754 = vmul.f32 %v3753, %v3727
      %v3755 = vmul.f32 %v3754, %v3753
      %v3756 = vmul.f32 0.5, %v3755
      %v3757 = vsub.f32 1.5, %v3756
      %v3758 = vmul.f32 %v3753, %v3757
      %vm3759 = vweird.f32 %v3727
      %vm3760 = vweird.f32 %v3753
      %vm3761 = vmor %vm3759, %vm3760
      %v3762 = vsel %vm3761, %v3753, %v3758
      %v3763 = vrsqrt.pop %v3728
      %v3764 = vmul.f32 %v3763, %v3728
      %v3765 = vmul.f32 %v3764, %v3763
      %v3766 = vmul.f32 0.5, %v3765
      %v3767 = vsub.f32 1.5, %v3766
      %v3768 = vmul.f32 %v3763, %v3767
      %vm3769 = vweird.f32 %v3728
      %vm3770 = vweird.f32 %v3763
      %vm3771 = vmor %vm3769, %vm3770
      %v3772 = vsel %vm3771, %v3763, %v3768
      %v3773 = vrsqrt.pop %v3729
      %v3774 = vmul.f32 %v3773, %v3729
      %v3775 = vmul.f32 %v3774, %v3773
      %v3776 = vmul.f32 0.5, %v3775
      %v3777 = vsub.f32 1.5, %v3776
      %v3778 = vmul.f32 %v3773, %v3777
      %vm3779 = vweird.f32 %v3729
      %vm3780 = vweird.f32 %v3773
      %vm3781 = vmor %vm3779, %vm3780
      %v3782 = vsel %vm3781, %v3773, %v3778
      %v3783 = vrsqrt.pop %v3730
      %v3784 = vmul.f32 %v3783, %v3730
      %v3785 = vmul.f32 %v3784, %v3783
      %v3786 = vmul.f32 0.5, %v3785
      %v3787 = vsub.f32 1.5, %v3786
      %v3788 = vmul.f32 %v3783, %v3787
      %vm3789 = vweird.f32 %v3730
      %vm3790 = vweird.f32 %v3783
      %vm3791 = vmor %vm3789, %vm3790
      %v3792 = vsel %vm3791, %v3783, %v3788
      %v3793 = vrsqrt.pop %v3731
      %v3794 = vmul.f32 %v3793, %v3731
      %v3795 = vmul.f32 %v3794, %v3793
      %v3796 = vmul.f32 0.5, %v3795
      %v3797 = vsub.f32 1.5, %v3796
      %v3798 = vmul.f32 %v3793, %v3797
      %vm3799 = vweird.f32 %v3731
      %vm3800 = vweird.f32 %v3793
      %vm3801 = vmor %vm3799, %vm3800
      %v3802 = vsel %vm3801, %v3793, %v3798
      %v3803 = vrsqrt.pop %v3732
      %v3804 = vmul.f32 %v3803, %v3732
      %v3805 = vmul.f32 %v3804, %v3803
      %v3806 = vmul.f32 0.5, %v3805
      %v3807 = vsub.f32 1.5, %v3806
      %v3808 = vmul.f32 %v3803, %v3807
      %vm3809 = vweird.f32 %v3732
      %vm3810 = vweird.f32 %v3803
      %vm3811 = vmor %vm3809, %vm3810
      %v3812 = vsel %vm3811, %v3803, %v3808
      %v3813 = vmul.f32 %v3677, %v3742
      %v3814 = vmul.f32 %v3678, %v3752
      %v3815 = vmul.f32 %v3679, %v3762
      %v3816 = vmul.f32 %v3680, %v3772
      %v3817 = vmul.f32 %v3681, %v3782
      %v3818 = vmul.f32 %v3682, %v3792
      %v3819 = vmul.f32 %v3683, %v3802
      %v3820 = vmul.f32 %v3684, %v3812
      %v3822 = vperm.slane %v3642, 0
      %v3824 = vmul.f32 %v3813, %v3822
      %v3825 = vmul.f32 %v3814, %v3822
      %v3826 = vmul.f32 %v3815, %v3822
      %v3827 = vmul.f32 %v3816, %v3822
      %v3828 = vmul.f32 %v3817, %v3822
      %v3829 = vmul.f32 %v3818, %v3822
      %v3830 = vmul.f32 %v3819, %v3822
      %v3831 = vmul.f32 %v3820, %v3822
      %v3833 = vperm.slane %v3644, 0
      %v3835 = vadd.f32 %v3824, %v3833
      %v3836 = vadd.f32 %v3825, %v3833
      %v3837 = vadd.f32 %v3826, %v3833
      %v3838 = vadd.f32 %v3827, %v3833
      %v3839 = vadd.f32 %v3828, %v3833
      %v3840 = vadd.f32 %v3829, %v3833
      %v3841 = vadd.f32 %v3830, %v3833
      %v3842 = vadd.f32 %v3831, %v3833
      %3843 = vst.msk [vmem:[#allocation2] sm:$0xff] %vm1187, %v3835
      %3844 = vst.msk [vmem:[#allocation2 + $0x8] sm:$0xff] %vm1187, %v3836
      %3845 = vst.msk [vmem:[#allocation2 + $0x10] sm:$0xff] %vm1187, %v3837
      %3846 = vst.msk [vmem:[#allocation2 + $0x18] sm:$0xff] %vm1187, %v3838
      %3847 = vst.msk [vmem:[#allocation2 + $0x20] sm:$0xff] %vm1187, %v3839
      %3848 = vst.msk [vmem:[#allocation2 + $0x28] sm:$0xff] %vm1187, %v3840
      %3849 = vst.msk [vmem:[#allocation2 + $0x30] sm:$0xff] %vm1187, %v3841
      %3850 = vst.msk [vmem:[#allocation2 + $0x38] sm:$0xff] %vm1187, %v3842
      %p3851 = scmp.eq.s32.totalorder %s35, 1
      // Predicated region
      $region101: #{time_sasrec_forward.2} parent=95 // pred_check
        %p3852 = pneg %p3851
      $region102: #{time_sasrec_forward.2} parent=95 // pred_check_branch
        %3854 = sbr.rel (%p3852) target = $region104
      $region103: #{time_sasrec_forward.2} parent=95 // pred_region
        %vm3855 = vcmask 523271
        %3856 = vst.msk [vmem:[%s652 - $0x7] sm:$0x80] %vm3855, %v3835
        %3857 = vst.msk [vmem:[%s652 - $0x6] sm:$0x80] %vm3855, %v3836
        %3858 = vst.msk [vmem:[%s652 - $0x5] sm:$0x80] %vm3855, %v3837
        %3859 = vst.msk [vmem:[%s652 - $0x4] sm:$0x80] %vm3855, %v3838
        %3860 = vst.msk [vmem:[%s652 - $0x3] sm:$0x80] %vm3855, %v3839
        %3861 = vst.msk [vmem:[%s652 - $0x2] sm:$0x80] %vm3855, %v3840
        %3862 = vst.msk [vmem:[%s652 - $0x1] sm:$0x80] %vm3855, %v3841
        %3863 = vst.msk [vmem:[%s652] sm:$0x80] %vm3855, %v3842
      $region104: #{time_sasrec_forward.2} parent=95 // pred_fallthru
        _
      %s3864 = smul.u32 8, %s34
      %p3865 = scmp.lt.s32.totalorder %s3864, 15
      %s3866 = scalar_select %p3865, %s3864, 15
      %s3867 = scalar_lea.vmem %s19, %s3866
      // Predicated region
      $region105: #{time_sasrec_forward.2} parent=95 // pred_check
        %p3868 = pneg %p474
      $region106: #{time_sasrec_forward.2} parent=95 // pred_check_branch
        %3870 = sbr.rel (%p3868) target = $region108
      $region107: #{time_sasrec_forward.2} parent=95 // pred_region
        %s3871 = smul.u32 8, %s34
      $region108: #{time_sasrec_forward.2} parent=95 // pred_fallthru
        _
    $region96: #{time_sasrec_forward.2} parent=5 // pred_fallthru
      _
    %p3872 = scmp.le.s32.totalorder 2, %s25
    // Predicated region
    $region109: #{time_sasrec_forward.2} parent=5 // pred_check
      %p3873 = pneg %p3872
    $region110: #{time_sasrec_forward.2} parent=5 // pred_check_branch
      %3875 = sbr.rel (%p3873) target = $region112
    $region111: #{time_sasrec_forward.2} parent=5 // pred_region
      %s3876 = ssub.s32 %s25, 2
      // Predicated region
      $region113: #{time_sasrec_forward.2} parent=111 // pred_check
        %p3877 = pneg %p480
      $region114: #{time_sasrec_forward.2} parent=111 // pred_check_branch
        %3879 = sbr.rel (%p3877) target = $region116
      $region115: #{time_sasrec_forward.2} parent=111 // pred_region
        %s3880 = smul.u32 8, %s36
        %p3881 = scmp.lt.s32.totalorder %s3880, 15
        %s3882 = scalar_select %p3881, %s3880, 15
        %s3883 = scalar_lea.vmem %s19, %s3882
      $region116: #{time_sasrec_forward.2} parent=111 // pred_fallthru
        _
    $region112: #{time_sasrec_forward.2} parent=5 // pred_fallthru
      _
  $region6: #{time_sasrec_forward.2} parent=0 // loop_footer
    %s29 = sadd.s32 1, %s25
  $region7: #{time_sasrec_forward.2} parent=0 // loop_footer_branch
    %24 = sbr.rel target = $region3
  $region8: #{time_sasrec_forward.2} parent=0 // loop_exit
    _

</llo_original>
